<compile_context>
chip_gen: v7x
topology: tpu7x:2x2x1
jax: 0.10.0
libtpu: 0.0.40
codegen_flags: <defaults>
</compile_context>

<pallas_src>
import functools

import jax
import jax.numpy as jnp
import numpy as np
from jax.experimental import pallas as pl
from jax.experimental.pallas import tpu as pltpu

CP = 128  # lane-dense padded channel width


# ----------------------------- in-kernel math ------------------------------

def _erf(x):
    # Abramowitz & Stegun 7.1.26 polynomial erf (|err| < 1.5e-7), built from
    # exp / mul / add / where so it lowers cleanly in Mosaic.
    a1, a2, a3, a4, a5 = (0.254829592, -0.284496736, 1.421413741,
                          -1.453152027, 1.061405429)
    p = 0.3275911
    s = jnp.where(x >= 0.0, 1.0, -1.0)
    z = jnp.abs(x)
    t = 1.0 / (1.0 + p * z)
    poly = ((((a5 * t + a4) * t + a3) * t + a2) * t + a1) * t
    return s * (1.0 - poly * jnp.exp(-z * z))


def _gelu(x):
    # exact (erf-based) GELU == torch.nn.functional.gelu default
    return 0.5 * x * (1.0 + _erf(x * 0.7071067811865476))


# ------------------------------ fused kernel --------------------------------

def encoder_kernel(x_ref, fcw_ref, fcb_ref, w1_ref, b1_ref, w2_ref, b2_ref,
                   wp_ref, bp_ref, o_ref, *, block_meta):
    """input_fc + NaN masking + all ConvBlocks, VMEM resident, one batch row."""
    T, C = x_ref.shape
    x = x_ref[...]                                            # (T, 128) f32

    # NaN-row mask (eval: mask == 'all_true' & nan_mask)
    nanf = jnp.where(x != x, 1.0, 0.0)
    valid = jnp.max(nanf, axis=-1, keepdims=True) < 0.5       # (T, 1) bool
    xc = jnp.where(valid, x, 0.0)

    # Linear(input_dim, hidden): bf16 operands, f32 accumulation on the MXU.
    h = jnp.dot(xc.astype(jnp.bfloat16), fcw_ref[...],
                preferred_element_type=jnp.float32) + fcb_ref[...]
    h = jnp.where(valid, h, 0.0)

    def shift_fwd(z, d):
        # s[t] = z[t - d], zero for t < d   (static shift, no O(T^2) matmul)
        if d >= T:
            return jnp.zeros_like(z)
        return jnp.concatenate(
            [jnp.zeros((d, C), z.dtype), z[:T - d, :]], axis=0)

    def shift_bwd(z, d):
        # s[t] = z[t + d], zero for t >= T - d
        if d >= T:
            return jnp.zeros_like(z)
        return jnp.concatenate(
            [z[d:, :], jnp.zeros((d, C), z.dtype)], axis=0)

    def dconv(z, w_stacked, b, d):
        # "same"-padded dilated conv, all 3 taps fused into ONE MXU matmul:
        # (T, 3C) @ (3C, C), bf16 inputs, f32 accumulation.
        cat = jnp.concatenate([shift_fwd(z, d), z, shift_bwd(z, d)], axis=1)
        return jnp.dot(cat.astype(jnp.bfloat16), w_stacked,
                       preferred_element_type=jnp.float32) + b

    for i, (d, proj_slot) in enumerate(block_meta):
        if proj_slot is None:
            residual = h                                      # identity path
        else:
            residual = (jnp.dot(h.astype(jnp.bfloat16), wp_ref[proj_slot],
                                preferred_element_type=jnp.float32)
                        + bp_ref[proj_slot])
        z = _gelu(h)
        z = dconv(z, w1_ref[i], b1_ref[i], d)
        z = _gelu(z)
        z = dconv(z, w2_ref[i], b2_ref[i], d)
        h = z + residual

    o_ref[...] = h      # lane-dense (T, 128) store; wrapper slices channels


# --------------------------- packing / pallas glue ---------------------------

def _pad_to(a, shape):
    pads = [(0, s - d) for d, s in zip(a.shape, shape)]
    return jnp.pad(a, pads)


def prepare_packed(params, cp=CP):
    """Pad channels to `cp`, stack per-block weights, pre-cast matmul weights
    to bf16 (halves weight DMA; f32 accumulation keeps accuracy)."""
    fc_w = _pad_to(params["fc_w"], (cp, cp)).astype(jnp.bfloat16)
    fc_b = _pad_to(params["fc_b"], (1, cp))

    W1, B1, W2, B2, WP, BP, meta = [], [], [], [], [], [], []
    for blk in params["blocks"]:
        w1 = _pad_to(blk["w1"], (3, cp, cp)).reshape(3 * cp, cp)
        w2 = _pad_to(blk["w2"], (3, cp, cp)).reshape(3 * cp, cp)
        W1.append(w1.astype(jnp.bfloat16))
        W2.append(w2.astype(jnp.bfloat16))
        B1.append(_pad_to(blk["b1"], (1, cp)))
        B2.append(_pad_to(blk["b2"], (1, cp)))
        if blk["has_proj"]:
            slot = len(WP)
            WP.append(_pad_to(blk["wp"], (cp, cp)).astype(jnp.bfloat16))
            BP.append(_pad_to(blk["bp"], (1, cp)))
        else:
            slot = None
        meta.append((blk["dilation"], slot))

    packed = dict(
        fc_w=fc_w, fc_b=fc_b,
        w1=jnp.stack(W1), b1=jnp.stack(B1),
        w2=jnp.stack(W2), b2=jnp.stack(B2),
        wp=jnp.stack(WP), bp=jnp.stack(BP),
    )
    return packed, tuple(meta)


def ts_encoder_forward(params, x, cp=CP):
    """Eval-mode TSEncoder.forward (mask='all_true', dropout=identity)."""
    B, T, _ = x.shape
    out_dim = params["blocks"][-1]["b2"].shape[1]
    packed, block_meta = prepare_packed(params, cp)
    x_p = _pad_to(x.astype(jnp.float32), (B, T, cp))

    nb = packed["w1"].shape[0]
    npj = packed["wp"].shape[0]
    kernel = functools.partial(encoder_kernel, block_meta=block_meta)

    out = pl.pallas_call(
        kernel,
        out_shape=jax.ShapeDtypeStruct((B, T, cp), jnp.float32),
        grid=(B,),
        in_specs=[
            pl.BlockSpec((None, T, cp), lambda b: (b, 0, 0)),          # x
            pl.BlockSpec((cp, cp), lambda b: (0, 0)),                  # fc_w
            pl.BlockSpec((1, cp), lambda b: (0, 0)),                   # fc_b
            pl.BlockSpec((nb, 3 * cp, cp), lambda b: (0, 0, 0)),       # W1
            pl.BlockSpec((nb, 1, cp), lambda b: (0, 0, 0)),            # B1
            pl.BlockSpec((nb, 3 * cp, cp), lambda b: (0, 0, 0)),       # W2
            pl.BlockSpec((nb, 1, cp), lambda b: (0, 0, 0)),            # B2
            pl.BlockSpec((npj, cp, cp), lambda b: (0, 0, 0)),          # WP
            pl.BlockSpec((npj, 1, cp), lambda b: (0, 0, 0)),           # BP
        ],
        out_specs=pl.BlockSpec((None, T, cp), lambda b: (b, 0, 0)),
        compiler_params=pltpu.CompilerParams(
            dimension_semantics=("parallel",),
            vmem_limit_bytes=32 * 1024 * 1024,
        ),
    )(x_p, packed["fc_w"], packed["fc_b"], packed["w1"], packed["b1"],
      packed["w2"], packed["b2"], packed["wp"], packed["bp"])

    return out[..., :out_dim]                                  # (B, T, out_dim)


# -------------------------- deterministic parameters ------------------------

def init_params(key, input_dim, output_dim, hidden_dim, depth):
    channels = [hidden_dim] * depth + [output_dim]
    n_blocks = len(channels)
    keys = jax.random.split(key, 2 + 6 * n_blocks)
    scale = 0.1
    params = {
        "fc_w": scale * jax.random.normal(keys[0], (input_dim, hidden_dim),
                                          jnp.float32),
        "fc_b": scale * jax.random.normal(keys[1], (1, hidden_dim),
                                          jnp.float32),
        "blocks": [],
    }
    cin = hidden_dim
    for i, cout in enumerate(channels):
        k = keys[2 + 6 * i: 2 + 6 * (i + 1)]
        final = (i == n_blocks - 1)
        has_proj = (cin != cout) or final
        blk = {
            "w1": scale * jax.random.normal(k[0], (3, cin, cout), jnp.float32),
            "b1": scale * jax.random.normal(k[1], (1, cout), jnp.float32),
            "w2": scale * jax.random.normal(k[2], (3, cout, cout), jnp.float32),
            "b2": scale * jax.random.normal(k[3], (1, cout), jnp.float32),
            "has_proj": has_proj,
            "dilation": 2 ** i,
        }
        if has_proj:
            blk["wp"] = scale * jax.random.normal(k[4], (cin, cout), jnp.float32)
            blk["bp"] = scale * jax.random.normal(k[5], (1, cout), jnp.float32)
        params["blocks"].append(blk)
        cin = cout
    return params


# ------------------------------ pure-JAX references --------------------------

def reference_forward(params, x, matmul_bf16):
    """Channels-last reference (pad+slice dilated convs).
    matmul_bf16=True mirrors the kernel's bf16-operand / f32-accumulate dots;
    matmul_bf16=False is a full-f32 ('highest' precision) reference."""
    if matmul_bf16:
        def mm(a, w):
            return jnp.dot(a.astype(jnp.bfloat16), w.astype(jnp.bfloat16),
                           preferred_element_type=jnp.float32)
    else:
        def mm(a, w):
            return jnp.dot(a, w, precision="highest")

    x = x.astype(jnp.float32)
    T = x.shape[1]
    valid = jnp.logical_not(jnp.any(jnp.isnan(x), axis=-1, keepdims=True))
    h = mm(jnp.where(valid, x, 0.0), params["fc_w"]) + params["fc_b"]
    h = jnp.where(valid, h, 0.0)

    def dconv(z, w3, b, d):
        zp = jnp.pad(z, ((0, 0), (d, d), (0, 0)))
        return (mm(zp[:, :T], w3[0]) + mm(zp[:, d:T + d], w3[1])
                + mm(zp[:, 2 * d:T + 2 * d], w3[2]) + b)

    for blk in params["blocks"]:
        d = blk["dilation"]
        residual = (mm(h, blk["wp"]) + blk["bp"]) if blk["has_proj"] else h
        z = jax.nn.gelu(h, approximate=False)
        z = dconv(z, blk["w1"], blk["b1"], d)
        z = jax.nn.gelu(z, approximate=False)
        z = dconv(z, blk["w2"], blk["b2"], d)
        h = z + residual
    return h


def reference_forward_laxconv(params, x):
    """Independent f32 reference using lax.conv_general_dilated (NCW)."""
    x = x.astype(jnp.float32)
    nan_mask = jnp.logical_not(jnp.any(jnp.isnan(x), axis=-1))   # (B, T)
    x = jnp.where(nan_mask[..., None], x, 0.0)
    h = jnp.dot(x, params["fc_w"], precision="highest") + params["fc_b"][0]
    h = jnp.where(nan_mask[..., None], h, 0.0)
    h = jnp.transpose(h, (0, 2, 1))                              # (B, C, T)
    for blk in params["blocks"]:
        d = blk["dilation"]
        if blk["has_proj"]:
            wp = jnp.transpose(blk["wp"])[:, :, None]            # (Co, Ci, 1)
            residual = (jax.lax.conv_general_dilated(
                h, wp, (1,), [(0, 0)], precision="highest")
                + blk["bp"][0][None, :, None])
        else:
            residual = h
        z = jax.nn.gelu(h, approximate=False)
        w1 = jnp.transpose(blk["w1"], (2, 1, 0))                 # (Co, Ci, K)
        z = (jax.lax.conv_general_dilated(z, w1, (1,), [(d, d)],
                                          rhs_dilation=(d,), precision="highest")
             + blk["b1"][0][None, :, None])
        z = jax.nn.gelu(z, approximate=False)
        w2 = jnp.transpose(blk["w2"], (2, 1, 0))
        z = (jax.lax.conv_general_dilated(z, w2, (1,), [(d, d)],
                                          rhs_dilation=(d,), precision="highest")
             + blk["b2"][0][None, :, None])
        h = z + residual
    return jnp.transpose(h, (0, 2, 1))


# ----------------------------------- main -----------------------------------

if __name__ == "__main__":
    B, T = 2, 16
    input_dim, output_dim, hidden_dim, depth = 4, 16, 32, 3

    key = jax.random.PRNGKey(0)
    kx, kp = jax.random.split(key)
    x = jax.random.normal(kx, (B, T, input_dim), dtype=jnp.float32)
    # inject NaNs to exercise the nan_mask path
    x = x.at[0, 3, 1].set(jnp.nan)
    x = x.at[1, 7, 0].set(jnp.nan)

    params = init_params(kp, input_dim, output_dim, hidden_dim, depth)

    out = ts_encoder_forward(params, x)
    out = jax.block_until_ready(out)
    assert out.shape == (B, T, output_dim), out.shape

    ref_bf16 = reference_forward(params, x, matmul_bf16=True)   # precision-matched
    ref_f32 = reference_forward(params, x, matmul_bf16=False)   # full f32
    ref_conv = reference_forward_laxconv(params, x)             # independent conv

    # the two independent f32 references must agree tightly
    np.testing.assert_allclose(np.asarray(ref_f32), np.asarray(ref_conv),
                               rtol=1e-4, atol=1e-4)
    # kernel vs precision-matched reference: tight
    np.testing.assert_allclose(np.asarray(out), np.asarray(ref_bf16),
                               rtol=2e-3, atol=2e-4)
    # kernel vs full-f32 reference: loose (bf16 MXU operands)
    np.testing.assert_allclose(np.asarray(out), np.asarray(ref_f32),
                               rtol=5e-2, atol=2e-2)
    print("KERNEL_OK")
</pallas_src>

<mosaic_0001>
module attributes {stable_mosaic.version = 11 : i64} {
  func.func @encoder_kernel(%arg0: i32, %arg1: memref<1x16x128xf32, #tpu.memory_space<vmem>>, %arg2: memref<128x128xbf16, #tpu.memory_space<vmem>>, %arg3: memref<1x128xf32, #tpu.memory_space<vmem>>, %arg4: memref<4x384x128xbf16, #tpu.memory_space<vmem>>, %arg5: memref<4x1x128xf32, #tpu.memory_space<vmem>>, %arg6: memref<4x384x128xbf16, #tpu.memory_space<vmem>>, %arg7: memref<4x1x128xf32, #tpu.memory_space<vmem>>, %arg8: memref<1x128x128xbf16, #tpu.memory_space<vmem>>, %arg9: memref<1x1x128xf32, #tpu.memory_space<vmem>>, %arg10: memref<1x16x128xf32, #tpu.memory_space<vmem>>) attributes {dimension_semantics = [#tpu.dimension_semantics<parallel>], iteration_bounds = array<i64: 2>, scalar_prefetch = 0 : i64, scratch_operands = 0 : i64, tpu.core_type = #tpu.core_type<tc>, window_params = [{transform_indices = @transform_0, window_bounds = array<i64: 1, 16, 128>}, {pipeline_mode = #tpu.pipeline_mode<synchronous>, transform_indices = @transform_1, window_bounds = array<i64: 128, 128>}, {pipeline_mode = #tpu.pipeline_mode<synchronous>, transform_indices = @transform_2, window_bounds = array<i64: 1, 128>}, {pipeline_mode = #tpu.pipeline_mode<synchronous>, transform_indices = @transform_3, window_bounds = array<i64: 4, 384, 128>}, {pipeline_mode = #tpu.pipeline_mode<synchronous>, transform_indices = @transform_4, window_bounds = array<i64: 4, 1, 128>}, {pipeline_mode = #tpu.pipeline_mode<synchronous>, transform_indices = @transform_5, window_bounds = array<i64: 4, 384, 128>}, {pipeline_mode = #tpu.pipeline_mode<synchronous>, transform_indices = @transform_6, window_bounds = array<i64: 4, 1, 128>}, {pipeline_mode = #tpu.pipeline_mode<synchronous>, transform_indices = @transform_7, window_bounds = array<i64: 1, 128, 128>}, {pipeline_mode = #tpu.pipeline_mode<synchronous>, transform_indices = @transform_8, window_bounds = array<i64: 1, 1, 128>}, {transform_indices = @transform_9, window_bounds = array<i64: 1, 16, 128>}]} {
    %c0 = arith.constant 0 : index
    %c0_0 = arith.constant 0 : index
    %c0_1 = arith.constant 0 : index
    %0 = vector.load %arg1[%c0, %c0_0, %c0_1] : memref<1x16x128xf32, #tpu.memory_space<vmem>>, vector<1x16x128xf32>
    %1 = vector.shape_cast %0 : vector<1x16x128xf32> to vector<16x128xf32>
    %2 = arith.cmpf one, %1, %1 : vector<16x128xf32>
    %cst = arith.constant 1.000000e+00 : f32
    %cst_2 = arith.constant 0.000000e+00 : f32
    %3 = vector.broadcast %cst : f32 to vector<16x128xf32>
    %4 = vector.broadcast %cst_2 : f32 to vector<16x128xf32>
    %5 = arith.select %2, %3, %4 : vector<16x128xi1>, vector<16x128xf32>
    %cst_3 = arith.constant dense<0xFF800000> : vector<16xf32>
    %6 = vector.multi_reduction <maximumf>, %5, %cst_3 [1] : vector<16x128xf32> to vector<16xf32>
    %7 = vector.shape_cast %6 : vector<16xf32> to vector<16x1xf32>
    %cst_4 = arith.constant 5.000000e-01 : f32
    %8 = vector.broadcast %cst_4 : f32 to vector<16x1xf32>
    %9 = arith.cmpf olt, %7, %8 : vector<16x1xf32>
    %cst_5 = arith.constant 0.000000e+00 : f32
    %10 = vector.shape_cast %9 : vector<16x1xi1> to vector<16x1xi1>
    %11 = vector.broadcast %10 : vector<16x1xi1> to vector<16x128xi1>
    %12 = vector.broadcast %cst_5 : f32 to vector<16x128xf32>
    %13 = arith.select %11, %1, %12 : vector<16x128xi1>, vector<16x128xf32>
    %14 = arith.truncf %13 : vector<16x128xf32> to vector<16x128xbf16>
    %c0_6 = arith.constant 0 : index
    %c0_7 = arith.constant 0 : index
    %15 = vector.load %arg2[%c0_6, %c0_7] : memref<128x128xbf16, #tpu.memory_space<vmem>>, vector<128x128xbf16>
    %cst_8 = arith.constant dense<0.000000e+00> : vector<16x128xf32>
    %16 = tpu.matmul %14, %15, %cst_8 {dimension_numbers = #tpu.dot_dimension_numbers<[1], [0], [0], [1], [0, 0, 1, 1], [], []>} : vector<16x128xbf16>, vector<128x128xbf16>, vector<16x128xf32> -> vector<16x128xf32>
    %c0_9 = arith.constant 0 : index
    %c0_10 = arith.constant 0 : index
    %17 = vector.load %arg3[%c0_9, %c0_10] : memref<1x128xf32, #tpu.memory_space<vmem>>, vector<1x128xf32>
    %18 = vector.broadcast %17 : vector<1x128xf32> to vector<16x128xf32>
    %19 = arith.addf %16, %18 : vector<16x128xf32>
    %cst_11 = arith.constant 0.000000e+00 : f32
    %20 = vector.shape_cast %9 : vector<16x1xi1> to vector<16x1xi1>
    %21 = vector.broadcast %20 : vector<16x1xi1> to vector<16x128xi1>
    %22 = vector.broadcast %cst_11 : f32 to vector<16x128xf32>
    %23 = arith.select %21, %19, %22 : vector<16x128xi1>, vector<16x128xf32>
    %cst_12 = arith.constant 5.000000e-01 : f32
    %24 = vector.broadcast %cst_12 : f32 to vector<16x128xf32>
    %25 = arith.mulf %24, %23 : vector<16x128xf32>
    %cst_13 = arith.constant 0.707106769 : f32
    %26 = vector.broadcast %cst_13 : f32 to vector<16x128xf32>
    %27 = arith.mulf %23, %26 : vector<16x128xf32>
    %cst_14 = arith.constant 0.000000e+00 : f32
    %28 = vector.broadcast %cst_14 : f32 to vector<16x128xf32>
    %29 = arith.cmpf oge, %27, %28 : vector<16x128xf32>
    %cst_15 = arith.constant 1.000000e+00 : f32
    %cst_16 = arith.constant -1.000000e+00 : f32
    %30 = vector.broadcast %cst_15 : f32 to vector<16x128xf32>
    %31 = vector.broadcast %cst_16 : f32 to vector<16x128xf32>
    %32 = arith.select %29, %30, %31 : vector<16x128xi1>, vector<16x128xf32>
    %33 = math.absf %27 : vector<16x128xf32>
    %cst_17 = arith.constant 0.327591091 : f32
    %34 = vector.broadcast %cst_17 : f32 to vector<16x128xf32>
    %35 = arith.mulf %34, %33 : vector<16x128xf32>
    %cst_18 = arith.constant 1.000000e+00 : f32
    %36 = vector.broadcast %cst_18 : f32 to vector<16x128xf32>
    %37 = arith.addf %36, %35 : vector<16x128xf32>
    %cst_19 = arith.constant 1.000000e+00 : f32
    %38 = vector.broadcast %cst_19 : f32 to vector<16x128xf32>
    %39 = arith.divf %38, %37 : vector<16x128xf32>
    %cst_20 = arith.constant 1.06140542 : f32
    %40 = vector.broadcast %cst_20 : f32 to vector<16x128xf32>
    %41 = arith.mulf %40, %39 : vector<16x128xf32>
    %cst_21 = arith.constant -1.45315206 : f32
    %42 = vector.broadcast %cst_21 : f32 to vector<16x128xf32>
    %43 = arith.addf %41, %42 : vector<16x128xf32>
    %44 = arith.mulf %43, %39 : vector<16x128xf32>
    %cst_22 = arith.constant 1.42141378 : f32
    %45 = vector.broadcast %cst_22 : f32 to vector<16x128xf32>
    %46 = arith.addf %44, %45 : vector<16x128xf32>
    %47 = arith.mulf %46, %39 : vector<16x128xf32>
    %cst_23 = arith.constant -0.284496725 : f32
    %48 = vector.broadcast %cst_23 : f32 to vector<16x128xf32>
    %49 = arith.addf %47, %48 : vector<16x128xf32>
    %50 = arith.mulf %49, %39 : vector<16x128xf32>
    %cst_24 = arith.constant 0.254829586 : f32
    %51 = vector.broadcast %cst_24 : f32 to vector<16x128xf32>
    %52 = arith.addf %50, %51 : vector<16x128xf32>
    %53 = arith.mulf %52, %39 : vector<16x128xf32>
    %cst_25 = arith.constant 0.000000e+00 : f32
    %54 = vector.broadcast %cst_25 : f32 to vector<16x128xf32>
    %55 = arith.subf %54, %33 : vector<16x128xf32>
    %56 = arith.mulf %55, %33 : vector<16x128xf32>
    %57 = math.exp %56 : vector<16x128xf32>
    %58 = arith.mulf %53, %57 : vector<16x128xf32>
    %cst_26 = arith.constant 1.000000e+00 : f32
    %59 = vector.broadcast %cst_26 : f32 to vector<16x128xf32>
    %60 = arith.subf %59, %58 : vector<16x128xf32>
    %61 = arith.mulf %32, %60 : vector<16x128xf32>
    %cst_27 = arith.constant 1.000000e+00 : f32
    %62 = vector.broadcast %cst_27 : f32 to vector<16x128xf32>
    %63 = arith.addf %62, %61 : vector<16x128xf32>
    %64 = arith.mulf %25, %63 : vector<16x128xf32>
    %c0_28 = arith.constant 0 : index
    %c0_29 = arith.constant 0 : index
    %c0_30 = arith.constant 0 : index
    %65 = vector.load %arg4[%c0_28, %c0_29, %c0_30] : memref<4x384x128xbf16, #tpu.memory_space<vmem>>, vector<1x384x128xbf16>
    %66 = vector.shape_cast %65 : vector<1x384x128xbf16> to vector<384x128xbf16>
    %c0_31 = arith.constant 0 : index
    %c0_32 = arith.constant 0 : index
    %c0_33 = arith.constant 0 : index
    %67 = vector.load %arg5[%c0_31, %c0_32, %c0_33] : memref<4x1x128xf32, #tpu.memory_space<vmem>>, vector<1x1x128xf32>
    %68 = vector.shape_cast %67 : vector<1x1x128xf32> to vector<1x128xf32>
    %cst_34 = arith.constant 0.000000e+00 : f32
    %69 = vector.broadcast %cst_34 : f32 to vector<1x128xf32>
    %70 = vector.extract_strided_slice %64 {offsets = [0, 0], sizes = [15, 128], strides = [1, 1]} : vector<16x128xf32> to vector<15x128xf32>
    %71 = tpu.concatenate %69, %70 in 0 : vector<1x128xf32>, vector<15x128xf32> -> vector<16x128xf32>
    %72 = vector.extract_strided_slice %64 {offsets = [1, 0], sizes = [15, 128], strides = [1, 1]} : vector<16x128xf32> to vector<15x128xf32>
    %cst_35 = arith.constant 0.000000e+00 : f32
    %73 = vector.broadcast %cst_35 : f32 to vector<1x128xf32>
    %74 = tpu.concatenate %72, %73 in 0 : vector<15x128xf32>, vector<1x128xf32> -> vector<16x128xf32>
    %75 = tpu.concatenate %71, %64, %74 in 1 : vector<16x128xf32>, vector<16x128xf32>, vector<16x128xf32> -> vector<16x384xf32>
    %76 = arith.truncf %75 : vector<16x384xf32> to vector<16x384xbf16>
    %cst_36 = arith.constant dense<0.000000e+00> : vector<16x128xf32>
    %77 = tpu.matmul %76, %66, %cst_36 {dimension_numbers = #tpu.dot_dimension_numbers<[1], [0], [0], [1], [0, 0, 1, 1], [], []>} : vector<16x384xbf16>, vector<384x128xbf16>, vector<16x128xf32> -> vector<16x128xf32>
    %78 = vector.broadcast %68 : vector<1x128xf32> to vector<16x128xf32>
    %79 = arith.addf %77, %78 : vector<16x128xf32>
    %cst_37 = arith.constant 5.000000e-01 : f32
    %80 = vector.broadcast %cst_37 : f32 to vector<16x128xf32>
    %81 = arith.mulf %80, %79 : vector<16x128xf32>
    %cst_38 = arith.constant 0.707106769 : f32
    %82 = vector.broadcast %cst_38 : f32 to vector<16x128xf32>
    %83 = arith.mulf %79, %82 : vector<16x128xf32>
    %cst_39 = arith.constant 0.000000e+00 : f32
    %84 = vector.broadcast %cst_39 : f32 to vector<16x128xf32>
    %85 = arith.cmpf oge, %83, %84 : vector<16x128xf32>
    %cst_40 = arith.constant 1.000000e+00 : f32
    %cst_41 = arith.constant -1.000000e+00 : f32
    %86 = vector.broadcast %cst_40 : f32 to vector<16x128xf32>
    %87 = vector.broadcast %cst_41 : f32 to vector<16x128xf32>
    %88 = arith.select %85, %86, %87 : vector<16x128xi1>, vector<16x128xf32>
    %89 = math.absf %83 : vector<16x128xf32>
    %cst_42 = arith.constant 0.327591091 : f32
    %90 = vector.broadcast %cst_42 : f32 to vector<16x128xf32>
    %91 = arith.mulf %90, %89 : vector<16x128xf32>
    %cst_43 = arith.constant 1.000000e+00 : f32
    %92 = vector.broadcast %cst_43 : f32 to vector<16x128xf32>
    %93 = arith.addf %92, %91 : vector<16x128xf32>
    %cst_44 = arith.constant 1.000000e+00 : f32
    %94 = vector.broadcast %cst_44 : f32 to vector<16x128xf32>
    %95 = arith.divf %94, %93 : vector<16x128xf32>
    %cst_45 = arith.constant 1.06140542 : f32
    %96 = vector.broadcast %cst_45 : f32 to vector<16x128xf32>
    %97 = arith.mulf %96, %95 : vector<16x128xf32>
    %cst_46 = arith.constant -1.45315206 : f32
    %98 = vector.broadcast %cst_46 : f32 to vector<16x128xf32>
    %99 = arith.addf %97, %98 : vector<16x128xf32>
    %100 = arith.mulf %99, %95 : vector<16x128xf32>
    %cst_47 = arith.constant 1.42141378 : f32
    %101 = vector.broadcast %cst_47 : f32 to vector<16x128xf32>
    %102 = arith.addf %100, %101 : vector<16x128xf32>
    %103 = arith.mulf %102, %95 : vector<16x128xf32>
    %cst_48 = arith.constant -0.284496725 : f32
    %104 = vector.broadcast %cst_48 : f32 to vector<16x128xf32>
    %105 = arith.addf %103, %104 : vector<16x128xf32>
    %106 = arith.mulf %105, %95 : vector<16x128xf32>
    %cst_49 = arith.constant 0.254829586 : f32
    %107 = vector.broadcast %cst_49 : f32 to vector<16x128xf32>
    %108 = arith.addf %106, %107 : vector<16x128xf32>
    %109 = arith.mulf %108, %95 : vector<16x128xf32>
    %cst_50 = arith.constant 0.000000e+00 : f32
    %110 = vector.broadcast %cst_50 : f32 to vector<16x128xf32>
    %111 = arith.subf %110, %89 : vector<16x128xf32>
    %112 = arith.mulf %111, %89 : vector<16x128xf32>
    %113 = math.exp %112 : vector<16x128xf32>
    %114 = arith.mulf %109, %113 : vector<16x128xf32>
    %cst_51 = arith.constant 1.000000e+00 : f32
    %115 = vector.broadcast %cst_51 : f32 to vector<16x128xf32>
    %116 = arith.subf %115, %114 : vector<16x128xf32>
    %117 = arith.mulf %88, %116 : vector<16x128xf32>
    %cst_52 = arith.constant 1.000000e+00 : f32
    %118 = vector.broadcast %cst_52 : f32 to vector<16x128xf32>
    %119 = arith.addf %118, %117 : vector<16x128xf32>
    %120 = arith.mulf %81, %119 : vector<16x128xf32>
    %c0_53 = arith.constant 0 : index
    %c0_54 = arith.constant 0 : index
    %c0_55 = arith.constant 0 : index
    %121 = vector.load %arg6[%c0_53, %c0_54, %c0_55] : memref<4x384x128xbf16, #tpu.memory_space<vmem>>, vector<1x384x128xbf16>
    %122 = vector.shape_cast %121 : vector<1x384x128xbf16> to vector<384x128xbf16>
    %c0_56 = arith.constant 0 : index
    %c0_57 = arith.constant 0 : index
    %c0_58 = arith.constant 0 : index
    %123 = vector.load %arg7[%c0_56, %c0_57, %c0_58] : memref<4x1x128xf32, #tpu.memory_space<vmem>>, vector<1x1x128xf32>
    %124 = vector.shape_cast %123 : vector<1x1x128xf32> to vector<1x128xf32>
    %cst_59 = arith.constant 0.000000e+00 : f32
    %125 = vector.broadcast %cst_59 : f32 to vector<1x128xf32>
    %126 = vector.extract_strided_slice %120 {offsets = [0, 0], sizes = [15, 128], strides = [1, 1]} : vector<16x128xf32> to vector<15x128xf32>
    %127 = tpu.concatenate %125, %126 in 0 : vector<1x128xf32>, vector<15x128xf32> -> vector<16x128xf32>
    %128 = vector.extract_strided_slice %120 {offsets = [1, 0], sizes = [15, 128], strides = [1, 1]} : vector<16x128xf32> to vector<15x128xf32>
    %cst_60 = arith.constant 0.000000e+00 : f32
    %129 = vector.broadcast %cst_60 : f32 to vector<1x128xf32>
    %130 = tpu.concatenate %128, %129 in 0 : vector<15x128xf32>, vector<1x128xf32> -> vector<16x128xf32>
    %131 = tpu.concatenate %127, %120, %130 in 1 : vector<16x128xf32>, vector<16x128xf32>, vector<16x128xf32> -> vector<16x384xf32>
    %132 = arith.truncf %131 : vector<16x384xf32> to vector<16x384xbf16>
    %cst_61 = arith.constant dense<0.000000e+00> : vector<16x128xf32>
    %133 = tpu.matmul %132, %122, %cst_61 {dimension_numbers = #tpu.dot_dimension_numbers<[1], [0], [0], [1], [0, 0, 1, 1], [], []>} : vector<16x384xbf16>, vector<384x128xbf16>, vector<16x128xf32> -> vector<16x128xf32>
    %134 = vector.broadcast %124 : vector<1x128xf32> to vector<16x128xf32>
    %135 = arith.addf %133, %134 : vector<16x128xf32>
    %136 = arith.addf %135, %23 : vector<16x128xf32>
    %cst_62 = arith.constant 5.000000e-01 : f32
    %137 = vector.broadcast %cst_62 : f32 to vector<16x128xf32>
    %138 = arith.mulf %137, %136 : vector<16x128xf32>
    %cst_63 = arith.constant 0.707106769 : f32
    %139 = vector.broadcast %cst_63 : f32 to vector<16x128xf32>
    %140 = arith.mulf %136, %139 : vector<16x128xf32>
    %cst_64 = arith.constant 0.000000e+00 : f32
    %141 = vector.broadcast %cst_64 : f32 to vector<16x128xf32>
    %142 = arith.cmpf oge, %140, %141 : vector<16x128xf32>
    %cst_65 = arith.constant 1.000000e+00 : f32
    %cst_66 = arith.constant -1.000000e+00 : f32
    %143 = vector.broadcast %cst_65 : f32 to vector<16x128xf32>
    %144 = vector.broadcast %cst_66 : f32 to vector<16x128xf32>
    %145 = arith.select %142, %143, %144 : vector<16x128xi1>, vector<16x128xf32>
    %146 = math.absf %140 : vector<16x128xf32>
    %cst_67 = arith.constant 0.327591091 : f32
    %147 = vector.broadcast %cst_67 : f32 to vector<16x128xf32>
    %148 = arith.mulf %147, %146 : vector<16x128xf32>
    %cst_68 = arith.constant 1.000000e+00 : f32
    %149 = vector.broadcast %cst_68 : f32 to vector<16x128xf32>
    %150 = arith.addf %149, %148 : vector<16x128xf32>
    %cst_69 = arith.constant 1.000000e+00 : f32
    %151 = vector.broadcast %cst_69 : f32 to vector<16x128xf32>
    %152 = arith.divf %151, %150 : vector<16x128xf32>
    %cst_70 = arith.constant 1.06140542 : f32
    %153 = vector.broadcast %cst_70 : f32 to vector<16x128xf32>
    %154 = arith.mulf %153, %152 : vector<16x128xf32>
    %cst_71 = arith.constant -1.45315206 : f32
    %155 = vector.broadcast %cst_71 : f32 to vector<16x128xf32>
    %156 = arith.addf %154, %155 : vector<16x128xf32>
    %157 = arith.mulf %156, %152 : vector<16x128xf32>
    %cst_72 = arith.constant 1.42141378 : f32
    %158 = vector.broadcast %cst_72 : f32 to vector<16x128xf32>
    %159 = arith.addf %157, %158 : vector<16x128xf32>
    %160 = arith.mulf %159, %152 : vector<16x128xf32>
    %cst_73 = arith.constant -0.284496725 : f32
    %161 = vector.broadcast %cst_73 : f32 to vector<16x128xf32>
    %162 = arith.addf %160, %161 : vector<16x128xf32>
    %163 = arith.mulf %162, %152 : vector<16x128xf32>
    %cst_74 = arith.constant 0.254829586 : f32
    %164 = vector.broadcast %cst_74 : f32 to vector<16x128xf32>
    %165 = arith.addf %163, %164 : vector<16x128xf32>
    %166 = arith.mulf %165, %152 : vector<16x128xf32>
    %cst_75 = arith.constant 0.000000e+00 : f32
    %167 = vector.broadcast %cst_75 : f32 to vector<16x128xf32>
    %168 = arith.subf %167, %146 : vector<16x128xf32>
    %169 = arith.mulf %168, %146 : vector<16x128xf32>
    %170 = math.exp %169 : vector<16x128xf32>
    %171 = arith.mulf %166, %170 : vector<16x128xf32>
    %cst_76 = arith.constant 1.000000e+00 : f32
    %172 = vector.broadcast %cst_76 : f32 to vector<16x128xf32>
    %173 = arith.subf %172, %171 : vector<16x128xf32>
    %174 = arith.mulf %145, %173 : vector<16x128xf32>
    %cst_77 = arith.constant 1.000000e+00 : f32
    %175 = vector.broadcast %cst_77 : f32 to vector<16x128xf32>
    %176 = arith.addf %175, %174 : vector<16x128xf32>
    %177 = arith.mulf %138, %176 : vector<16x128xf32>
    %c1 = arith.constant 1 : index
    %c0_78 = arith.constant 0 : index
    %c0_79 = arith.constant 0 : index
    %178 = vector.load %arg4[%c1, %c0_78, %c0_79] : memref<4x384x128xbf16, #tpu.memory_space<vmem>>, vector<1x384x128xbf16>
    %179 = vector.shape_cast %178 : vector<1x384x128xbf16> to vector<384x128xbf16>
    %c1_80 = arith.constant 1 : index
    %c0_81 = arith.constant 0 : index
    %c0_82 = arith.constant 0 : index
    %180 = vector.load %arg5[%c1_80, %c0_81, %c0_82] : memref<4x1x128xf32, #tpu.memory_space<vmem>>, vector<1x1x128xf32>
    %181 = vector.shape_cast %180 : vector<1x1x128xf32> to vector<1x128xf32>
    %cst_83 = arith.constant 0.000000e+00 : f32
    %182 = vector.broadcast %cst_83 : f32 to vector<2x128xf32>
    %183 = vector.extract_strided_slice %177 {offsets = [0, 0], sizes = [14, 128], strides = [1, 1]} : vector<16x128xf32> to vector<14x128xf32>
    %184 = tpu.concatenate %182, %183 in 0 : vector<2x128xf32>, vector<14x128xf32> -> vector<16x128xf32>
    %185 = vector.extract_strided_slice %177 {offsets = [2, 0], sizes = [14, 128], strides = [1, 1]} : vector<16x128xf32> to vector<14x128xf32>
    %cst_84 = arith.constant 0.000000e+00 : f32
    %186 = vector.broadcast %cst_84 : f32 to vector<2x128xf32>
    %187 = tpu.concatenate %185, %186 in 0 : vector<14x128xf32>, vector<2x128xf32> -> vector<16x128xf32>
    %188 = tpu.concatenate %184, %177, %187 in 1 : vector<16x128xf32>, vector<16x128xf32>, vector<16x128xf32> -> vector<16x384xf32>
    %189 = arith.truncf %188 : vector<16x384xf32> to vector<16x384xbf16>
    %cst_85 = arith.constant dense<0.000000e+00> : vector<16x128xf32>
    %190 = tpu.matmul %189, %179, %cst_85 {dimension_numbers = #tpu.dot_dimension_numbers<[1], [0], [0], [1], [0, 0, 1, 1], [], []>} : vector<16x384xbf16>, vector<384x128xbf16>, vector<16x128xf32> -> vector<16x128xf32>
    %191 = vector.broadcast %181 : vector<1x128xf32> to vector<16x128xf32>
    %192 = arith.addf %190, %191 : vector<16x128xf32>
    %cst_86 = arith.constant 5.000000e-01 : f32
    %193 = vector.broadcast %cst_86 : f32 to vector<16x128xf32>
    %194 = arith.mulf %193, %192 : vector<16x128xf32>
    %cst_87 = arith.constant 0.707106769 : f32
    %195 = vector.broadcast %cst_87 : f32 to vector<16x128xf32>
    %196 = arith.mulf %192, %195 : vector<16x128xf32>
    %cst_88 = arith.constant 0.000000e+00 : f32
    %197 = vector.broadcast %cst_88 : f32 to vector<16x128xf32>
    %198 = arith.cmpf oge, %196, %197 : vector<16x128xf32>
    %cst_89 = arith.constant 1.000000e+00 : f32
    %cst_90 = arith.constant -1.000000e+00 : f32
    %199 = vector.broadcast %cst_89 : f32 to vector<16x128xf32>
    %200 = vector.broadcast %cst_90 : f32 to vector<16x128xf32>
    %201 = arith.select %198, %199, %200 : vector<16x128xi1>, vector<16x128xf32>
    %202 = math.absf %196 : vector<16x128xf32>
    %cst_91 = arith.constant 0.327591091 : f32
    %203 = vector.broadcast %cst_91 : f32 to vector<16x128xf32>
    %204 = arith.mulf %203, %202 : vector<16x128xf32>
    %cst_92 = arith.constant 1.000000e+00 : f32
    %205 = vector.broadcast %cst_92 : f32 to vector<16x128xf32>
    %206 = arith.addf %205, %204 : vector<16x128xf32>
    %cst_93 = arith.constant 1.000000e+00 : f32
    %207 = vector.broadcast %cst_93 : f32 to vector<16x128xf32>
    %208 = arith.divf %207, %206 : vector<16x128xf32>
    %cst_94 = arith.constant 1.06140542 : f32
    %209 = vector.broadcast %cst_94 : f32 to vector<16x128xf32>
    %210 = arith.mulf %209, %208 : vector<16x128xf32>
    %cst_95 = arith.constant -1.45315206 : f32
    %211 = vector.broadcast %cst_95 : f32 to vector<16x128xf32>
    %212 = arith.addf %210, %211 : vector<16x128xf32>
    %213 = arith.mulf %212, %208 : vector<16x128xf32>
    %cst_96 = arith.constant 1.42141378 : f32
    %214 = vector.broadcast %cst_96 : f32 to vector<16x128xf32>
    %215 = arith.addf %213, %214 : vector<16x128xf32>
    %216 = arith.mulf %215, %208 : vector<16x128xf32>
    %cst_97 = arith.constant -0.284496725 : f32
    %217 = vector.broadcast %cst_97 : f32 to vector<16x128xf32>
    %218 = arith.addf %216, %217 : vector<16x128xf32>
    %219 = arith.mulf %218, %208 : vector<16x128xf32>
    %cst_98 = arith.constant 0.254829586 : f32
    %220 = vector.broadcast %cst_98 : f32 to vector<16x128xf32>
    %221 = arith.addf %219, %220 : vector<16x128xf32>
    %222 = arith.mulf %221, %208 : vector<16x128xf32>
    %cst_99 = arith.constant 0.000000e+00 : f32
    %223 = vector.broadcast %cst_99 : f32 to vector<16x128xf32>
    %224 = arith.subf %223, %202 : vector<16x128xf32>
    %225 = arith.mulf %224, %202 : vector<16x128xf32>
    %226 = math.exp %225 : vector<16x128xf32>
    %227 = arith.mulf %222, %226 : vector<16x128xf32>
    %cst_100 = arith.constant 1.000000e+00 : f32
    %228 = vector.broadcast %cst_100 : f32 to vector<16x128xf32>
    %229 = arith.subf %228, %227 : vector<16x128xf32>
    %230 = arith.mulf %201, %229 : vector<16x128xf32>
    %cst_101 = arith.constant 1.000000e+00 : f32
    %231 = vector.broadcast %cst_101 : f32 to vector<16x128xf32>
    %232 = arith.addf %231, %230 : vector<16x128xf32>
    %233 = arith.mulf %194, %232 : vector<16x128xf32>
    %c1_102 = arith.constant 1 : index
    %c0_103 = arith.constant 0 : index
    %c0_104 = arith.constant 0 : index
    %234 = vector.load %arg6[%c1_102, %c0_103, %c0_104] : memref<4x384x128xbf16, #tpu.memory_space<vmem>>, vector<1x384x128xbf16>
    %235 = vector.shape_cast %234 : vector<1x384x128xbf16> to vector<384x128xbf16>
    %c1_105 = arith.constant 1 : index
    %c0_106 = arith.constant 0 : index
    %c0_107 = arith.constant 0 : index
    %236 = vector.load %arg7[%c1_105, %c0_106, %c0_107] : memref<4x1x128xf32, #tpu.memory_space<vmem>>, vector<1x1x128xf32>
    %237 = vector.shape_cast %236 : vector<1x1x128xf32> to vector<1x128xf32>
    %cst_108 = arith.constant 0.000000e+00 : f32
    %238 = vector.broadcast %cst_108 : f32 to vector<2x128xf32>
    %239 = vector.extract_strided_slice %233 {offsets = [0, 0], sizes = [14, 128], strides = [1, 1]} : vector<16x128xf32> to vector<14x128xf32>
    %240 = tpu.concatenate %238, %239 in 0 : vector<2x128xf32>, vector<14x128xf32> -> vector<16x128xf32>
    %241 = vector.extract_strided_slice %233 {offsets = [2, 0], sizes = [14, 128], strides = [1, 1]} : vector<16x128xf32> to vector<14x128xf32>
    %cst_109 = arith.constant 0.000000e+00 : f32
    %242 = vector.broadcast %cst_109 : f32 to vector<2x128xf32>
    %243 = tpu.concatenate %241, %242 in 0 : vector<14x128xf32>, vector<2x128xf32> -> vector<16x128xf32>
    %244 = tpu.concatenate %240, %233, %243 in 1 : vector<16x128xf32>, vector<16x128xf32>, vector<16x128xf32> -> vector<16x384xf32>
    %245 = arith.truncf %244 : vector<16x384xf32> to vector<16x384xbf16>
    %cst_110 = arith.constant dense<0.000000e+00> : vector<16x128xf32>
    %246 = tpu.matmul %245, %235, %cst_110 {dimension_numbers = #tpu.dot_dimension_numbers<[1], [0], [0], [1], [0, 0, 1, 1], [], []>} : vector<16x384xbf16>, vector<384x128xbf16>, vector<16x128xf32> -> vector<16x128xf32>
    %247 = vector.broadcast %237 : vector<1x128xf32> to vector<16x128xf32>
    %248 = arith.addf %246, %247 : vector<16x128xf32>
    %249 = arith.addf %248, %136 : vector<16x128xf32>
    %cst_111 = arith.constant 5.000000e-01 : f32
    %250 = vector.broadcast %cst_111 : f32 to vector<16x128xf32>
    %251 = arith.mulf %250, %249 : vector<16x128xf32>
    %cst_112 = arith.constant 0.707106769 : f32
    %252 = vector.broadcast %cst_112 : f32 to vector<16x128xf32>
    %253 = arith.mulf %249, %252 : vector<16x128xf32>
    %cst_113 = arith.constant 0.000000e+00 : f32
    %254 = vector.broadcast %cst_113 : f32 to vector<16x128xf32>
    %255 = arith.cmpf oge, %253, %254 : vector<16x128xf32>
    %cst_114 = arith.constant 1.000000e+00 : f32
    %cst_115 = arith.constant -1.000000e+00 : f32
    %256 = vector.broadcast %cst_114 : f32 to vector<16x128xf32>
    %257 = vector.broadcast %cst_115 : f32 to vector<16x128xf32>
    %258 = arith.select %255, %256, %257 : vector<16x128xi1>, vector<16x128xf32>
    %259 = math.absf %253 : vector<16x128xf32>
    %cst_116 = arith.constant 0.327591091 : f32
    %260 = vector.broadcast %cst_116 : f32 to vector<16x128xf32>
    %261 = arith.mulf %260, %259 : vector<16x128xf32>
    %cst_117 = arith.constant 1.000000e+00 : f32
    %262 = vector.broadcast %cst_117 : f32 to vector<16x128xf32>
    %263 = arith.addf %262, %261 : vector<16x128xf32>
    %cst_118 = arith.constant 1.000000e+00 : f32
    %264 = vector.broadcast %cst_118 : f32 to vector<16x128xf32>
    %265 = arith.divf %264, %263 : vector<16x128xf32>
    %cst_119 = arith.constant 1.06140542 : f32
    %266 = vector.broadcast %cst_119 : f32 to vector<16x128xf32>
    %267 = arith.mulf %266, %265 : vector<16x128xf32>
    %cst_120 = arith.constant -1.45315206 : f32
    %268 = vector.broadcast %cst_120 : f32 to vector<16x128xf32>
    %269 = arith.addf %267, %268 : vector<16x128xf32>
    %270 = arith.mulf %269, %265 : vector<16x128xf32>
    %cst_121 = arith.constant 1.42141378 : f32
    %271 = vector.broadcast %cst_121 : f32 to vector<16x128xf32>
    %272 = arith.addf %270, %271 : vector<16x128xf32>
    %273 = arith.mulf %272, %265 : vector<16x128xf32>
    %cst_122 = arith.constant -0.284496725 : f32
    %274 = vector.broadcast %cst_122 : f32 to vector<16x128xf32>
    %275 = arith.addf %273, %274 : vector<16x128xf32>
    %276 = arith.mulf %275, %265 : vector<16x128xf32>
    %cst_123 = arith.constant 0.254829586 : f32
    %277 = vector.broadcast %cst_123 : f32 to vector<16x128xf32>
    %278 = arith.addf %276, %277 : vector<16x128xf32>
    %279 = arith.mulf %278, %265 : vector<16x128xf32>
    %cst_124 = arith.constant 0.000000e+00 : f32
    %280 = vector.broadcast %cst_124 : f32 to vector<16x128xf32>
    %281 = arith.subf %280, %259 : vector<16x128xf32>
    %282 = arith.mulf %281, %259 : vector<16x128xf32>
    %283 = math.exp %282 : vector<16x128xf32>
    %284 = arith.mulf %279, %283 : vector<16x128xf32>
    %cst_125 = arith.constant 1.000000e+00 : f32
    %285 = vector.broadcast %cst_125 : f32 to vector<16x128xf32>
    %286 = arith.subf %285, %284 : vector<16x128xf32>
    %287 = arith.mulf %258, %286 : vector<16x128xf32>
    %cst_126 = arith.constant 1.000000e+00 : f32
    %288 = vector.broadcast %cst_126 : f32 to vector<16x128xf32>
    %289 = arith.addf %288, %287 : vector<16x128xf32>
    %290 = arith.mulf %251, %289 : vector<16x128xf32>
    %c2 = arith.constant 2 : index
    %c0_127 = arith.constant 0 : index
    %c0_128 = arith.constant 0 : index
    %291 = vector.load %arg4[%c2, %c0_127, %c0_128] : memref<4x384x128xbf16, #tpu.memory_space<vmem>>, vector<1x384x128xbf16>
    %292 = vector.shape_cast %291 : vector<1x384x128xbf16> to vector<384x128xbf16>
    %c2_129 = arith.constant 2 : index
    %c0_130 = arith.constant 0 : index
    %c0_131 = arith.constant 0 : index
    %293 = vector.load %arg5[%c2_129, %c0_130, %c0_131] : memref<4x1x128xf32, #tpu.memory_space<vmem>>, vector<1x1x128xf32>
    %294 = vector.shape_cast %293 : vector<1x1x128xf32> to vector<1x128xf32>
    %cst_132 = arith.constant 0.000000e+00 : f32
    %295 = vector.broadcast %cst_132 : f32 to vector<4x128xf32>
    %296 = vector.extract_strided_slice %290 {offsets = [0, 0], sizes = [12, 128], strides = [1, 1]} : vector<16x128xf32> to vector<12x128xf32>
    %297 = tpu.concatenate %295, %296 in 0 : vector<4x128xf32>, vector<12x128xf32> -> vector<16x128xf32>
    %298 = vector.extract_strided_slice %290 {offsets = [4, 0], sizes = [12, 128], strides = [1, 1]} : vector<16x128xf32> to vector<12x128xf32>
    %cst_133 = arith.constant 0.000000e+00 : f32
    %299 = vector.broadcast %cst_133 : f32 to vector<4x128xf32>
    %300 = tpu.concatenate %298, %299 in 0 : vector<12x128xf32>, vector<4x128xf32> -> vector<16x128xf32>
    %301 = tpu.concatenate %297, %290, %300 in 1 : vector<16x128xf32>, vector<16x128xf32>, vector<16x128xf32> -> vector<16x384xf32>
    %302 = arith.truncf %301 : vector<16x384xf32> to vector<16x384xbf16>
    %cst_134 = arith.constant dense<0.000000e+00> : vector<16x128xf32>
    %303 = tpu.matmul %302, %292, %cst_134 {dimension_numbers = #tpu.dot_dimension_numbers<[1], [0], [0], [1], [0, 0, 1, 1], [], []>} : vector<16x384xbf16>, vector<384x128xbf16>, vector<16x128xf32> -> vector<16x128xf32>
    %304 = vector.broadcast %294 : vector<1x128xf32> to vector<16x128xf32>
    %305 = arith.addf %303, %304 : vector<16x128xf32>
    %cst_135 = arith.constant 5.000000e-01 : f32
    %306 = vector.broadcast %cst_135 : f32 to vector<16x128xf32>
    %307 = arith.mulf %306, %305 : vector<16x128xf32>
    %cst_136 = arith.constant 0.707106769 : f32
    %308 = vector.broadcast %cst_136 : f32 to vector<16x128xf32>
    %309 = arith.mulf %305, %308 : vector<16x128xf32>
    %cst_137 = arith.constant 0.000000e+00 : f32
    %310 = vector.broadcast %cst_137 : f32 to vector<16x128xf32>
    %311 = arith.cmpf oge, %309, %310 : vector<16x128xf32>
    %cst_138 = arith.constant 1.000000e+00 : f32
    %cst_139 = arith.constant -1.000000e+00 : f32
    %312 = vector.broadcast %cst_138 : f32 to vector<16x128xf32>
    %313 = vector.broadcast %cst_139 : f32 to vector<16x128xf32>
    %314 = arith.select %311, %312, %313 : vector<16x128xi1>, vector<16x128xf32>
    %315 = math.absf %309 : vector<16x128xf32>
    %cst_140 = arith.constant 0.327591091 : f32
    %316 = vector.broadcast %cst_140 : f32 to vector<16x128xf32>
    %317 = arith.mulf %316, %315 : vector<16x128xf32>
    %cst_141 = arith.constant 1.000000e+00 : f32
    %318 = vector.broadcast %cst_141 : f32 to vector<16x128xf32>
    %319 = arith.addf %318, %317 : vector<16x128xf32>
    %cst_142 = arith.constant 1.000000e+00 : f32
    %320 = vector.broadcast %cst_142 : f32 to vector<16x128xf32>
    %321 = arith.divf %320, %319 : vector<16x128xf32>
    %cst_143 = arith.constant 1.06140542 : f32
    %322 = vector.broadcast %cst_143 : f32 to vector<16x128xf32>
    %323 = arith.mulf %322, %321 : vector<16x128xf32>
    %cst_144 = arith.constant -1.45315206 : f32
    %324 = vector.broadcast %cst_144 : f32 to vector<16x128xf32>
    %325 = arith.addf %323, %324 : vector<16x128xf32>
    %326 = arith.mulf %325, %321 : vector<16x128xf32>
    %cst_145 = arith.constant 1.42141378 : f32
    %327 = vector.broadcast %cst_145 : f32 to vector<16x128xf32>
    %328 = arith.addf %326, %327 : vector<16x128xf32>
    %329 = arith.mulf %328, %321 : vector<16x128xf32>
    %cst_146 = arith.constant -0.284496725 : f32
    %330 = vector.broadcast %cst_146 : f32 to vector<16x128xf32>
    %331 = arith.addf %329, %330 : vector<16x128xf32>
    %332 = arith.mulf %331, %321 : vector<16x128xf32>
    %cst_147 = arith.constant 0.254829586 : f32
    %333 = vector.broadcast %cst_147 : f32 to vector<16x128xf32>
    %334 = arith.addf %332, %333 : vector<16x128xf32>
    %335 = arith.mulf %334, %321 : vector<16x128xf32>
    %cst_148 = arith.constant 0.000000e+00 : f32
    %336 = vector.broadcast %cst_148 : f32 to vector<16x128xf32>
    %337 = arith.subf %336, %315 : vector<16x128xf32>
    %338 = arith.mulf %337, %315 : vector<16x128xf32>
    %339 = math.exp %338 : vector<16x128xf32>
    %340 = arith.mulf %335, %339 : vector<16x128xf32>
    %cst_149 = arith.constant 1.000000e+00 : f32
    %341 = vector.broadcast %cst_149 : f32 to vector<16x128xf32>
    %342 = arith.subf %341, %340 : vector<16x128xf32>
    %343 = arith.mulf %314, %342 : vector<16x128xf32>
    %cst_150 = arith.constant 1.000000e+00 : f32
    %344 = vector.broadcast %cst_150 : f32 to vector<16x128xf32>
    %345 = arith.addf %344, %343 : vector<16x128xf32>
    %346 = arith.mulf %307, %345 : vector<16x128xf32>
    %c2_151 = arith.constant 2 : index
    %c0_152 = arith.constant 0 : index
    %c0_153 = arith.constant 0 : index
    %347 = vector.load %arg6[%c2_151, %c0_152, %c0_153] : memref<4x384x128xbf16, #tpu.memory_space<vmem>>, vector<1x384x128xbf16>
    %348 = vector.shape_cast %347 : vector<1x384x128xbf16> to vector<384x128xbf16>
    %c2_154 = arith.constant 2 : index
    %c0_155 = arith.constant 0 : index
    %c0_156 = arith.constant 0 : index
    %349 = vector.load %arg7[%c2_154, %c0_155, %c0_156] : memref<4x1x128xf32, #tpu.memory_space<vmem>>, vector<1x1x128xf32>
    %350 = vector.shape_cast %349 : vector<1x1x128xf32> to vector<1x128xf32>
    %cst_157 = arith.constant 0.000000e+00 : f32
    %351 = vector.broadcast %cst_157 : f32 to vector<4x128xf32>
    %352 = vector.extract_strided_slice %346 {offsets = [0, 0], sizes = [12, 128], strides = [1, 1]} : vector<16x128xf32> to vector<12x128xf32>
    %353 = tpu.concatenate %351, %352 in 0 : vector<4x128xf32>, vector<12x128xf32> -> vector<16x128xf32>
    %354 = vector.extract_strided_slice %346 {offsets = [4, 0], sizes = [12, 128], strides = [1, 1]} : vector<16x128xf32> to vector<12x128xf32>
    %cst_158 = arith.constant 0.000000e+00 : f32
    %355 = vector.broadcast %cst_158 : f32 to vector<4x128xf32>
    %356 = tpu.concatenate %354, %355 in 0 : vector<12x128xf32>, vector<4x128xf32> -> vector<16x128xf32>
    %357 = tpu.concatenate %353, %346, %356 in 1 : vector<16x128xf32>, vector<16x128xf32>, vector<16x128xf32> -> vector<16x384xf32>
    %358 = arith.truncf %357 : vector<16x384xf32> to vector<16x384xbf16>
    %cst_159 = arith.constant dense<0.000000e+00> : vector<16x128xf32>
    %359 = tpu.matmul %358, %348, %cst_159 {dimension_numbers = #tpu.dot_dimension_numbers<[1], [0], [0], [1], [0, 0, 1, 1], [], []>} : vector<16x384xbf16>, vector<384x128xbf16>, vector<16x128xf32> -> vector<16x128xf32>
    %360 = vector.broadcast %350 : vector<1x128xf32> to vector<16x128xf32>
    %361 = arith.addf %359, %360 : vector<16x128xf32>
    %362 = arith.addf %361, %249 : vector<16x128xf32>
    %363 = arith.truncf %362 : vector<16x128xf32> to vector<16x128xbf16>
    %c0_160 = arith.constant 0 : index
    %c0_161 = arith.constant 0 : index
    %c0_162 = arith.constant 0 : index
    %364 = vector.load %arg8[%c0_160, %c0_161, %c0_162] : memref<1x128x128xbf16, #tpu.memory_space<vmem>>, vector<1x128x128xbf16>
    %365 = vector.shape_cast %364 : vector<1x128x128xbf16> to vector<128x128xbf16>
    %cst_163 = arith.constant dense<0.000000e+00> : vector<16x128xf32>
    %366 = tpu.matmul %363, %365, %cst_163 {dimension_numbers = #tpu.dot_dimension_numbers<[1], [0], [0], [1], [0, 0, 1, 1], [], []>} : vector<16x128xbf16>, vector<128x128xbf16>, vector<16x128xf32> -> vector<16x128xf32>
    %c0_164 = arith.constant 0 : index
    %c0_165 = arith.constant 0 : index
    %c0_166 = arith.constant 0 : index
    %367 = vector.load %arg9[%c0_164, %c0_165, %c0_166] : memref<1x1x128xf32, #tpu.memory_space<vmem>>, vector<1x1x128xf32>
    %368 = vector.shape_cast %367 : vector<1x1x128xf32> to vector<1x128xf32>
    %369 = vector.broadcast %368 : vector<1x128xf32> to vector<16x128xf32>
    %370 = arith.addf %366, %369 : vector<16x128xf32>
    %cst_167 = arith.constant 5.000000e-01 : f32
    %371 = vector.broadcast %cst_167 : f32 to vector<16x128xf32>
    %372 = arith.mulf %371, %362 : vector<16x128xf32>
    %cst_168 = arith.constant 0.707106769 : f32
    %373 = vector.broadcast %cst_168 : f32 to vector<16x128xf32>
    %374 = arith.mulf %362, %373 : vector<16x128xf32>
    %cst_169 = arith.constant 0.000000e+00 : f32
    %375 = vector.broadcast %cst_169 : f32 to vector<16x128xf32>
    %376 = arith.cmpf oge, %374, %375 : vector<16x128xf32>
    %cst_170 = arith.constant 1.000000e+00 : f32
    %cst_171 = arith.constant -1.000000e+00 : f32
    %377 = vector.broadcast %cst_170 : f32 to vector<16x128xf32>
    %378 = vector.broadcast %cst_171 : f32 to vector<16x128xf32>
    %379 = arith.select %376, %377, %378 : vector<16x128xi1>, vector<16x128xf32>
    %380 = math.absf %374 : vector<16x128xf32>
    %cst_172 = arith.constant 0.327591091 : f32
    %381 = vector.broadcast %cst_172 : f32 to vector<16x128xf32>
    %382 = arith.mulf %381, %380 : vector<16x128xf32>
    %cst_173 = arith.constant 1.000000e+00 : f32
    %383 = vector.broadcast %cst_173 : f32 to vector<16x128xf32>
    %384 = arith.addf %383, %382 : vector<16x128xf32>
    %cst_174 = arith.constant 1.000000e+00 : f32
    %385 = vector.broadcast %cst_174 : f32 to vector<16x128xf32>
    %386 = arith.divf %385, %384 : vector<16x128xf32>
    %cst_175 = arith.constant 1.06140542 : f32
    %387 = vector.broadcast %cst_175 : f32 to vector<16x128xf32>
    %388 = arith.mulf %387, %386 : vector<16x128xf32>
    %cst_176 = arith.constant -1.45315206 : f32
    %389 = vector.broadcast %cst_176 : f32 to vector<16x128xf32>
    %390 = arith.addf %388, %389 : vector<16x128xf32>
    %391 = arith.mulf %390, %386 : vector<16x128xf32>
    %cst_177 = arith.constant 1.42141378 : f32
    %392 = vector.broadcast %cst_177 : f32 to vector<16x128xf32>
    %393 = arith.addf %391, %392 : vector<16x128xf32>
    %394 = arith.mulf %393, %386 : vector<16x128xf32>
    %cst_178 = arith.constant -0.284496725 : f32
    %395 = vector.broadcast %cst_178 : f32 to vector<16x128xf32>
    %396 = arith.addf %394, %395 : vector<16x128xf32>
    %397 = arith.mulf %396, %386 : vector<16x128xf32>
    %cst_179 = arith.constant 0.254829586 : f32
    %398 = vector.broadcast %cst_179 : f32 to vector<16x128xf32>
    %399 = arith.addf %397, %398 : vector<16x128xf32>
    %400 = arith.mulf %399, %386 : vector<16x128xf32>
    %cst_180 = arith.constant 0.000000e+00 : f32
    %401 = vector.broadcast %cst_180 : f32 to vector<16x128xf32>
    %402 = arith.subf %401, %380 : vector<16x128xf32>
    %403 = arith.mulf %402, %380 : vector<16x128xf32>
    %404 = math.exp %403 : vector<16x128xf32>
    %405 = arith.mulf %400, %404 : vector<16x128xf32>
    %cst_181 = arith.constant 1.000000e+00 : f32
    %406 = vector.broadcast %cst_181 : f32 to vector<16x128xf32>
    %407 = arith.subf %406, %405 : vector<16x128xf32>
    %408 = arith.mulf %379, %407 : vector<16x128xf32>
    %cst_182 = arith.constant 1.000000e+00 : f32
    %409 = vector.broadcast %cst_182 : f32 to vector<16x128xf32>
    %410 = arith.addf %409, %408 : vector<16x128xf32>
    %411 = arith.mulf %372, %410 : vector<16x128xf32>
    %c3 = arith.constant 3 : index
    %c0_183 = arith.constant 0 : index
    %c0_184 = arith.constant 0 : index
    %412 = vector.load %arg4[%c3, %c0_183, %c0_184] : memref<4x384x128xbf16, #tpu.memory_space<vmem>>, vector<1x384x128xbf16>
    %413 = vector.shape_cast %412 : vector<1x384x128xbf16> to vector<384x128xbf16>
    %c3_185 = arith.constant 3 : index
    %c0_186 = arith.constant 0 : index
    %c0_187 = arith.constant 0 : index
    %414 = vector.load %arg5[%c3_185, %c0_186, %c0_187] : memref<4x1x128xf32, #tpu.memory_space<vmem>>, vector<1x1x128xf32>
    %415 = vector.shape_cast %414 : vector<1x1x128xf32> to vector<1x128xf32>
    %cst_188 = arith.constant 0.000000e+00 : f32
    %416 = vector.broadcast %cst_188 : f32 to vector<8x128xf32>
    %417 = vector.extract_strided_slice %411 {offsets = [0, 0], sizes = [8, 128], strides = [1, 1]} : vector<16x128xf32> to vector<8x128xf32>
    %418 = tpu.concatenate %416, %417 in 0 : vector<8x128xf32>, vector<8x128xf32> -> vector<16x128xf32>
    %419 = vector.extract_strided_slice %411 {offsets = [8, 0], sizes = [8, 128], strides = [1, 1]} : vector<16x128xf32> to vector<8x128xf32>
    %cst_189 = arith.constant 0.000000e+00 : f32
    %420 = vector.broadcast %cst_189 : f32 to vector<8x128xf32>
    %421 = tpu.concatenate %419, %420 in 0 : vector<8x128xf32>, vector<8x128xf32> -> vector<16x128xf32>
    %422 = tpu.concatenate %418, %411, %421 in 1 : vector<16x128xf32>, vector<16x128xf32>, vector<16x128xf32> -> vector<16x384xf32>
    %423 = arith.truncf %422 : vector<16x384xf32> to vector<16x384xbf16>
    %cst_190 = arith.constant dense<0.000000e+00> : vector<16x128xf32>
    %424 = tpu.matmul %423, %413, %cst_190 {dimension_numbers = #tpu.dot_dimension_numbers<[1], [0], [0], [1], [0, 0, 1, 1], [], []>} : vector<16x384xbf16>, vector<384x128xbf16>, vector<16x128xf32> -> vector<16x128xf32>
    %425 = vector.broadcast %415 : vector<1x128xf32> to vector<16x128xf32>
    %426 = arith.addf %424, %425 : vector<16x128xf32>
    %cst_191 = arith.constant 5.000000e-01 : f32
    %427 = vector.broadcast %cst_191 : f32 to vector<16x128xf32>
    %428 = arith.mulf %427, %426 : vector<16x128xf32>
    %cst_192 = arith.constant 0.707106769 : f32
    %429 = vector.broadcast %cst_192 : f32 to vector<16x128xf32>
    %430 = arith.mulf %426, %429 : vector<16x128xf32>
    %cst_193 = arith.constant 0.000000e+00 : f32
    %431 = vector.broadcast %cst_193 : f32 to vector<16x128xf32>
    %432 = arith.cmpf oge, %430, %431 : vector<16x128xf32>
    %cst_194 = arith.constant 1.000000e+00 : f32
    %cst_195 = arith.constant -1.000000e+00 : f32
    %433 = vector.broadcast %cst_194 : f32 to vector<16x128xf32>
    %434 = vector.broadcast %cst_195 : f32 to vector<16x128xf32>
    %435 = arith.select %432, %433, %434 : vector<16x128xi1>, vector<16x128xf32>
    %436 = math.absf %430 : vector<16x128xf32>
    %cst_196 = arith.constant 0.327591091 : f32
    %437 = vector.broadcast %cst_196 : f32 to vector<16x128xf32>
    %438 = arith.mulf %437, %436 : vector<16x128xf32>
    %cst_197 = arith.constant 1.000000e+00 : f32
    %439 = vector.broadcast %cst_197 : f32 to vector<16x128xf32>
    %440 = arith.addf %439, %438 : vector<16x128xf32>
    %cst_198 = arith.constant 1.000000e+00 : f32
    %441 = vector.broadcast %cst_198 : f32 to vector<16x128xf32>
    %442 = arith.divf %441, %440 : vector<16x128xf32>
    %cst_199 = arith.constant 1.06140542 : f32
    %443 = vector.broadcast %cst_199 : f32 to vector<16x128xf32>
    %444 = arith.mulf %443, %442 : vector<16x128xf32>
    %cst_200 = arith.constant -1.45315206 : f32
    %445 = vector.broadcast %cst_200 : f32 to vector<16x128xf32>
    %446 = arith.addf %444, %445 : vector<16x128xf32>
    %447 = arith.mulf %446, %442 : vector<16x128xf32>
    %cst_201 = arith.constant 1.42141378 : f32
    %448 = vector.broadcast %cst_201 : f32 to vector<16x128xf32>
    %449 = arith.addf %447, %448 : vector<16x128xf32>
    %450 = arith.mulf %449, %442 : vector<16x128xf32>
    %cst_202 = arith.constant -0.284496725 : f32
    %451 = vector.broadcast %cst_202 : f32 to vector<16x128xf32>
    %452 = arith.addf %450, %451 : vector<16x128xf32>
    %453 = arith.mulf %452, %442 : vector<16x128xf32>
    %cst_203 = arith.constant 0.254829586 : f32
    %454 = vector.broadcast %cst_203 : f32 to vector<16x128xf32>
    %455 = arith.addf %453, %454 : vector<16x128xf32>
    %456 = arith.mulf %455, %442 : vector<16x128xf32>
    %cst_204 = arith.constant 0.000000e+00 : f32
    %457 = vector.broadcast %cst_204 : f32 to vector<16x128xf32>
    %458 = arith.subf %457, %436 : vector<16x128xf32>
    %459 = arith.mulf %458, %436 : vector<16x128xf32>
    %460 = math.exp %459 : vector<16x128xf32>
    %461 = arith.mulf %456, %460 : vector<16x128xf32>
    %cst_205 = arith.constant 1.000000e+00 : f32
    %462 = vector.broadcast %cst_205 : f32 to vector<16x128xf32>
    %463 = arith.subf %462, %461 : vector<16x128xf32>
    %464 = arith.mulf %435, %463 : vector<16x128xf32>
    %cst_206 = arith.constant 1.000000e+00 : f32
    %465 = vector.broadcast %cst_206 : f32 to vector<16x128xf32>
    %466 = arith.addf %465, %464 : vector<16x128xf32>
    %467 = arith.mulf %428, %466 : vector<16x128xf32>
    %c3_207 = arith.constant 3 : index
    %c0_208 = arith.constant 0 : index
    %c0_209 = arith.constant 0 : index
    %468 = vector.load %arg6[%c3_207, %c0_208, %c0_209] : memref<4x384x128xbf16, #tpu.memory_space<vmem>>, vector<1x384x128xbf16>
    %469 = vector.shape_cast %468 : vector<1x384x128xbf16> to vector<384x128xbf16>
    %c3_210 = arith.constant 3 : index
    %c0_211 = arith.constant 0 : index
    %c0_212 = arith.constant 0 : index
    %470 = vector.load %arg7[%c3_210, %c0_211, %c0_212] : memref<4x1x128xf32, #tpu.memory_space<vmem>>, vector<1x1x128xf32>
    %471 = vector.shape_cast %470 : vector<1x1x128xf32> to vector<1x128xf32>
    %cst_213 = arith.constant 0.000000e+00 : f32
    %472 = vector.broadcast %cst_213 : f32 to vector<8x128xf32>
    %473 = vector.extract_strided_slice %467 {offsets = [0, 0], sizes = [8, 128], strides = [1, 1]} : vector<16x128xf32> to vector<8x128xf32>
    %474 = tpu.concatenate %472, %473 in 0 : vector<8x128xf32>, vector<8x128xf32> -> vector<16x128xf32>
    %475 = vector.extract_strided_slice %467 {offsets = [8, 0], sizes = [8, 128], strides = [1, 1]} : vector<16x128xf32> to vector<8x128xf32>
    %cst_214 = arith.constant 0.000000e+00 : f32
    %476 = vector.broadcast %cst_214 : f32 to vector<8x128xf32>
    %477 = tpu.concatenate %475, %476 in 0 : vector<8x128xf32>, vector<8x128xf32> -> vector<16x128xf32>
    %478 = tpu.concatenate %474, %467, %477 in 1 : vector<16x128xf32>, vector<16x128xf32>, vector<16x128xf32> -> vector<16x384xf32>
    %479 = arith.truncf %478 : vector<16x384xf32> to vector<16x384xbf16>
    %cst_215 = arith.constant dense<0.000000e+00> : vector<16x128xf32>
    %480 = tpu.matmul %479, %469, %cst_215 {dimension_numbers = #tpu.dot_dimension_numbers<[1], [0], [0], [1], [0, 0, 1, 1], [], []>} : vector<16x384xbf16>, vector<384x128xbf16>, vector<16x128xf32> -> vector<16x128xf32>
    %481 = vector.broadcast %471 : vector<1x128xf32> to vector<16x128xf32>
    %482 = arith.addf %480, %481 : vector<16x128xf32>
    %483 = arith.addf %482, %370 : vector<16x128xf32>
    %c0_216 = arith.constant 0 : index
    %c0_217 = arith.constant 0 : index
    %c0_218 = arith.constant 0 : index
    %484 = vector.load %arg10[%c0_216, %c0_217, %c0_218] : memref<1x16x128xf32, #tpu.memory_space<vmem>>, vector<1x16x128xf32>
    %485 = vector.shape_cast %484 : vector<1x16x128xf32> to vector<16x128xf32>
    %486 = vector.shape_cast %483 : vector<16x128xf32> to vector<1x16x128xf32>
    tpu.vector_store %arg10[%c0_216, %c0_217, %c0_218], %486 {strides = array<i32>} : memref<1x16x128xf32, #tpu.memory_space<vmem>>, vector<1x16x128xf32>,
    return
  }
  func.func @transform_0(%arg0: i32) -> (i32, i32, i32) {
    %c0_i32 = arith.constant 0 : i32
    %c0_i32_0 = arith.constant 0 : i32
    %c0_i32_1 = arith.constant 0 : i32
    return %arg0, %c0_i32, %c0_i32_0 : i32, i32, i32
  }
  func.func @transform_1(%arg0: i32) -> (i32, i32) {
    %c0_i32 = arith.constant 0 : i32
    %c0_i32_0 = arith.constant 0 : i32
    %c0_i32_1 = arith.constant 0 : i32
    return %c0_i32, %c0_i32_0 : i32, i32
  }
  func.func @transform_2(%arg0: i32) -> (i32, i32) {
    %c0_i32 = arith.constant 0 : i32
    %c0_i32_0 = arith.constant 0 : i32
    %c0_i32_1 = arith.constant 0 : i32
    return %c0_i32, %c0_i32_0 : i32, i32
  }
  func.func @transform_3(%arg0: i32) -> (i32, i32, i32) {
    %c0_i32 = arith.constant 0 : i32
    %c0_i32_0 = arith.constant 0 : i32
    %c0_i32_1 = arith.constant 0 : i32
    %c0_i32_2 = arith.constant 0 : i32
    return %c0_i32, %c0_i32_0, %c0_i32_1 : i32, i32, i32
  }
  func.func @transform_4(%arg0: i32) -> (i32, i32, i32) {
    %c0_i32 = arith.constant 0 : i32
    %c0_i32_0 = arith.constant 0 : i32
    %c0_i32_1 = arith.constant 0 : i32
    %c0_i32_2 = arith.constant 0 : i32
    return %c0_i32, %c0_i32_0, %c0_i32_1 : i32, i32, i32
  }
  func.func @transform_5(%arg0: i32) -> (i32, i32, i32) {
    %c0_i32 = arith.constant 0 : i32
    %c0_i32_0 = arith.constant 0 : i32
    %c0_i32_1 = arith.constant 0 : i32
    %c0_i32_2 = arith.constant 0 : i32
    return %c0_i32, %c0_i32_0, %c0_i32_1 : i32, i32, i32
  }
  func.func @transform_6(%arg0: i32) -> (i32, i32, i32) {
    %c0_i32 = arith.constant 0 : i32
    %c0_i32_0 = arith.constant 0 : i32
    %c0_i32_1 = arith.constant 0 : i32
    %c0_i32_2 = arith.constant 0 : i32
    return %c0_i32, %c0_i32_0, %c0_i32_1 : i32, i32, i32
  }
  func.func @transform_7(%arg0: i32) -> (i32, i32, i32) {
    %c0_i32 = arith.constant 0 : i32
    %c0_i32_0 = arith.constant 0 : i32
    %c0_i32_1 = arith.constant 0 : i32
    %c0_i32_2 = arith.constant 0 : i32
    return %c0_i32, %c0_i32_0, %c0_i32_1 : i32, i32, i32
  }
  func.func @transform_8(%arg0: i32) -> (i32, i32, i32) {
    %c0_i32 = arith.constant 0 : i32
    %c0_i32_0 = arith.constant 0 : i32
    %c0_i32_1 = arith.constant 0 : i32
    %c0_i32_2 = arith.constant 0 : i32
    return %c0_i32, %c0_i32_0, %c0_i32_1 : i32, i32, i32
  }
  func.func @transform_9(%arg0: i32) -> (i32, i32, i32) {
    %c0_i32 = arith.constant 0 : i32
    %c0_i32_0 = arith.constant 0 : i32
    %c0_i32_1 = arith.constant 0 : i32
    return %arg0, %c0_i32, %c0_i32_0 : i32, i32, i32
  }
}

</mosaic_0001>

<llo_original>
// kernel: tpu_custom_call.1
$region0: #{tpu_custom_call.1}
  #allocation0 [shape = 'u32[]', space=smem, size = 0x4, offset = 0x4, fixed_abs, tag = 'smem constant byte address 0x4 - core index']
  #allocation1 [shape = 'u32[144,128]{1,0:T(1,128)}', space=vmem, size = 0x12000, scoped, tag = 'internal scratch']
  %s0 = inlined_call_operand.hbm [shape: f32[2,16,128], index: 0, kind: input, shape index: {}]
  %s1 = inlined_call_operand.hbm [shape: bf16[128,128], index: 1, kind: input, shape index: {}]
  %s2 = inlined_call_operand.vmem [shape: f32[1,128], index: 2, kind: input, shape index: {}]
  %s3 = inlined_call_operand.hbm [shape: bf16[4,384,128], index: 3, kind: input, shape index: {}]
  %s4 = inlined_call_operand.vmem [shape: f32[4,1,128], index: 4, kind: input, shape index: {}]
  %s5 = inlined_call_operand.hbm [shape: bf16[4,384,128], index: 5, kind: input, shape index: {}]
  %s6 = inlined_call_operand.vmem [shape: f32[4,1,128], index: 6, kind: input, shape index: {}]
  %s7 = inlined_call_operand.hbm [shape: bf16[1,128,128], index: 7, kind: input, shape index: {}]
  %s8 = inlined_call_operand.vmem [shape: f32[1,1,128], index: 8, kind: input, shape index: {}]
  %s9 = inlined_call_operand.hbm [shape: f32[2,16,128], index: 9, kind: output, shape index: {}]
  %s10 = sld [smem:[#allocation0]]
  $region89: #{tpu_custom_call.1} parent=0
    _
  %s12 = ssub.s32 1, %s10
  %s13 = scalar_select 0, %s12, %s10
  $region1: #{tpu_custom_call.1} parent=0
    #allocation2 [shape = 'u8[16384]{0}', space=vmem, size = 0x4000, scoped, tag = 'input window, operand 0']
    #allocation3 [shape = 's32[2]{0}', space=sflag, size = 0x8, scoped, tag = 'scoped memory for tpu_custom_call.1']
    #allocation4 [shape = 's32[2]{0}', space=sflag, size = 0x8, scoped, tag = 'scoped memory for tpu_custom_call.1']
    #allocation5 [shape = 'u8[32768]{0}', space=vmem, size = 0x8000, scoped, tag = 'input window, operand 1, single buffered']
    #allocation6 [shape = 's32[1]{0}', space=sflag, size = 0x4, scoped, tag = 'scoped memory for tpu_custom_call.1']
    #allocation7 [shape = 'u8[393216]{0}', space=vmem, size = 0x60000, scoped, tag = 'input window, operand 3, single buffered']
    #allocation8 [shape = 'u8[393216]{0}', space=vmem, size = 0x60000, scoped, tag = 'input window, operand 5, single buffered']
    #allocation9 [shape = 's32[1]{0}', space=sflag, size = 0x4, scoped, tag = 'scoped memory for tpu_custom_call.1']
    #allocation10 [shape = 'u8[32768]{0}', space=vmem, size = 0x8000, scoped, tag = 'input window, operand 7, single buffered']
    #allocation11 [shape = 'u8[16384]{0}', space=vmem, size = 0x4000, scoped, tag = 'output window, operand 0']
    %14 = vsyncpa [#allocation3], 0
    %s15 = scalar_lea.sflag [#allocation3], 1
    %16 = vsyncpa %s15, 0
    %17 = vsyncpa [#allocation6], 0
    %18 = vsyncpa [#allocation9], 0
    %19 = vsyncpa [#allocation4], 0
    %s20 = scalar_lea.sflag [#allocation4], 1
    %21 = vsyncpa %s20, 0
    loop: start=0, step=1, limit=4
    $region2: #{tpu_custom_call.1} parent=1 // loop_pre_header
      _
    $region3: #{tpu_custom_call.1} parent=1 // loop_header
      %s23 = sphi 0, %s27
      %p24 = scmp.ge.s32.totalorder %s23, 4
      %s33 = sphi 0, %s35
      %s36 = sphi 0, %s33
      %s37 = sphi 0, %s36
      %s53 = sphi 0, %s37
      %s57 = sphi 0, %s57
      %s59 = sphi 0, %s57
      %s60 = sphi 0, %s59
      %s74 = sphi 0, %s60
      %s78 = sphi 0, %s78
      %s80 = sphi 0, %s78
      %s81 = sphi 0, %s80
      %s95 = sphi 0, %s81
      %s99 = sphi 0, %s99
      %s101 = sphi 0, %s99
      %s102 = sphi 0, %s101
      %s116 = sphi 0, %s102
      %s120 = sphi 0, %s120
      %s122 = sphi 0, %s120
      %s123 = sphi 0, %s122
      %s137 = sphi 0, %s123
      %s141 = sphi 0, %s141
      %s143 = sphi 0, %s141
      %s144 = sphi 0, %s143
      %s158 = sphi 0, %s144
      %s162 = sphi 0, %s162
      %s164 = sphi 0, %s162
      %s165 = sphi 0, %s164
      %s179 = sphi 0, %s165
      %s183 = sphi 0, %s183
      %s185 = sphi 0, %s183
      %s186 = sphi 0, %s185
      %s200 = sphi 0, %s186
      %s204 = sphi 0, %s204
      %s206 = sphi 0, %s204
      %s207 = sphi 0, %s206
      %s221 = sphi 0, %s207
      %s227 = sphi 0, %s229
      %s230 = sphi 0, %s227
      %s231 = sphi 0, %s230
      %s247 = sphi 0, %s231
    $region4: #{tpu_custom_call.1} parent=1 // loop_header_branch
      %26 = sbr.rel (%p24) target = $region8
    $region5: #{tpu_custom_call.1} parent=1 // loop_body
      %s28 = ssub.s32 %s23, 1
      %s29 = ssub.s32 %s23, 2
      %s30 = sadd.s32 %s23, 1
      %s31 = ssub.s32 %s23, %s30
      %p32 = scmp.eq.s32.totalorder %s31, 0
      %s34 = sadd.s32 %s33, 1
      %s35 = scalar_select %p32, %s33, %s34
      %p38 = pneg %p32
      %p39 = scmp.eq.s32.totalorder %s23, 1
      %p40 = por %p38, %p39
      %p41 = scmp.ne.s32.totalorder %s33, %s36
      %p42 = scmp.eq.s32.totalorder %s23, 0
      %p43 = por %p41, %p42
      %p44 = scmp.ne.s32.totalorder %s33, %s36
      %p45 = scmp.eq.s32.totalorder %s28, 1
      %p46 = por %p44, %p45
      %p47 = scmp.ne.s32.totalorder %s36, %s37
      %p48 = scmp.eq.s32.totalorder %s28, 0
      %p49 = por %p47, %p48
      %p50 = scmp.ne.s32.totalorder %s36, %s37
      %p51 = scmp.eq.s32.totalorder %s29, 1
      %p52 = por %p50, %p51
      %p54 = scmp.ne.s32.totalorder %s37, %s53
      %p55 = scmp.eq.s32.totalorder %s29, 0
      %p56 = por %p54, %p55
      %s58 = sadd.s32 %s57, 1
      %p61 = scmp.eq.s32.totalorder %s23, 1
      %p62 = scmp.ne.s32.totalorder %s57, %s59
      %p63 = scmp.eq.s32.totalorder %s23, 0
      %p64 = por %p62, %p63
      %p65 = scmp.ne.s32.totalorder %s57, %s59
      %p66 = scmp.eq.s32.totalorder %s28, 1
      %p67 = por %p65, %p66
      %p68 = scmp.ne.s32.totalorder %s59, %s60
      %p69 = scmp.eq.s32.totalorder %s28, 0
      %p70 = por %p68, %p69
      %p71 = scmp.ne.s32.totalorder %s59, %s60
      %p72 = scmp.eq.s32.totalorder %s29, 1
      %p73 = por %p71, %p72
      %p75 = scmp.ne.s32.totalorder %s60, %s74
      %p76 = scmp.eq.s32.totalorder %s29, 0
      %p77 = por %p75, %p76
      %s79 = sadd.s32 %s78, 1
      %p82 = scmp.eq.s32.totalorder %s23, 1
      %p83 = scmp.ne.s32.totalorder %s78, %s80
      %p84 = scmp.eq.s32.totalorder %s23, 0
      %p85 = por %p83, %p84
      %p86 = scmp.ne.s32.totalorder %s78, %s80
      %p87 = scmp.eq.s32.totalorder %s28, 1
      %p88 = por %p86, %p87
      %p89 = scmp.ne.s32.totalorder %s80, %s81
      %p90 = scmp.eq.s32.totalorder %s28, 0
      %p91 = por %p89, %p90
      %p92 = scmp.ne.s32.totalorder %s80, %s81
      %p93 = scmp.eq.s32.totalorder %s29, 1
      %p94 = por %p92, %p93
      %p96 = scmp.ne.s32.totalorder %s81, %s95
      %p97 = scmp.eq.s32.totalorder %s29, 0
      %p98 = por %p96, %p97
      %s100 = sadd.s32 %s99, 1
      %p103 = scmp.eq.s32.totalorder %s23, 1
      %p104 = scmp.ne.s32.totalorder %s99, %s101
      %p105 = scmp.eq.s32.totalorder %s23, 0
      %p106 = por %p104, %p105
      %p107 = scmp.ne.s32.totalorder %s99, %s101
      %p108 = scmp.eq.s32.totalorder %s28, 1
      %p109 = por %p107, %p108
      %p110 = scmp.ne.s32.totalorder %s101, %s102
      %p111 = scmp.eq.s32.totalorder %s28, 0
      %p112 = por %p110, %p111
      %p113 = scmp.ne.s32.totalorder %s101, %s102
      %p114 = scmp.eq.s32.totalorder %s29, 1
      %p115 = por %p113, %p114
      %p117 = scmp.ne.s32.totalorder %s102, %s116
      %p118 = scmp.eq.s32.totalorder %s29, 0
      %p119 = por %p117, %p118
      %s121 = sadd.s32 %s120, 1
      %p124 = scmp.eq.s32.totalorder %s23, 1
      %p125 = scmp.ne.s32.totalorder %s120, %s122
      %p126 = scmp.eq.s32.totalorder %s23, 0
      %p127 = por %p125, %p126
      %p128 = scmp.ne.s32.totalorder %s120, %s122
      %p129 = scmp.eq.s32.totalorder %s28, 1
      %p130 = por %p128, %p129
      %p131 = scmp.ne.s32.totalorder %s122, %s123
      %p132 = scmp.eq.s32.totalorder %s28, 0
      %p133 = por %p131, %p132
      %p134 = scmp.ne.s32.totalorder %s122, %s123
      %p135 = scmp.eq.s32.totalorder %s29, 1
      %p136 = por %p134, %p135
      %p138 = scmp.ne.s32.totalorder %s123, %s137
      %p139 = scmp.eq.s32.totalorder %s29, 0
      %p140 = por %p138, %p139
      %s142 = sadd.s32 %s141, 1
      %p145 = scmp.eq.s32.totalorder %s23, 1
      %p146 = scmp.ne.s32.totalorder %s141, %s143
      %p147 = scmp.eq.s32.totalorder %s23, 0
      %p148 = por %p146, %p147
      %p149 = scmp.ne.s32.totalorder %s141, %s143
      %p150 = scmp.eq.s32.totalorder %s28, 1
      %p151 = por %p149, %p150
      %p152 = scmp.ne.s32.totalorder %s143, %s144
      %p153 = scmp.eq.s32.totalorder %s28, 0
      %p154 = por %p152, %p153
      %p155 = scmp.ne.s32.totalorder %s143, %s144
      %p156 = scmp.eq.s32.totalorder %s29, 1
      %p157 = por %p155, %p156
      %p159 = scmp.ne.s32.totalorder %s144, %s158
      %p160 = scmp.eq.s32.totalorder %s29, 0
      %p161 = por %p159, %p160
      %s163 = sadd.s32 %s162, 1
      %p166 = scmp.eq.s32.totalorder %s23, 1
      %p167 = scmp.ne.s32.totalorder %s162, %s164
      %p168 = scmp.eq.s32.totalorder %s23, 0
      %p169 = por %p167, %p168
      %p170 = scmp.ne.s32.totalorder %s162, %s164
      %p171 = scmp.eq.s32.totalorder %s28, 1
      %p172 = por %p170, %p171
      %p173 = scmp.ne.s32.totalorder %s164, %s165
      %p174 = scmp.eq.s32.totalorder %s28, 0
      %p175 = por %p173, %p174
      %p176 = scmp.ne.s32.totalorder %s164, %s165
      %p177 = scmp.eq.s32.totalorder %s29, 1
      %p178 = por %p176, %p177
      %p180 = scmp.ne.s32.totalorder %s165, %s179
      %p181 = scmp.eq.s32.totalorder %s29, 0
      %p182 = por %p180, %p181
      %s184 = sadd.s32 %s183, 1
      %p187 = scmp.eq.s32.totalorder %s23, 1
      %p188 = scmp.ne.s32.totalorder %s183, %s185
      %p189 = scmp.eq.s32.totalorder %s23, 0
      %p190 = por %p188, %p189
      %p191 = scmp.ne.s32.totalorder %s183, %s185
      %p192 = scmp.eq.s32.totalorder %s28, 1
      %p193 = por %p191, %p192
      %p194 = scmp.ne.s32.totalorder %s185, %s186
      %p195 = scmp.eq.s32.totalorder %s28, 0
      %p196 = por %p194, %p195
      %p197 = scmp.ne.s32.totalorder %s185, %s186
      %p198 = scmp.eq.s32.totalorder %s29, 1
      %p199 = por %p197, %p198
      %p201 = scmp.ne.s32.totalorder %s186, %s200
      %p202 = scmp.eq.s32.totalorder %s29, 0
      %p203 = por %p201, %p202
      %s205 = sadd.s32 %s204, 1
      %p208 = scmp.eq.s32.totalorder %s23, 1
      %p209 = scmp.ne.s32.totalorder %s204, %s206
      %p210 = scmp.eq.s32.totalorder %s23, 0
      %p211 = por %p209, %p210
      %p212 = scmp.ne.s32.totalorder %s204, %s206
      %p213 = scmp.eq.s32.totalorder %s28, 1
      %p214 = por %p212, %p213
      %p215 = scmp.ne.s32.totalorder %s206, %s207
      %p216 = scmp.eq.s32.totalorder %s28, 0
      %p217 = por %p215, %p216
      %p218 = scmp.ne.s32.totalorder %s206, %s207
      %p219 = scmp.eq.s32.totalorder %s29, 1
      %p220 = por %p218, %p219
      %p222 = scmp.ne.s32.totalorder %s207, %s221
      %p223 = scmp.eq.s32.totalorder %s29, 0
      %p224 = por %p222, %p223
      %s225 = ssub.s32 %s23, %s30
      %p226 = scmp.eq.s32.totalorder %s225, 0
      %s228 = sadd.s32 %s227, 1
      %s229 = scalar_select %p226, %s227, %s228
      %p232 = pneg %p226
      %p233 = scmp.eq.s32.totalorder %s23, 1
      %p234 = por %p232, %p233
      %p235 = scmp.ne.s32.totalorder %s227, %s230
      %p236 = scmp.eq.s32.totalorder %s23, 0
      %p237 = por %p235, %p236
      %p238 = scmp.ne.s32.totalorder %s227, %s230
      %p239 = scmp.eq.s32.totalorder %s28, 1
      %p240 = por %p238, %p239
      %p241 = scmp.ne.s32.totalorder %s230, %s231
      %p242 = scmp.eq.s32.totalorder %s28, 0
      %p243 = por %p241, %p242
      %p244 = scmp.ne.s32.totalorder %s230, %s231
      %p245 = scmp.eq.s32.totalorder %s29, 1
      %p246 = por %p244, %p245
      %p248 = scmp.ne.s32.totalorder %s231, %s247
      %p249 = scmp.eq.s32.totalorder %s29, 0
      %p250 = por %p248, %p249
      %p251 = scmp.le.s32.totalorder 1, %s23
      %p252 = scmp.lt.s32.totalorder %s23, 3
      %p253 = pnand %p251, %p252
      %p254 = pneg %p253
      // Predicated region
      $region9: #{tpu_custom_call.1} parent=5 // pred_check
        _
      $region10: #{tpu_custom_call.1} parent=5 // pred_check_branch
        %256 = sbr.rel (%p253) target = $region12
      $region11: #{tpu_custom_call.1} parent=5 // pred_region
        %s257 = ssub.s32 %s23, 1
        // Predicated region
        $region13: #{tpu_custom_call.1} parent=11 // pred_check
          %p258 = pneg %p70
        $region14: #{tpu_custom_call.1} parent=11 // pred_check_branch
          %260 = sbr.rel (%p258) target = $region16
        $region15: #{tpu_custom_call.1} parent=11 // pred_region
          %s262 = ssub.s32 1024, 1024
          %263 = vsyncadd [#allocation6], %s262
          %s264 = sshll.u32 [#allocation5], 4
          %s265 = int_to_ptr.vmem [resolvable:$true] %s264
          %270 = dma.hbm_to_vmem [thread:$0]  %s1, 1024, %s265, [#allocation6], 64, 64, 4
        $region16: #{tpu_custom_call.1} parent=11 // pred_fallthru
          _
        // Predicated region
        $region17: #{tpu_custom_call.1} parent=11 // pred_check
          %p271 = pneg %p91
        $region18: #{tpu_custom_call.1} parent=11 // pred_check_branch
          %273 = sbr.rel (%p271) target = $region20
        $region19: #{tpu_custom_call.1} parent=11 // pred_region
          _
        $region20: #{tpu_custom_call.1} parent=11 // pred_fallthru
          _
        // Predicated region
        $region21: #{tpu_custom_call.1} parent=11 // pred_check
          %p274 = pneg %p112
        $region22: #{tpu_custom_call.1} parent=11 // pred_check_branch
          %276 = sbr.rel (%p274) target = $region24
        $region23: #{tpu_custom_call.1} parent=11 // pred_region
          %s278 = ssub.s32 12288, 12288
          %279 = vsyncadd [#allocation6], %s278
          %s280 = sshll.u32 [#allocation7], 4
          %s281 = int_to_ptr.vmem [resolvable:$true] %s280
          %286 = dma.hbm_to_vmem [thread:$0]  %s3, 12288, %s281, [#allocation6], 64, 64, 4
        $region24: #{tpu_custom_call.1} parent=11 // pred_fallthru
          _
        // Predicated region
        $region25: #{tpu_custom_call.1} parent=11 // pred_check
          %p287 = pneg %p133
        $region26: #{tpu_custom_call.1} parent=11 // pred_check_branch
          %289 = sbr.rel (%p287) target = $region28
        $region27: #{tpu_custom_call.1} parent=11 // pred_region
          _
        $region28: #{tpu_custom_call.1} parent=11 // pred_fallthru
          _
        // Predicated region
        $region29: #{tpu_custom_call.1} parent=11 // pred_check
          %p290 = pneg %p154
        $region30: #{tpu_custom_call.1} parent=11 // pred_check_branch
          %292 = sbr.rel (%p290) target = $region32
        $region31: #{tpu_custom_call.1} parent=11 // pred_region
          %s294 = ssub.s32 12288, 12288
          %295 = vsyncadd [#allocation9], %s294
          %s296 = sshll.u32 [#allocation8], 4
          %s297 = int_to_ptr.vmem [resolvable:$true] %s296
          %302 = dma.hbm_to_vmem [thread:$0]  %s5, 12288, %s297, [#allocation9], 64, 64, 4
        $region32: #{tpu_custom_call.1} parent=11 // pred_fallthru
          _
        // Predicated region
        $region33: #{tpu_custom_call.1} parent=11 // pred_check
          %p303 = pneg %p175
        $region34: #{tpu_custom_call.1} parent=11 // pred_check_branch
          %305 = sbr.rel (%p303) target = $region36
        $region35: #{tpu_custom_call.1} parent=11 // pred_region
          _
        $region36: #{tpu_custom_call.1} parent=11 // pred_fallthru
          _
        // Predicated region
        $region37: #{tpu_custom_call.1} parent=11 // pred_check
          %p306 = pneg %p196
        $region38: #{tpu_custom_call.1} parent=11 // pred_check_branch
          %308 = sbr.rel (%p306) target = $region40
        $region39: #{tpu_custom_call.1} parent=11 // pred_region
          %s310 = ssub.s32 1024, 1024
          %311 = vsyncadd [#allocation9], %s310
          %s312 = sshll.u32 [#allocation10], 4
          %s313 = int_to_ptr.vmem [resolvable:$true] %s312
          %318 = dma.hbm_to_vmem [thread:$0]  %s7, 1024, %s313, [#allocation9], 64, 64, 4
        $region40: #{tpu_custom_call.1} parent=11 // pred_fallthru
          _
        // Predicated region
        $region41: #{tpu_custom_call.1} parent=11 // pred_check
          %p319 = pneg %p217
        $region42: #{tpu_custom_call.1} parent=11 // pred_check_branch
          %321 = sbr.rel (%p319) target = $region44
        $region43: #{tpu_custom_call.1} parent=11 // pred_region
          _
        $region44: #{tpu_custom_call.1} parent=11 // pred_fallthru
          _
      $region12: #{tpu_custom_call.1} parent=5 // pred_fallthru
        _
      %p322 = scmp.lt.s32.totalorder %s23, 2
      // Predicated region
      $region45: #{tpu_custom_call.1} parent=5 // pred_check
        %p323 = pneg %p322
      $region46: #{tpu_custom_call.1} parent=5 // pred_check_branch
        %325 = sbr.rel (%p323) target = $region48
      $region47: #{tpu_custom_call.1} parent=5 // pred_region
        // Predicated region
        $region49: #{tpu_custom_call.1} parent=47 // pred_check
          %p326 = pneg %p43
        $region50: #{tpu_custom_call.1} parent=47 // pred_check_branch
          %328 = sbr.rel (%p326) target = $region52
        $region51: #{tpu_custom_call.1} parent=47 // pred_region
          %s329 = sand.u32 %s33, 1
          %s330 = scalar_lea.sflag [#allocation3], %s329
          %s331 = sand.u32 %s33, 1
          %s332 = smul.addr %s331, 16
          %s333 = scalar_lea.vmem [#allocation2], %s332
          %s335 = ssub.s32 256, 256
          %336 = vsyncadd %s330, %s335
          %s337 = smul.addr %s23, 2
          %s338 = smul.addr %s337, 128
          %s339 = scalar_lea.hbm %s0, %s338
          %s340 = sshll.u32 %s333, 4
          %s341 = int_to_ptr.vmem [resolvable:$true] %s340
          %346 = dma.hbm_to_vmem [thread:$0]  %s339, 256, %s341, %s330, 128, 128, 8
        $region52: #{tpu_custom_call.1} parent=47 // pred_fallthru
          _
      $region48: #{tpu_custom_call.1} parent=5 // pred_fallthru
        _
      %p347 = scmp.le.s32.totalorder 1, %s23
      %p348 = scmp.lt.s32.totalorder %s23, 3
      %p349 = pnand %p347, %p348
      %p350 = pneg %p349
      // Predicated region
      $region53: #{tpu_custom_call.1} parent=5 // pred_check
        _
      $region54: #{tpu_custom_call.1} parent=5 // pred_check_branch
        %352 = sbr.rel (%p349) target = $region56
      $region55: #{tpu_custom_call.1} parent=5 // pred_region
        %s353 = ssub.s32 %s23, 1
        %s354 = sand.u32 %s36, 1
        %s355 = scalar_lea.sflag [#allocation3], %s354
        %s356 = sand.u32 %s36, 1
        %s357 = smul.addr %s356, 16
        %s358 = scalar_lea.vmem [#allocation2], %s357
        // Predicated region
        $region57: #{tpu_custom_call.1} parent=55 // pred_check
          %p359 = pneg %p49
        $region58: #{tpu_custom_call.1} parent=55 // pred_check_branch
          %361 = sbr.rel (%p359) target = $region60
        $region59: #{tpu_custom_call.1} parent=55 // pred_region
          %362 = dma.done %s355, 256
        $region60: #{tpu_custom_call.1} parent=55 // pred_fallthru
          _
        // Predicated region
        $region61: #{tpu_custom_call.1} parent=55 // pred_check
          %p363 = pneg %p70
        $region62: #{tpu_custom_call.1} parent=55 // pred_check_branch
          %365 = sbr.rel (%p363) target = $region64
        $region63: #{tpu_custom_call.1} parent=55 // pred_region
          %366 = dma.done [#allocation6], 1024
        $region64: #{tpu_custom_call.1} parent=55 // pred_fallthru
          _
        // Predicated region
        $region65: #{tpu_custom_call.1} parent=55 // pred_check
          %p367 = pneg %p112
        $region66: #{tpu_custom_call.1} parent=55 // pred_check_branch
          %369 = sbr.rel (%p367) target = $region68
        $region67: #{tpu_custom_call.1} parent=55 // pred_region
          %370 = dma.done [#allocation6], 12288
        $region68: #{tpu_custom_call.1} parent=55 // pred_fallthru
          _
        // Predicated region
        $region69: #{tpu_custom_call.1} parent=55 // pred_check
          %p371 = pneg %p154
        $region70: #{tpu_custom_call.1} parent=55 // pred_check_branch
          %373 = sbr.rel (%p371) target = $region72
        $region71: #{tpu_custom_call.1} parent=55 // pred_region
          %374 = dma.done [#allocation9], 12288
        $region72: #{tpu_custom_call.1} parent=55 // pred_fallthru
          _
        // Predicated region
        $region73: #{tpu_custom_call.1} parent=55 // pred_check
          %p375 = pneg %p196
        $region74: #{tpu_custom_call.1} parent=55 // pred_check_branch
          %377 = sbr.rel (%p375) target = $region76
        $region75: #{tpu_custom_call.1} parent=55 // pred_region
          %378 = dma.done [#allocation9], 1024
        $region76: #{tpu_custom_call.1} parent=55 // pred_fallthru
          _
        %s379 = sand.u32 %s36, 1
        %s380 = scalar_lea.sflag [#allocation3], %s379
        %s381 = sand.u32 %s36, 1
        %s382 = smul.addr %s381, 16
        %s383 = scalar_lea.vmem [#allocation2], %s382
        %p384 = pneg %p49
        %p385 = pneg %p46
        %p386 = pneg %p70
        %p387 = pneg %p67
        %p388 = pneg %p91
        %p389 = pneg %p88
        %p390 = pneg %p112
        %p391 = pneg %p109
        %p392 = pneg %p133
        %p393 = pneg %p130
        %p394 = pneg %p154
        %p395 = pneg %p151
        %p396 = pneg %p175
        %p397 = pneg %p172
        %p398 = pneg %p196
        %p399 = pneg %p193
        %p400 = pneg %p217
        %p401 = pneg %p214
        %p402 = pneg %p243
        %p403 = pneg %p240
        %s404 = sand.u32 %s230, 1
        %s405 = scalar_lea.sflag [#allocation4], %s404
        %s406 = sand.u32 %s230, 1
        %s407 = smul.addr %s406, 16
        %s408 = scalar_lea.vmem [#allocation11], %s407
        %v410 = vld [vmem:[%s358] sm:$0xff]
        %v411 = vld [vmem:[%s358 + $0x8] sm:$0xff]
        %vm412 = vcmp.ne.f32.partialorder %v410, %v410
        %vm413 = vcmp.ne.f32.partialorder %v411, %v411
        %v414 = vsel %vm412, 1.0, 0.0
        %v415 = vsel %vm413, 1.0, 0.0
        %416 = vmax.xlane.f32.xlu0 %v414
        %v417 = vpop.xlane.xlu0 %416
        %418 = vmax.xlane.f32.xlu0 %v415
        %v419 = vpop.xlane.xlu0 %418
        %vm420 = vcmp.lt.f32.partialorder %v417, 0.5
        %vm421 = vcmp.lt.f32.partialorder %v419, 0.5
        %v422 = vsel %vm420, 1, 0
        %v423 = vsel %vm421, 1, 0
        %vm424 = vcmp.eq.s32.totalorder %v422, 1
        %vm425 = vcmp.eq.s32.totalorder %v423, 1
        %v426 = vsel %vm424, %v410, 0.0
        %v427 = vsel %vm425, %v411, 0.0
        %v428 = vpack.c.bf16 %v427, %v426
        %v429 = vld [vmem:[#allocation5] sm:$0xf]
        %v430 = vld [vmem:[#allocation5 + $0x4] sm:$0xf]
        %v431 = vld [vmem:[#allocation5 + $0x8] sm:$0xf]
        %v432 = vld [vmem:[#allocation5 + $0xc] sm:$0xf]
        %v433 = vld [vmem:[#allocation5 + $0x10] sm:$0xf]
        %v434 = vld [vmem:[#allocation5 + $0x14] sm:$0xf]
        %v435 = vld [vmem:[#allocation5 + $0x18] sm:$0xf]
        %v436 = vld [vmem:[#allocation5 + $0x1c] sm:$0xf]
        %v437 = vld [vmem:[#allocation5 + $0x20] sm:$0xf]
        %v438 = vld [vmem:[#allocation5 + $0x24] sm:$0xf]
        %v439 = vld [vmem:[#allocation5 + $0x28] sm:$0xf]
        %v440 = vld [vmem:[#allocation5 + $0x2c] sm:$0xf]
        %v441 = vld [vmem:[#allocation5 + $0x30] sm:$0xf]
        %v442 = vld [vmem:[#allocation5 + $0x34] sm:$0xf]
        %v443 = vld [vmem:[#allocation5 + $0x38] sm:$0xf]
        %v444 = vld [vmem:[#allocation5 + $0x3c] sm:$0xf]
        %v445 = vld [vmem:[%s2] sm:$0x1]
        %v447 = vlaneseq
        %v448 = vshrl.u32 %v447, 7
        %v449 = vsub.s32 0, %v448
        %v450 = vrot.slane %v445, %v449
        %v468 = vunpack.c.l.b16 %v429
        %v469 = vunpack.c.l.b16 %v430
        %v470 = vunpack.c.l.b16 %v431
        %v471 = vunpack.c.l.b16 %v432
        %v472 = vunpack.c.l.b16 %v433
        %v473 = vunpack.c.l.b16 %v434
        %v474 = vunpack.c.l.b16 %v435
        %v475 = vunpack.c.l.b16 %v436
        %v476 = vunpack.c.l.b16 %v437
        %v477 = vunpack.c.l.b16 %v438
        %v478 = vunpack.c.l.b16 %v439
        %v479 = vunpack.c.l.b16 %v440
        %v480 = vunpack.c.l.b16 %v441
        %v481 = vunpack.c.l.b16 %v442
        %v482 = vunpack.c.l.b16 %v443
        %v483 = vunpack.c.l.b16 %v444
        %v484 = vpack.c.b16 %v469, %v468
        %v485 = vpack.c.b16 %v471, %v470
        %v486 = vpack.c.b16 %v473, %v472
        %v487 = vpack.c.b16 %v475, %v474
        %v488 = vpack.c.b16 %v477, %v476
        %v489 = vpack.c.b16 %v479, %v478
        %v490 = vpack.c.b16 %v481, %v480
        %v491 = vpack.c.b16 %v483, %v482
        %500 = vmatprep.subr.bf16.mxu0 0
        %501 = vmatpush1.bf16.msra.mxu0 %v484
        %502 = vmatprep.subr.bf16.mxu0 0
        %503 = vmatpush1.bf16.msra.mxu0 %v485
        %504 = vmatprep.subr.bf16.mxu0 0
        %505 = vmatpush1.bf16.msra.mxu0 %v486
        %506 = vmatprep.subr.bf16.mxu0 0
        %507 = vmatpush1.bf16.msra.mxu0 %v487
        %508 = vmatprep.subr.bf16.mxu0 0
        %509 = vmatpush1.bf16.msra.mxu0 %v488
        %510 = vmatprep.subr.bf16.mxu0 0
        %511 = vmatpush1.bf16.msra.mxu0 %v489
        %512 = vmatprep.subr.bf16.mxu0 0
        %513 = vmatpush1.bf16.msra.mxu0 %v490
        %514 = vmatprep.subr.bf16.mxu0 0
        %515 = vmatpush1.bf16.msra.mxu0 %v491
        %516 = vmatprep.subr.bf16.mxu0 0
        %517 = vmatpush1.bf16.msra.mxu0 0
        %518 = vmatprep.subr.bf16.mxu0 0
        %519 = vmatpush1.bf16.msra.mxu0 0
        %520 = vmatprep.subr.bf16.mxu0 0
        %521 = vmatpush1.bf16.msra.mxu0 0
        %522 = vmatprep.subr.bf16.mxu0 0
        %523 = vmatpush1.bf16.msra.mxu0 0
        %524 = vmatprep.subr.bf16.mxu0 0
        %525 = vmatpush1.bf16.msra.mxu0 0
        %526 = vmatprep.subr.bf16.mxu0 0
        %527 = vmatpush1.bf16.msra.mxu0 0
        %528 = vmatprep.subr.bf16.mxu0 0
        %529 = vmatpush1.bf16.msra.mxu0 0
        %530 = vmatprep.subr.bf16.mxu0 0
        %531 = vmatpush1.bf16.msra.mxu0 0
        %532 = vmatprep.mubr.bf16.mxu0 0
        %533 = vmatmul.mubr.bf16.gmra.mrb[0].mxu0 %v428
        %v534 = vpop.f32.mrb[0].mxu0
        %v535 = vadd.f32 %v450, %v534
        %v536 = vpop.f32.mrb[0].mxu0
        %v537 = vpop.f32.mrb[0].mxu0
        %v538 = vadd.f32 %v450, %v537
        %v539 = vpop.f32.mrb[0].mxu0
        %540 = vdwg.mxu0
        %v541 = vsel %vm424, %v535, 0.0
        %v542 = vsel %vm425, %v538, 0.0
        %v543 = vmul.f32 %v541, 0.5
        %v544 = vmul.f32 %v542, 0.5
        %v545 = vmul.f32 %v541, 0.70710677
        %v546 = vmul.f32 %v542, 0.70710677
        %vm547 = vcmp.ge.f32.partialorder %v545, 0.0
        %vm548 = vcmp.ge.f32.partialorder %v546, 0.0
        %v549 = vsel %vm547, 1.0, -1.0
        %v550 = vsel %vm548, 1.0, -1.0
        %v551 = vand.u32 2147483647, %v545
        %v552 = vand.u32 2147483647, %v546
        %v553 = vmul.f32 %v551, 0.3275911
        %v554 = vmul.f32 %v552, 0.3275911
        %v555 = vadd.f32 %v553, 1.0
        %v556 = vadd.f32 %v554, 1.0
        %v557 = vrcp.pop %v555
        %v558 = vmul.f32 1.0, %v557
        %v559 = vrcp.pop %v556
        %v560 = vmul.f32 1.0, %v559
        %v561 = vmul.f32 %v558, 1.0614054
        %v562 = vmul.f32 %v560, 1.0614054
        %v563 = vadd.f32 %v561, -1.4531521
        %v564 = vadd.f32 %v562, -1.4531521
        %v565 = vmul.f32 %v563, %v558
        %v566 = vmul.f32 %v564, %v560
        %v567 = vadd.f32 %v565, 1.4214138
        %v568 = vadd.f32 %v566, 1.4214138
        %v569 = vmul.f32 %v567, %v558
        %v570 = vmul.f32 %v568, %v560
        %v571 = vadd.f32 %v569, -0.28449672
        %v572 = vadd.f32 %v570, -0.28449672
        %v573 = vmul.f32 %v571, %v558
        %v574 = vmul.f32 %v572, %v560
        %v575 = vadd.f32 %v573, 0.2548296
        %v576 = vadd.f32 %v574, 0.2548296
        %v577 = vmul.f32 %v575, %v558
        %v578 = vmul.f32 %v576, %v560
        %v579 = vsub.f32 0.0, %v551
        %v580 = vsub.f32 0.0, %v552
        %v581 = vmul.f32 %v579, %v551
        %v582 = vmul.f32 %v580, %v552
        %v583 = vmul.f32 %v581, 1.442695
        %v584 = vpow.pop %v583
        %v585 = vmul.f32 %v582, 1.442695
        %v586 = vpow.pop %v585
        %v587 = vmul.f32 %v577, %v584
        %v588 = vmul.f32 %v578, %v586
        %v589 = vsub.f32 1.0, %v587
        %v590 = vsub.f32 1.0, %v588
        %v591 = vmul.f32 %v549, %v589
        %v592 = vmul.f32 %v550, %v590
        %v593 = vadd.f32 %v591, 1.0
        %v594 = vadd.f32 %v592, 1.0
        %v595 = vmul.f32 %v543, %v593
        %v596 = vmul.f32 %v544, %v594
        %v597 = vld [vmem:[#allocation7] sm:$0xf]
        %v598 = vld [vmem:[#allocation7 + $0x4] sm:$0xf]
        %v599 = vld [vmem:[#allocation7 + $0x8] sm:$0xf]
        %v600 = vld [vmem:[#allocation7 + $0xc] sm:$0xf]
        %v601 = vld [vmem:[#allocation7 + $0x10] sm:$0xf]
        %v602 = vld [vmem:[#allocation7 + $0x14] sm:$0xf]
        %v603 = vld [vmem:[#allocation7 + $0x18] sm:$0xf]
        %v604 = vld [vmem:[#allocation7 + $0x1c] sm:$0xf]
        %v605 = vld [vmem:[#allocation7 + $0x20] sm:$0xf]
        %v606 = vld [vmem:[#allocation7 + $0x24] sm:$0xf]
        %v607 = vld [vmem:[#allocation7 + $0x28] sm:$0xf]
        %v608 = vld [vmem:[#allocation7 + $0x2c] sm:$0xf]
        %v609 = vld [vmem:[#allocation7 + $0x30] sm:$0xf]
        %v610 = vld [vmem:[#allocation7 + $0x34] sm:$0xf]
        %v611 = vld [vmem:[#allocation7 + $0x38] sm:$0xf]
        %v612 = vld [vmem:[#allocation7 + $0x3c] sm:$0xf]
        %v613 = vld [vmem:[#allocation7 + $0x40] sm:$0xf]
        %v614 = vld [vmem:[#allocation7 + $0x44] sm:$0xf]
        %v615 = vld [vmem:[#allocation7 + $0x48] sm:$0xf]
        %v616 = vld [vmem:[#allocation7 + $0x4c] sm:$0xf]
        %v617 = vld [vmem:[#allocation7 + $0x50] sm:$0xf]
        %v618 = vld [vmem:[#allocation7 + $0x54] sm:$0xf]
        %v619 = vld [vmem:[#allocation7 + $0x58] sm:$0xf]
        %v620 = vld [vmem:[#allocation7 + $0x5c] sm:$0xf]
        %v621 = vld [vmem:[#allocation7 + $0x60] sm:$0xf]
        %v622 = vld [vmem:[#allocation7 + $0x64] sm:$0xf]
        %v623 = vld [vmem:[#allocation7 + $0x68] sm:$0xf]
        %v624 = vld [vmem:[#allocation7 + $0x6c] sm:$0xf]
        %v625 = vld [vmem:[#allocation7 + $0x70] sm:$0xf]
        %v626 = vld [vmem:[#allocation7 + $0x74] sm:$0xf]
        %v627 = vld [vmem:[#allocation7 + $0x78] sm:$0xf]
        %v628 = vld [vmem:[#allocation7 + $0x7c] sm:$0xf]
        %v629 = vld [vmem:[#allocation7 + $0x80] sm:$0xf]
        %v630 = vld [vmem:[#allocation7 + $0x84] sm:$0xf]
        %v631 = vld [vmem:[#allocation7 + $0x88] sm:$0xf]
        %v632 = vld [vmem:[#allocation7 + $0x8c] sm:$0xf]
        %v633 = vld [vmem:[#allocation7 + $0x90] sm:$0xf]
        %v634 = vld [vmem:[#allocation7 + $0x94] sm:$0xf]
        %v635 = vld [vmem:[#allocation7 + $0x98] sm:$0xf]
        %v636 = vld [vmem:[#allocation7 + $0x9c] sm:$0xf]
        %v637 = vld [vmem:[#allocation7 + $0xa0] sm:$0xf]
        %v638 = vld [vmem:[#allocation7 + $0xa4] sm:$0xf]
        %v639 = vld [vmem:[#allocation7 + $0xa8] sm:$0xf]
        %v640 = vld [vmem:[#allocation7 + $0xac] sm:$0xf]
        %v641 = vld [vmem:[#allocation7 + $0xb0] sm:$0xf]
        %v642 = vld [vmem:[#allocation7 + $0xb4] sm:$0xf]
        %v643 = vld [vmem:[#allocation7 + $0xb8] sm:$0xf]
        %v644 = vld [vmem:[#allocation7 + $0xbc] sm:$0xf]
        %v645 = vld [vmem:[%s4] sm:$0x1]
        %vm648 = vcmask 1040384
        %v649 = vrot.slane %v595, 7
        %v650 = vrot.slane %v596, 7
        %v651 = vsel %vm648, %v649, %v650
        %v654 = vsel %vm648, 0.0, %v649
        %vm655 = vcmask 1046528
        %v656 = vrot.slane %v595, 1
        %v657 = vrot.slane %v596, 1
        %v658 = vsel %vm655, %v656, %v657
        %v661 = vsel %vm655, %v657, 0.0
        %v662 = vpack.c.bf16 %v651, %v654
        %v663 = vpack.c.bf16 %v596, %v595
        %v664 = vpack.c.bf16 %v661, %v658
        %v666 = vlaneseq
        %v667 = vshrl.u32 %v666, 7
        %v668 = vsub.s32 0, %v667
        %v669 = vrot.slane %v645, %v668
        %v719 = vunpack.c.l.b16 %v597
        %v720 = vunpack.c.l.b16 %v598
        %v721 = vunpack.c.l.b16 %v599
        %v722 = vunpack.c.l.b16 %v600
        %v723 = vunpack.c.l.b16 %v601
        %v724 = vunpack.c.l.b16 %v602
        %v725 = vunpack.c.l.b16 %v603
        %v726 = vunpack.c.l.b16 %v604
        %v727 = vunpack.c.l.b16 %v605
        %v728 = vunpack.c.l.b16 %v606
        %v729 = vunpack.c.l.b16 %v607
        %v730 = vunpack.c.l.b16 %v608
        %v731 = vunpack.c.l.b16 %v609
        %v732 = vunpack.c.l.b16 %v610
        %v733 = vunpack.c.l.b16 %v611
        %v734 = vunpack.c.l.b16 %v612
        %v735 = vunpack.c.l.b16 %v613
        %v736 = vunpack.c.l.b16 %v614
        %v737 = vunpack.c.l.b16 %v615
        %v738 = vunpack.c.l.b16 %v616
        %v739 = vunpack.c.l.b16 %v617
        %v740 = vunpack.c.l.b16 %v618
        %v741 = vunpack.c.l.b16 %v619
        %v742 = vunpack.c.l.b16 %v620
        %v743 = vunpack.c.l.b16 %v621
        %v744 = vunpack.c.l.b16 %v622
        %v745 = vunpack.c.l.b16 %v623
        %v746 = vunpack.c.l.b16 %v624
        %v747 = vunpack.c.l.b16 %v625
        %v748 = vunpack.c.l.b16 %v626
        %v749 = vunpack.c.l.b16 %v627
        %v750 = vunpack.c.l.b16 %v628
        %v751 = vunpack.c.l.b16 %v629
        %v752 = vunpack.c.l.b16 %v630
        %v753 = vunpack.c.l.b16 %v631
        %v754 = vunpack.c.l.b16 %v632
        %v755 = vunpack.c.l.b16 %v633
        %v756 = vunpack.c.l.b16 %v634
        %v757 = vunpack.c.l.b16 %v635
        %v758 = vunpack.c.l.b16 %v636
        %v759 = vunpack.c.l.b16 %v637
        %v760 = vunpack.c.l.b16 %v638
        %v761 = vunpack.c.l.b16 %v639
        %v762 = vunpack.c.l.b16 %v640
        %v763 = vunpack.c.l.b16 %v641
        %v764 = vunpack.c.l.b16 %v642
        %v765 = vunpack.c.l.b16 %v643
        %v766 = vunpack.c.l.b16 %v644
        %v767 = vpack.c.b16 %v720, %v719
        %v768 = vpack.c.b16 %v722, %v721
        %v769 = vpack.c.b16 %v724, %v723
        %v770 = vpack.c.b16 %v726, %v725
        %v771 = vpack.c.b16 %v728, %v727
        %v772 = vpack.c.b16 %v730, %v729
        %v773 = vpack.c.b16 %v732, %v731
        %v774 = vpack.c.b16 %v734, %v733
        %v775 = vpack.c.b16 %v736, %v735
        %v776 = vpack.c.b16 %v738, %v737
        %v777 = vpack.c.b16 %v740, %v739
        %v778 = vpack.c.b16 %v742, %v741
        %v779 = vpack.c.b16 %v744, %v743
        %v780 = vpack.c.b16 %v746, %v745
        %v781 = vpack.c.b16 %v748, %v747
        %v782 = vpack.c.b16 %v750, %v749
        %v783 = vpack.c.b16 %v752, %v751
        %v784 = vpack.c.b16 %v754, %v753
        %v785 = vpack.c.b16 %v756, %v755
        %v786 = vpack.c.b16 %v758, %v757
        %v787 = vpack.c.b16 %v760, %v759
        %v788 = vpack.c.b16 %v762, %v761
        %v789 = vpack.c.b16 %v764, %v763
        %v790 = vpack.c.b16 %v766, %v765
        %815 = vmatprep.subr.bf16.mxu0 0
        %816 = vmatpush1.bf16.msra.mxu0 %v767
        %817 = vmatprep.subr.bf16.mxu0 0
        %818 = vmatpush1.bf16.msra.mxu0 %v768
        %819 = vmatprep.subr.bf16.mxu0 0
        %820 = vmatpush1.bf16.msra.mxu0 %v769
        %821 = vmatprep.subr.bf16.mxu0 0
        %822 = vmatpush1.bf16.msra.mxu0 %v770
        %823 = vmatprep.subr.bf16.mxu0 0
        %824 = vmatpush1.bf16.msra.mxu0 %v771
        %825 = vmatprep.subr.bf16.mxu0 0
        %826 = vmatpush1.bf16.msra.mxu0 %v772
        %827 = vmatprep.subr.bf16.mxu0 0
        %828 = vmatpush1.bf16.msra.mxu0 %v773
        %829 = vmatprep.subr.bf16.mxu0 0
        %830 = vmatpush1.bf16.msra.mxu0 %v774
        %831 = vmatprep.subr.bf16.mxu0 0
        %832 = vmatpush1.bf16.msra.mxu0 %v775
        %833 = vmatprep.subr.bf16.mxu0 0
        %834 = vmatpush1.bf16.msra.mxu0 %v776
        %835 = vmatprep.subr.bf16.mxu0 0
        %836 = vmatpush1.bf16.msra.mxu0 %v777
        %837 = vmatprep.subr.bf16.mxu0 0
        %838 = vmatpush1.bf16.msra.mxu0 %v778
        %839 = vmatprep.subr.bf16.mxu0 0
        %840 = vmatpush1.bf16.msra.mxu0 %v779
        %841 = vmatprep.subr.bf16.mxu0 0
        %842 = vmatpush1.bf16.msra.mxu0 %v780
        %843 = vmatprep.subr.bf16.mxu0 0
        %844 = vmatpush1.bf16.msra.mxu0 %v781
        %845 = vmatprep.subr.bf16.mxu0 0
        %846 = vmatpush1.bf16.msra.mxu0 %v782
        %847 = vmatprep.mubr.bf16.mxu0 %v663
        %848 = vmatmul.mubr.bf16.gmra.mrb[0].mxu0 %v662
        %v849 = vpop.f32.mrb[0].mxu0
        %v850 = vadd.f32 %v669, %v849
        %v851 = vpop.f32.mrb[0].mxu0
        %v852 = vpop.f32.mrb[0].mxu0
        %v853 = vadd.f32 %v669, %v852
        %v854 = vpop.f32.mrb[0].mxu0
        %855 = vdwg.mxu0
        %856 = vmatprep.subr.bf16.mxu0 0
        %857 = vmatpush1.bf16.msra.mxu0 %v783
        %858 = vmatprep.subr.bf16.mxu0 0
        %859 = vmatpush1.bf16.msra.mxu0 %v784
        %860 = vmatprep.subr.bf16.mxu0 0
        %861 = vmatpush1.bf16.msra.mxu0 %v785
        %862 = vmatprep.subr.bf16.mxu0 0
        %863 = vmatpush1.bf16.msra.mxu0 %v786
        %864 = vmatprep.subr.bf16.mxu0 0
        %865 = vmatpush1.bf16.msra.mxu0 %v787
        %866 = vmatprep.subr.bf16.mxu0 0
        %867 = vmatpush1.bf16.msra.mxu0 %v788
        %868 = vmatprep.subr.bf16.mxu0 0
        %869 = vmatpush1.bf16.msra.mxu0 %v789
        %870 = vmatprep.subr.bf16.mxu0 0
        %871 = vmatpush1.bf16.msra.mxu0 %v790
        %872 = vmatprep.subr.bf16.mxu0 0
        %873 = vmatpush1.bf16.msra.mxu0 0
        %874 = vmatprep.subr.bf16.mxu0 0
        %875 = vmatpush1.bf16.msra.mxu0 0
        %876 = vmatprep.subr.bf16.mxu0 0
        %877 = vmatpush1.bf16.msra.mxu0 0
        %878 = vmatprep.subr.bf16.mxu0 0
        %879 = vmatpush1.bf16.msra.mxu0 0
        %880 = vmatprep.subr.bf16.mxu0 0
        %881 = vmatpush1.bf16.msra.mxu0 0
        %882 = vmatprep.subr.bf16.mxu0 0
        %883 = vmatpush1.bf16.msra.mxu0 0
        %884 = vmatprep.subr.bf16.mxu0 0
        %885 = vmatpush1.bf16.msra.mxu0 0
        %886 = vmatprep.subr.bf16.mxu0 0
        %887 = vmatpush1.bf16.msra.mxu0 0
        %888 = vmatprep.mubr.bf16.mxu0 0
        %889 = vmatmul.mubr.bf16.gmra.mrb[0].mxu0 %v664
        %v890 = vpop.f32.mrb[0].mxu0
        %v891 = vadd.f32 %v850, %v890
        %v892 = vpop.f32.mrb[0].mxu0
        %v893 = vpop.f32.mrb[0].mxu0
        %v894 = vadd.f32 %v853, %v893
        %v895 = vpop.f32.mrb[0].mxu0
        %896 = vdwg.mxu0
        %v897 = vmul.f32 %v891, 0.5
        %v898 = vmul.f32 %v894, 0.5
        %v899 = vmul.f32 %v891, 0.70710677
        %v900 = vmul.f32 %v894, 0.70710677
        %vm901 = vcmp.ge.f32.partialorder %v899, 0.0
        %vm902 = vcmp.ge.f32.partialorder %v900, 0.0
        %v903 = vsel %vm901, 1.0, -1.0
        %v904 = vsel %vm902, 1.0, -1.0
        %v905 = vand.u32 2147483647, %v899
        %v906 = vand.u32 2147483647, %v900
        %v907 = vmul.f32 %v905, 0.3275911
        %v908 = vmul.f32 %v906, 0.3275911
        %v909 = vadd.f32 %v907, 1.0
        %v910 = vadd.f32 %v908, 1.0
        %v911 = vrcp.pop %v909
        %v912 = vmul.f32 1.0, %v911
        %v913 = vrcp.pop %v910
        %v914 = vmul.f32 1.0, %v913
        %v915 = vmul.f32 %v912, 1.0614054
        %v916 = vmul.f32 %v914, 1.0614054
        %v917 = vadd.f32 %v915, -1.4531521
        %v918 = vadd.f32 %v916, -1.4531521
        %v919 = vmul.f32 %v917, %v912
        %v920 = vmul.f32 %v918, %v914
        %v921 = vadd.f32 %v919, 1.4214138
        %v922 = vadd.f32 %v920, 1.4214138
        %v923 = vmul.f32 %v921, %v912
        %v924 = vmul.f32 %v922, %v914
        %v925 = vadd.f32 %v923, -0.28449672
        %v926 = vadd.f32 %v924, -0.28449672
        %v927 = vmul.f32 %v925, %v912
        %v928 = vmul.f32 %v926, %v914
        %v929 = vadd.f32 %v927, 0.2548296
        %v930 = vadd.f32 %v928, 0.2548296
        %v931 = vmul.f32 %v929, %v912
        %v932 = vmul.f32 %v930, %v914
        %v933 = vsub.f32 0.0, %v905
        %v934 = vsub.f32 0.0, %v906
        %v935 = vmul.f32 %v933, %v905
        %v936 = vmul.f32 %v934, %v906
        %v937 = vmul.f32 %v935, 1.442695
        %v938 = vpow.pop %v937
        %v939 = vmul.f32 %v936, 1.442695
        %v940 = vpow.pop %v939
        %v941 = vmul.f32 %v931, %v938
        %v942 = vmul.f32 %v932, %v940
        %v943 = vsub.f32 1.0, %v941
        %v944 = vsub.f32 1.0, %v942
        %v945 = vmul.f32 %v903, %v943
        %v946 = vmul.f32 %v904, %v944
        %v947 = vadd.f32 %v945, 1.0
        %v948 = vadd.f32 %v946, 1.0
        %v949 = vmul.f32 %v897, %v947
        %v950 = vmul.f32 %v898, %v948
        %v951 = vld [vmem:[#allocation8] sm:$0xf]
        %v952 = vld [vmem:[#allocation8 + $0x4] sm:$0xf]
        %v953 = vld [vmem:[#allocation8 + $0x8] sm:$0xf]
        %v954 = vld [vmem:[#allocation8 + $0xc] sm:$0xf]
        %v955 = vld [vmem:[#allocation8 + $0x10] sm:$0xf]
        %v956 = vld [vmem:[#allocation8 + $0x14] sm:$0xf]
        %v957 = vld [vmem:[#allocation8 + $0x18] sm:$0xf]
        %v958 = vld [vmem:[#allocation8 + $0x1c] sm:$0xf]
        %v959 = vld [vmem:[#allocation8 + $0x20] sm:$0xf]
        %v960 = vld [vmem:[#allocation8 + $0x24] sm:$0xf]
        %v961 = vld [vmem:[#allocation8 + $0x28] sm:$0xf]
        %v962 = vld [vmem:[#allocation8 + $0x2c] sm:$0xf]
        %v963 = vld [vmem:[#allocation8 + $0x30] sm:$0xf]
        %v964 = vld [vmem:[#allocation8 + $0x34] sm:$0xf]
        %v965 = vld [vmem:[#allocation8 + $0x38] sm:$0xf]
        %v966 = vld [vmem:[#allocation8 + $0x3c] sm:$0xf]
        %v967 = vld [vmem:[#allocation8 + $0x40] sm:$0xf]
        %v968 = vld [vmem:[#allocation8 + $0x44] sm:$0xf]
        %v969 = vld [vmem:[#allocation8 + $0x48] sm:$0xf]
        %v970 = vld [vmem:[#allocation8 + $0x4c] sm:$0xf]
        %v971 = vld [vmem:[#allocation8 + $0x50] sm:$0xf]
        %v972 = vld [vmem:[#allocation8 + $0x54] sm:$0xf]
        %v973 = vld [vmem:[#allocation8 + $0x58] sm:$0xf]
        %v974 = vld [vmem:[#allocation8 + $0x5c] sm:$0xf]
        %v975 = vld [vmem:[#allocation8 + $0x60] sm:$0xf]
        %v976 = vld [vmem:[#allocation8 + $0x64] sm:$0xf]
        %v977 = vld [vmem:[#allocation8 + $0x68] sm:$0xf]
        %v978 = vld [vmem:[#allocation8 + $0x6c] sm:$0xf]
        %v979 = vld [vmem:[#allocation8 + $0x70] sm:$0xf]
        %v980 = vld [vmem:[#allocation8 + $0x74] sm:$0xf]
        %v981 = vld [vmem:[#allocation8 + $0x78] sm:$0xf]
        %v982 = vld [vmem:[#allocation8 + $0x7c] sm:$0xf]
        %v983 = vld [vmem:[#allocation8 + $0x80] sm:$0xf]
        %v984 = vld [vmem:[#allocation8 + $0x84] sm:$0xf]
        %v985 = vld [vmem:[#allocation8 + $0x88] sm:$0xf]
        %v986 = vld [vmem:[#allocation8 + $0x8c] sm:$0xf]
        %v987 = vld [vmem:[#allocation8 + $0x90] sm:$0xf]
        %v988 = vld [vmem:[#allocation8 + $0x94] sm:$0xf]
        %v989 = vld [vmem:[#allocation8 + $0x98] sm:$0xf]
        %v990 = vld [vmem:[#allocation8 + $0x9c] sm:$0xf]
        %v991 = vld [vmem:[#allocation8 + $0xa0] sm:$0xf]
        %v992 = vld [vmem:[#allocation8 + $0xa4] sm:$0xf]
        %v993 = vld [vmem:[#allocation8 + $0xa8] sm:$0xf]
        %v994 = vld [vmem:[#allocation8 + $0xac] sm:$0xf]
        %v995 = vld [vmem:[#allocation8 + $0xb0] sm:$0xf]
        %v996 = vld [vmem:[#allocation8 + $0xb4] sm:$0xf]
        %v997 = vld [vmem:[#allocation8 + $0xb8] sm:$0xf]
        %v998 = vld [vmem:[#allocation8 + $0xbc] sm:$0xf]
        %v999 = vld [vmem:[%s6] sm:$0x1]
        %v1002 = vrot.slane %v949, 7
        %v1003 = vrot.slane %v950, 7
        %v1004 = vsel %vm648, %v1002, %v1003
        %v1007 = vsel %vm648, 0.0, %v1002
        %v1008 = vrot.slane %v949, 1
        %v1009 = vrot.slane %v950, 1
        %v1010 = vsel %vm655, %v1008, %v1009
        %v1013 = vsel %vm655, %v1009, 0.0
        %v1014 = vpack.c.bf16 %v1004, %v1007
        %v1015 = vpack.c.bf16 %v950, %v949
        %v1016 = vpack.c.bf16 %v1013, %v1010
        %v1018 = vlaneseq
        %v1019 = vshrl.u32 %v1018, 7
        %v1020 = vsub.s32 0, %v1019
        %v1021 = vrot.slane %v999, %v1020
        %v1071 = vunpack.c.l.b16 %v951
        %v1072 = vunpack.c.l.b16 %v952
        %v1073 = vunpack.c.l.b16 %v953
        %v1074 = vunpack.c.l.b16 %v954
        %v1075 = vunpack.c.l.b16 %v955
        %v1076 = vunpack.c.l.b16 %v956
        %v1077 = vunpack.c.l.b16 %v957
        %v1078 = vunpack.c.l.b16 %v958
        %v1079 = vunpack.c.l.b16 %v959
        %v1080 = vunpack.c.l.b16 %v960
        %v1081 = vunpack.c.l.b16 %v961
        %v1082 = vunpack.c.l.b16 %v962
        %v1083 = vunpack.c.l.b16 %v963
        %v1084 = vunpack.c.l.b16 %v964
        %v1085 = vunpack.c.l.b16 %v965
        %v1086 = vunpack.c.l.b16 %v966
        %v1087 = vunpack.c.l.b16 %v967
        %v1088 = vunpack.c.l.b16 %v968
        %v1089 = vunpack.c.l.b16 %v969
        %v1090 = vunpack.c.l.b16 %v970
        %v1091 = vunpack.c.l.b16 %v971
        %v1092 = vunpack.c.l.b16 %v972
        %v1093 = vunpack.c.l.b16 %v973
        %v1094 = vunpack.c.l.b16 %v974
        %v1095 = vunpack.c.l.b16 %v975
        %v1096 = vunpack.c.l.b16 %v976
        %v1097 = vunpack.c.l.b16 %v977
        %v1098 = vunpack.c.l.b16 %v978
        %v1099 = vunpack.c.l.b16 %v979
        %v1100 = vunpack.c.l.b16 %v980
        %v1101 = vunpack.c.l.b16 %v981
        %v1102 = vunpack.c.l.b16 %v982
        %v1103 = vunpack.c.l.b16 %v983
        %v1104 = vunpack.c.l.b16 %v984
        %v1105 = vunpack.c.l.b16 %v985
        %v1106 = vunpack.c.l.b16 %v986
        %v1107 = vunpack.c.l.b16 %v987
        %v1108 = vunpack.c.l.b16 %v988
        %v1109 = vunpack.c.l.b16 %v989
        %v1110 = vunpack.c.l.b16 %v990
        %v1111 = vunpack.c.l.b16 %v991
        %v1112 = vunpack.c.l.b16 %v992
        %v1113 = vunpack.c.l.b16 %v993
        %v1114 = vunpack.c.l.b16 %v994
        %v1115 = vunpack.c.l.b16 %v995
        %v1116 = vunpack.c.l.b16 %v996
        %v1117 = vunpack.c.l.b16 %v997
        %v1118 = vunpack.c.l.b16 %v998
        %v1119 = vpack.c.b16 %v1072, %v1071
        %v1120 = vpack.c.b16 %v1074, %v1073
        %v1121 = vpack.c.b16 %v1076, %v1075
        %v1122 = vpack.c.b16 %v1078, %v1077
        %v1123 = vpack.c.b16 %v1080, %v1079
        %v1124 = vpack.c.b16 %v1082, %v1081
        %v1125 = vpack.c.b16 %v1084, %v1083
        %v1126 = vpack.c.b16 %v1086, %v1085
        %v1127 = vpack.c.b16 %v1088, %v1087
        %v1128 = vpack.c.b16 %v1090, %v1089
        %v1129 = vpack.c.b16 %v1092, %v1091
        %v1130 = vpack.c.b16 %v1094, %v1093
        %v1131 = vpack.c.b16 %v1096, %v1095
        %v1132 = vpack.c.b16 %v1098, %v1097
        %v1133 = vpack.c.b16 %v1100, %v1099
        %v1134 = vpack.c.b16 %v1102, %v1101
        %v1135 = vpack.c.b16 %v1104, %v1103
        %v1136 = vpack.c.b16 %v1106, %v1105
        %v1137 = vpack.c.b16 %v1108, %v1107
        %v1138 = vpack.c.b16 %v1110, %v1109
        %v1139 = vpack.c.b16 %v1112, %v1111
        %v1140 = vpack.c.b16 %v1114, %v1113
        %v1141 = vpack.c.b16 %v1116, %v1115
        %v1142 = vpack.c.b16 %v1118, %v1117
        %1167 = vmatprep.subr.bf16.mxu0 0
        %1168 = vmatpush1.bf16.msra.mxu0 %v1119
        %1169 = vmatprep.subr.bf16.mxu0 0
        %1170 = vmatpush1.bf16.msra.mxu0 %v1120
        %1171 = vmatprep.subr.bf16.mxu0 0
        %1172 = vmatpush1.bf16.msra.mxu0 %v1121
        %1173 = vmatprep.subr.bf16.mxu0 0
        %1174 = vmatpush1.bf16.msra.mxu0 %v1122
        %1175 = vmatprep.subr.bf16.mxu0 0
        %1176 = vmatpush1.bf16.msra.mxu0 %v1123
        %1177 = vmatprep.subr.bf16.mxu0 0
        %1178 = vmatpush1.bf16.msra.mxu0 %v1124
        %1179 = vmatprep.subr.bf16.mxu0 0
        %1180 = vmatpush1.bf16.msra.mxu0 %v1125
        %1181 = vmatprep.subr.bf16.mxu0 0
        %1182 = vmatpush1.bf16.msra.mxu0 %v1126
        %1183 = vmatprep.subr.bf16.mxu0 0
        %1184 = vmatpush1.bf16.msra.mxu0 %v1127
        %1185 = vmatprep.subr.bf16.mxu0 0
        %1186 = vmatpush1.bf16.msra.mxu0 %v1128
        %1187 = vmatprep.subr.bf16.mxu0 0
        %1188 = vmatpush1.bf16.msra.mxu0 %v1129
        %1189 = vmatprep.subr.bf16.mxu0 0
        %1190 = vmatpush1.bf16.msra.mxu0 %v1130
        %1191 = vmatprep.subr.bf16.mxu0 0
        %1192 = vmatpush1.bf16.msra.mxu0 %v1131
        %1193 = vmatprep.subr.bf16.mxu0 0
        %1194 = vmatpush1.bf16.msra.mxu0 %v1132
        %1195 = vmatprep.subr.bf16.mxu0 0
        %1196 = vmatpush1.bf16.msra.mxu0 %v1133
        %1197 = vmatprep.subr.bf16.mxu0 0
        %1198 = vmatpush1.bf16.msra.mxu0 %v1134
        %1199 = vmatprep.mubr.bf16.mxu0 %v1015
        %1200 = vmatmul.mubr.bf16.gmra.mrb[0].mxu0 %v1014
        %v1201 = vpop.f32.mrb[0].mxu0
        %v1202 = vadd.f32 %v1021, %v1201
        %v1203 = vpop.f32.mrb[0].mxu0
        %v1204 = vpop.f32.mrb[0].mxu0
        %v1205 = vadd.f32 %v1021, %v1204
        %v1206 = vpop.f32.mrb[0].mxu0
        %1207 = vdwg.mxu0
        %1208 = vmatprep.subr.bf16.mxu0 0
        %1209 = vmatpush1.bf16.msra.mxu0 %v1135
        %1210 = vmatprep.subr.bf16.mxu0 0
        %1211 = vmatpush1.bf16.msra.mxu0 %v1136
        %1212 = vmatprep.subr.bf16.mxu0 0
        %1213 = vmatpush1.bf16.msra.mxu0 %v1137
        %1214 = vmatprep.subr.bf16.mxu0 0
        %1215 = vmatpush1.bf16.msra.mxu0 %v1138
        %1216 = vmatprep.subr.bf16.mxu0 0
        %1217 = vmatpush1.bf16.msra.mxu0 %v1139
        %1218 = vmatprep.subr.bf16.mxu0 0
        %1219 = vmatpush1.bf16.msra.mxu0 %v1140
        %1220 = vmatprep.subr.bf16.mxu0 0
        %1221 = vmatpush1.bf16.msra.mxu0 %v1141
        %1222 = vmatprep.subr.bf16.mxu0 0
        %1223 = vmatpush1.bf16.msra.mxu0 %v1142
        %1224 = vmatprep.subr.bf16.mxu0 0
        %1225 = vmatpush1.bf16.msra.mxu0 0
        %1226 = vmatprep.subr.bf16.mxu0 0
        %1227 = vmatpush1.bf16.msra.mxu0 0
        %1228 = vmatprep.subr.bf16.mxu0 0
        %1229 = vmatpush1.bf16.msra.mxu0 0
        %1230 = vmatprep.subr.bf16.mxu0 0
        %1231 = vmatpush1.bf16.msra.mxu0 0
        %1232 = vmatprep.subr.bf16.mxu0 0
        %1233 = vmatpush1.bf16.msra.mxu0 0
        %1234 = vmatprep.subr.bf16.mxu0 0
        %1235 = vmatpush1.bf16.msra.mxu0 0
        %1236 = vmatprep.subr.bf16.mxu0 0
        %1237 = vmatpush1.bf16.msra.mxu0 0
        %1238 = vmatprep.subr.bf16.mxu0 0
        %1239 = vmatpush1.bf16.msra.mxu0 0
        %1240 = vmatprep.mubr.bf16.mxu0 0
        %1241 = vmatmul.mubr.bf16.gmra.mrb[0].mxu0 %v1016
        %v1242 = vpop.f32.mrb[0].mxu0
        %v1243 = vadd.f32 %v1202, %v1242
        %v1244 = vpop.f32.mrb[0].mxu0
        %v1245 = vpop.f32.mrb[0].mxu0
        %v1246 = vadd.f32 %v1205, %v1245
        %v1247 = vpop.f32.mrb[0].mxu0
        %1248 = vdwg.mxu0
        %v1249 = vadd.f32 %v1243, %v541
        %v1250 = vadd.f32 %v1246, %v542
        %v1251 = vmul.f32 %v1249, 0.5
        %v1252 = vmul.f32 %v1250, 0.5
        %v1253 = vmul.f32 %v1249, 0.70710677
        %v1254 = vmul.f32 %v1250, 0.70710677
        %vm1255 = vcmp.ge.f32.partialorder %v1253, 0.0
        %vm1256 = vcmp.ge.f32.partialorder %v1254, 0.0
        %v1257 = vsel %vm1255, 1.0, -1.0
        %v1258 = vsel %vm1256, 1.0, -1.0
        %v1259 = vand.u32 2147483647, %v1253
        %v1260 = vand.u32 2147483647, %v1254
        %v1261 = vmul.f32 %v1259, 0.3275911
        %v1262 = vmul.f32 %v1260, 0.3275911
        %v1263 = vadd.f32 %v1261, 1.0
        %v1264 = vadd.f32 %v1262, 1.0
        %v1265 = vrcp.pop %v1263
        %v1266 = vmul.f32 1.0, %v1265
        %v1267 = vrcp.pop %v1264
        %v1268 = vmul.f32 1.0, %v1267
        %v1269 = vmul.f32 %v1266, 1.0614054
        %v1270 = vmul.f32 %v1268, 1.0614054
        %v1271 = vadd.f32 %v1269, -1.4531521
        %v1272 = vadd.f32 %v1270, -1.4531521
        %v1273 = vmul.f32 %v1271, %v1266
        %v1274 = vmul.f32 %v1272, %v1268
        %v1275 = vadd.f32 %v1273, 1.4214138
        %v1276 = vadd.f32 %v1274, 1.4214138
        %v1277 = vmul.f32 %v1275, %v1266
        %v1278 = vmul.f32 %v1276, %v1268
        %v1279 = vadd.f32 %v1277, -0.28449672
        %v1280 = vadd.f32 %v1278, -0.28449672
        %v1281 = vmul.f32 %v1279, %v1266
        %v1282 = vmul.f32 %v1280, %v1268
        %v1283 = vadd.f32 %v1281, 0.2548296
        %v1284 = vadd.f32 %v1282, 0.2548296
        %v1285 = vmul.f32 %v1283, %v1266
        %v1286 = vmul.f32 %v1284, %v1268
        %v1287 = vsub.f32 0.0, %v1259
        %v1288 = vsub.f32 0.0, %v1260
        %v1289 = vmul.f32 %v1287, %v1259
        %v1290 = vmul.f32 %v1288, %v1260
        %v1291 = vmul.f32 %v1289, 1.442695
        %v1292 = vpow.pop %v1291
        %v1293 = vmul.f32 %v1290, 1.442695
        %v1294 = vpow.pop %v1293
        %v1295 = vmul.f32 %v1285, %v1292
        %v1296 = vmul.f32 %v1286, %v1294
        %v1297 = vsub.f32 1.0, %v1295
        %v1298 = vsub.f32 1.0, %v1296
        %v1299 = vmul.f32 %v1257, %v1297
        %v1300 = vmul.f32 %v1258, %v1298
        %v1301 = vadd.f32 %v1299, 1.0
        %v1302 = vadd.f32 %v1300, 1.0
        %v1303 = vmul.f32 %v1251, %v1301
        %v1304 = vmul.f32 %v1252, %v1302
        %s1305 = scalar_lea.vmem [#allocation7], 192
        %v1306 = vld [vmem:[%s1305] sm:$0xf]
        %v1307 = vld [vmem:[%s1305 + $0x4] sm:$0xf]
        %v1308 = vld [vmem:[%s1305 + $0x8] sm:$0xf]
        %v1309 = vld [vmem:[%s1305 + $0xc] sm:$0xf]
        %v1310 = vld [vmem:[%s1305 + $0x10] sm:$0xf]
        %v1311 = vld [vmem:[%s1305 + $0x14] sm:$0xf]
        %v1312 = vld [vmem:[%s1305 + $0x18] sm:$0xf]
        %v1313 = vld [vmem:[%s1305 + $0x1c] sm:$0xf]
        %v1314 = vld [vmem:[%s1305 + $0x20] sm:$0xf]
        %v1315 = vld [vmem:[%s1305 + $0x24] sm:$0xf]
        %v1316 = vld [vmem:[%s1305 + $0x28] sm:$0xf]
        %v1317 = vld [vmem:[%s1305 + $0x2c] sm:$0xf]
        %v1318 = vld [vmem:[%s1305 + $0x30] sm:$0xf]
        %v1319 = vld [vmem:[%s1305 + $0x34] sm:$0xf]
        %v1320 = vld [vmem:[%s1305 + $0x38] sm:$0xf]
        %v1321 = vld [vmem:[%s1305 + $0x3c] sm:$0xf]
        %v1322 = vld [vmem:[%s1305 + $0x40] sm:$0xf]
        %v1323 = vld [vmem:[%s1305 + $0x44] sm:$0xf]
        %v1324 = vld [vmem:[%s1305 + $0x48] sm:$0xf]
        %v1325 = vld [vmem:[%s1305 + $0x4c] sm:$0xf]
        %v1326 = vld [vmem:[%s1305 + $0x50] sm:$0xf]
        %v1327 = vld [vmem:[%s1305 + $0x54] sm:$0xf]
        %v1328 = vld [vmem:[%s1305 + $0x58] sm:$0xf]
        %v1329 = vld [vmem:[%s1305 + $0x5c] sm:$0xf]
        %v1330 = vld [vmem:[%s1305 + $0x60] sm:$0xf]
        %v1331 = vld [vmem:[%s1305 + $0x64] sm:$0xf]
        %v1332 = vld [vmem:[%s1305 + $0x68] sm:$0xf]
        %v1333 = vld [vmem:[%s1305 + $0x6c] sm:$0xf]
        %v1334 = vld [vmem:[%s1305 + $0x70] sm:$0xf]
        %v1335 = vld [vmem:[%s1305 + $0x74] sm:$0xf]
        %v1336 = vld [vmem:[%s1305 + $0x78] sm:$0xf]
        %v1337 = vld [vmem:[%s1305 + $0x7c] sm:$0xf]
        %v1338 = vld [vmem:[%s1305 + $0x80] sm:$0xf]
        %v1339 = vld [vmem:[%s1305 + $0x84] sm:$0xf]
        %v1340 = vld [vmem:[%s1305 + $0x88] sm:$0xf]
        %v1341 = vld [vmem:[%s1305 + $0x8c] sm:$0xf]
        %v1342 = vld [vmem:[%s1305 + $0x90] sm:$0xf]
        %v1343 = vld [vmem:[%s1305 + $0x94] sm:$0xf]
        %v1344 = vld [vmem:[%s1305 + $0x98] sm:$0xf]
        %v1345 = vld [vmem:[%s1305 + $0x9c] sm:$0xf]
        %v1346 = vld [vmem:[%s1305 + $0xa0] sm:$0xf]
        %v1347 = vld [vmem:[%s1305 + $0xa4] sm:$0xf]
        %v1348 = vld [vmem:[%s1305 + $0xa8] sm:$0xf]
        %v1349 = vld [vmem:[%s1305 + $0xac] sm:$0xf]
        %v1350 = vld [vmem:[%s1305 + $0xb0] sm:$0xf]
        %v1351 = vld [vmem:[%s1305 + $0xb4] sm:$0xf]
        %v1352 = vld [vmem:[%s1305 + $0xb8] sm:$0xf]
        %v1353 = vld [vmem:[%s1305 + $0xbc] sm:$0xf]
        %s1354 = scalar_lea.vmem %s4, 1
        %v1355 = vld [vmem:[%s1354] sm:$0x1]
        %vm1358 = vcmask 1041408
        %v1359 = vrot.slane %v1303, 6
        %v1360 = vrot.slane %v1304, 6
        %v1361 = vsel %vm1358, %v1359, %v1360
        %v1364 = vsel %vm1358, 0.0, %v1359
        %vm1365 = vcmask 1045504
        %v1366 = vrot.slane %v1303, 2
        %v1367 = vrot.slane %v1304, 2
        %v1368 = vsel %vm1365, %v1366, %v1367
        %v1371 = vsel %vm1365, %v1367, 0.0
        %v1372 = vpack.c.bf16 %v1361, %v1364
        %v1373 = vpack.c.bf16 %v1304, %v1303
        %v1374 = vpack.c.bf16 %v1371, %v1368
        %v1376 = vlaneseq
        %v1377 = vshrl.u32 %v1376, 7
        %v1378 = vsub.s32 0, %v1377
        %v1379 = vrot.slane %v1355, %v1378
        %v1429 = vunpack.c.l.b16 %v1306
        %v1430 = vunpack.c.l.b16 %v1307
        %v1431 = vunpack.c.l.b16 %v1308
        %v1432 = vunpack.c.l.b16 %v1309
        %v1433 = vunpack.c.l.b16 %v1310
        %v1434 = vunpack.c.l.b16 %v1311
        %v1435 = vunpack.c.l.b16 %v1312
        %v1436 = vunpack.c.l.b16 %v1313
        %v1437 = vunpack.c.l.b16 %v1314
        %v1438 = vunpack.c.l.b16 %v1315
        %v1439 = vunpack.c.l.b16 %v1316
        %v1440 = vunpack.c.l.b16 %v1317
        %v1441 = vunpack.c.l.b16 %v1318
        %v1442 = vunpack.c.l.b16 %v1319
        %v1443 = vunpack.c.l.b16 %v1320
        %v1444 = vunpack.c.l.b16 %v1321
        %v1445 = vunpack.c.l.b16 %v1322
        %v1446 = vunpack.c.l.b16 %v1323
        %v1447 = vunpack.c.l.b16 %v1324
        %v1448 = vunpack.c.l.b16 %v1325
        %v1449 = vunpack.c.l.b16 %v1326
        %v1450 = vunpack.c.l.b16 %v1327
        %v1451 = vunpack.c.l.b16 %v1328
        %v1452 = vunpack.c.l.b16 %v1329
        %v1453 = vunpack.c.l.b16 %v1330
        %v1454 = vunpack.c.l.b16 %v1331
        %v1455 = vunpack.c.l.b16 %v1332
        %v1456 = vunpack.c.l.b16 %v1333
        %v1457 = vunpack.c.l.b16 %v1334
        %v1458 = vunpack.c.l.b16 %v1335
        %v1459 = vunpack.c.l.b16 %v1336
        %v1460 = vunpack.c.l.b16 %v1337
        %v1461 = vunpack.c.l.b16 %v1338
        %v1462 = vunpack.c.l.b16 %v1339
        %v1463 = vunpack.c.l.b16 %v1340
        %v1464 = vunpack.c.l.b16 %v1341
        %v1465 = vunpack.c.l.b16 %v1342
        %v1466 = vunpack.c.l.b16 %v1343
        %v1467 = vunpack.c.l.b16 %v1344
        %v1468 = vunpack.c.l.b16 %v1345
        %v1469 = vunpack.c.l.b16 %v1346
        %v1470 = vunpack.c.l.b16 %v1347
        %v1471 = vunpack.c.l.b16 %v1348
        %v1472 = vunpack.c.l.b16 %v1349
        %v1473 = vunpack.c.l.b16 %v1350
        %v1474 = vunpack.c.l.b16 %v1351
        %v1475 = vunpack.c.l.b16 %v1352
        %v1476 = vunpack.c.l.b16 %v1353
        %v1477 = vpack.c.b16 %v1430, %v1429
        %v1478 = vpack.c.b16 %v1432, %v1431
        %v1479 = vpack.c.b16 %v1434, %v1433
        %v1480 = vpack.c.b16 %v1436, %v1435
        %v1481 = vpack.c.b16 %v1438, %v1437
        %v1482 = vpack.c.b16 %v1440, %v1439
        %v1483 = vpack.c.b16 %v1442, %v1441
        %v1484 = vpack.c.b16 %v1444, %v1443
        %v1485 = vpack.c.b16 %v1446, %v1445
        %v1486 = vpack.c.b16 %v1448, %v1447
        %v1487 = vpack.c.b16 %v1450, %v1449
        %v1488 = vpack.c.b16 %v1452, %v1451
        %v1489 = vpack.c.b16 %v1454, %v1453
        %v1490 = vpack.c.b16 %v1456, %v1455
        %v1491 = vpack.c.b16 %v1458, %v1457
        %v1492 = vpack.c.b16 %v1460, %v1459
        %v1493 = vpack.c.b16 %v1462, %v1461
        %v1494 = vpack.c.b16 %v1464, %v1463
        %v1495 = vpack.c.b16 %v1466, %v1465
        %v1496 = vpack.c.b16 %v1468, %v1467
        %v1497 = vpack.c.b16 %v1470, %v1469
        %v1498 = vpack.c.b16 %v1472, %v1471
        %v1499 = vpack.c.b16 %v1474, %v1473
        %v1500 = vpack.c.b16 %v1476, %v1475
        %1525 = vmatprep.subr.bf16.mxu0 0
        %1526 = vmatpush1.bf16.msra.mxu0 %v1477
        %1527 = vmatprep.subr.bf16.mxu0 0
        %1528 = vmatpush1.bf16.msra.mxu0 %v1478
        %1529 = vmatprep.subr.bf16.mxu0 0
        %1530 = vmatpush1.bf16.msra.mxu0 %v1479
        %1531 = vmatprep.subr.bf16.mxu0 0
        %1532 = vmatpush1.bf16.msra.mxu0 %v1480
        %1533 = vmatprep.subr.bf16.mxu0 0
        %1534 = vmatpush1.bf16.msra.mxu0 %v1481
        %1535 = vmatprep.subr.bf16.mxu0 0
        %1536 = vmatpush1.bf16.msra.mxu0 %v1482
        %1537 = vmatprep.subr.bf16.mxu0 0
        %1538 = vmatpush1.bf16.msra.mxu0 %v1483
        %1539 = vmatprep.subr.bf16.mxu0 0
        %1540 = vmatpush1.bf16.msra.mxu0 %v1484
        %1541 = vmatprep.subr.bf16.mxu0 0
        %1542 = vmatpush1.bf16.msra.mxu0 %v1485
        %1543 = vmatprep.subr.bf16.mxu0 0
        %1544 = vmatpush1.bf16.msra.mxu0 %v1486
        %1545 = vmatprep.subr.bf16.mxu0 0
        %1546 = vmatpush1.bf16.msra.mxu0 %v1487
        %1547 = vmatprep.subr.bf16.mxu0 0
        %1548 = vmatpush1.bf16.msra.mxu0 %v1488
        %1549 = vmatprep.subr.bf16.mxu0 0
        %1550 = vmatpush1.bf16.msra.mxu0 %v1489
        %1551 = vmatprep.subr.bf16.mxu0 0
        %1552 = vmatpush1.bf16.msra.mxu0 %v1490
        %1553 = vmatprep.subr.bf16.mxu0 0
        %1554 = vmatpush1.bf16.msra.mxu0 %v1491
        %1555 = vmatprep.subr.bf16.mxu0 0
        %1556 = vmatpush1.bf16.msra.mxu0 %v1492
        %1557 = vmatprep.mubr.bf16.mxu0 %v1373
        %1558 = vmatmul.mubr.bf16.gmra.mrb[0].mxu0 %v1372
        %v1559 = vpop.f32.mrb[0].mxu0
        %v1560 = vadd.f32 %v1379, %v1559
        %v1561 = vpop.f32.mrb[0].mxu0
        %v1562 = vpop.f32.mrb[0].mxu0
        %v1563 = vadd.f32 %v1379, %v1562
        %v1564 = vpop.f32.mrb[0].mxu0
        %1565 = vdwg.mxu0
        %1566 = vmatprep.subr.bf16.mxu0 0
        %1567 = vmatpush1.bf16.msra.mxu0 %v1493
        %1568 = vmatprep.subr.bf16.mxu0 0
        %1569 = vmatpush1.bf16.msra.mxu0 %v1494
        %1570 = vmatprep.subr.bf16.mxu0 0
        %1571 = vmatpush1.bf16.msra.mxu0 %v1495
        %1572 = vmatprep.subr.bf16.mxu0 0
        %1573 = vmatpush1.bf16.msra.mxu0 %v1496
        %1574 = vmatprep.subr.bf16.mxu0 0
        %1575 = vmatpush1.bf16.msra.mxu0 %v1497
        %1576 = vmatprep.subr.bf16.mxu0 0
        %1577 = vmatpush1.bf16.msra.mxu0 %v1498
        %1578 = vmatprep.subr.bf16.mxu0 0
        %1579 = vmatpush1.bf16.msra.mxu0 %v1499
        %1580 = vmatprep.subr.bf16.mxu0 0
        %1581 = vmatpush1.bf16.msra.mxu0 %v1500
        %1582 = vmatprep.subr.bf16.mxu0 0
        %1583 = vmatpush1.bf16.msra.mxu0 0
        %1584 = vmatprep.subr.bf16.mxu0 0
        %1585 = vmatpush1.bf16.msra.mxu0 0
        %1586 = vmatprep.subr.bf16.mxu0 0
        %1587 = vmatpush1.bf16.msra.mxu0 0
        %1588 = vmatprep.subr.bf16.mxu0 0
        %1589 = vmatpush1.bf16.msra.mxu0 0
        %1590 = vmatprep.subr.bf16.mxu0 0
        %1591 = vmatpush1.bf16.msra.mxu0 0
        %1592 = vmatprep.subr.bf16.mxu0 0
        %1593 = vmatpush1.bf16.msra.mxu0 0
        %1594 = vmatprep.subr.bf16.mxu0 0
        %1595 = vmatpush1.bf16.msra.mxu0 0
        %1596 = vmatprep.subr.bf16.mxu0 0
        %1597 = vmatpush1.bf16.msra.mxu0 0
        %1598 = vmatprep.mubr.bf16.mxu0 0
        %1599 = vmatmul.mubr.bf16.gmra.mrb[0].mxu0 %v1374
        %v1600 = vpop.f32.mrb[0].mxu0
        %v1601 = vadd.f32 %v1560, %v1600
        %v1602 = vpop.f32.mrb[0].mxu0
        %v1603 = vpop.f32.mrb[0].mxu0
        %v1604 = vadd.f32 %v1563, %v1603
        %v1605 = vpop.f32.mrb[0].mxu0
        %1606 = vdwg.mxu0
        %v1607 = vmul.f32 %v1601, 0.5
        %v1608 = vmul.f32 %v1604, 0.5
        %v1609 = vmul.f32 %v1601, 0.70710677
        %v1610 = vmul.f32 %v1604, 0.70710677
        %vm1611 = vcmp.ge.f32.partialorder %v1609, 0.0
        %vm1612 = vcmp.ge.f32.partialorder %v1610, 0.0
        %v1613 = vsel %vm1611, 1.0, -1.0
        %v1614 = vsel %vm1612, 1.0, -1.0
        %v1615 = vand.u32 2147483647, %v1609
        %v1616 = vand.u32 2147483647, %v1610
        %v1617 = vmul.f32 %v1615, 0.3275911
        %v1618 = vmul.f32 %v1616, 0.3275911
        %v1619 = vadd.f32 %v1617, 1.0
        %v1620 = vadd.f32 %v1618, 1.0
        %v1621 = vrcp.pop %v1619
        %v1622 = vmul.f32 1.0, %v1621
        %v1623 = vrcp.pop %v1620
        %v1624 = vmul.f32 1.0, %v1623
        %v1625 = vmul.f32 %v1622, 1.0614054
        %v1626 = vmul.f32 %v1624, 1.0614054
        %v1627 = vadd.f32 %v1625, -1.4531521
        %v1628 = vadd.f32 %v1626, -1.4531521
        %v1629 = vmul.f32 %v1627, %v1622
        %v1630 = vmul.f32 %v1628, %v1624
        %v1631 = vadd.f32 %v1629, 1.4214138
        %v1632 = vadd.f32 %v1630, 1.4214138
        %v1633 = vmul.f32 %v1631, %v1622
        %v1634 = vmul.f32 %v1632, %v1624
        %v1635 = vadd.f32 %v1633, -0.28449672
        %v1636 = vadd.f32 %v1634, -0.28449672
        %v1637 = vmul.f32 %v1635, %v1622
        %v1638 = vmul.f32 %v1636, %v1624
        %v1639 = vadd.f32 %v1637, 0.2548296
        %v1640 = vadd.f32 %v1638, 0.2548296
        %v1641 = vmul.f32 %v1639, %v1622
        %v1642 = vmul.f32 %v1640, %v1624
        %v1643 = vsub.f32 0.0, %v1615
        %v1644 = vsub.f32 0.0, %v1616
        %v1645 = vmul.f32 %v1643, %v1615
        %v1646 = vmul.f32 %v1644, %v1616
        %v1647 = vmul.f32 %v1645, 1.442695
        %v1648 = vpow.pop %v1647
        %v1649 = vmul.f32 %v1646, 1.442695
        %v1650 = vpow.pop %v1649
        %v1651 = vmul.f32 %v1641, %v1648
        %v1652 = vmul.f32 %v1642, %v1650
        %v1653 = vsub.f32 1.0, %v1651
        %v1654 = vsub.f32 1.0, %v1652
        %v1655 = vmul.f32 %v1613, %v1653
        %v1656 = vmul.f32 %v1614, %v1654
        %v1657 = vadd.f32 %v1655, 1.0
        %v1658 = vadd.f32 %v1656, 1.0
        %v1659 = vmul.f32 %v1607, %v1657
        %v1660 = vmul.f32 %v1608, %v1658
        %s1661 = scalar_lea.vmem [#allocation8], 192
        %v1662 = vld [vmem:[%s1661] sm:$0xf]
        %v1663 = vld [vmem:[%s1661 + $0x4] sm:$0xf]
        %v1664 = vld [vmem:[%s1661 + $0x8] sm:$0xf]
        %v1665 = vld [vmem:[%s1661 + $0xc] sm:$0xf]
        %v1666 = vld [vmem:[%s1661 + $0x10] sm:$0xf]
        %v1667 = vld [vmem:[%s1661 + $0x14] sm:$0xf]
        %v1668 = vld [vmem:[%s1661 + $0x18] sm:$0xf]
        %v1669 = vld [vmem:[%s1661 + $0x1c] sm:$0xf]
        %v1670 = vld [vmem:[%s1661 + $0x20] sm:$0xf]
        %v1671 = vld [vmem:[%s1661 + $0x24] sm:$0xf]
        %v1672 = vld [vmem:[%s1661 + $0x28] sm:$0xf]
        %v1673 = vld [vmem:[%s1661 + $0x2c] sm:$0xf]
        %v1674 = vld [vmem:[%s1661 + $0x30] sm:$0xf]
        %v1675 = vld [vmem:[%s1661 + $0x34] sm:$0xf]
        %v1676 = vld [vmem:[%s1661 + $0x38] sm:$0xf]
        %v1677 = vld [vmem:[%s1661 + $0x3c] sm:$0xf]
        %v1678 = vld [vmem:[%s1661 + $0x40] sm:$0xf]
        %v1679 = vld [vmem:[%s1661 + $0x44] sm:$0xf]
        %v1680 = vld [vmem:[%s1661 + $0x48] sm:$0xf]
        %v1681 = vld [vmem:[%s1661 + $0x4c] sm:$0xf]
        %v1682 = vld [vmem:[%s1661 + $0x50] sm:$0xf]
        %v1683 = vld [vmem:[%s1661 + $0x54] sm:$0xf]
        %v1684 = vld [vmem:[%s1661 + $0x58] sm:$0xf]
        %v1685 = vld [vmem:[%s1661 + $0x5c] sm:$0xf]
        %v1686 = vld [vmem:[%s1661 + $0x60] sm:$0xf]
        %v1687 = vld [vmem:[%s1661 + $0x64] sm:$0xf]
        %v1688 = vld [vmem:[%s1661 + $0x68] sm:$0xf]
        %v1689 = vld [vmem:[%s1661 + $0x6c] sm:$0xf]
        %v1690 = vld [vmem:[%s1661 + $0x70] sm:$0xf]
        %v1691 = vld [vmem:[%s1661 + $0x74] sm:$0xf]
        %v1692 = vld [vmem:[%s1661 + $0x78] sm:$0xf]
        %v1693 = vld [vmem:[%s1661 + $0x7c] sm:$0xf]
        %v1694 = vld [vmem:[%s1661 + $0x80] sm:$0xf]
        %v1695 = vld [vmem:[%s1661 + $0x84] sm:$0xf]
        %v1696 = vld [vmem:[%s1661 + $0x88] sm:$0xf]
        %v1697 = vld [vmem:[%s1661 + $0x8c] sm:$0xf]
        %v1698 = vld [vmem:[%s1661 + $0x90] sm:$0xf]
        %v1699 = vld [vmem:[%s1661 + $0x94] sm:$0xf]
        %v1700 = vld [vmem:[%s1661 + $0x98] sm:$0xf]
        %v1701 = vld [vmem:[%s1661 + $0x9c] sm:$0xf]
        %v1702 = vld [vmem:[%s1661 + $0xa0] sm:$0xf]
        %v1703 = vld [vmem:[%s1661 + $0xa4] sm:$0xf]
        %v1704 = vld [vmem:[%s1661 + $0xa8] sm:$0xf]
        %v1705 = vld [vmem:[%s1661 + $0xac] sm:$0xf]
        %v1706 = vld [vmem:[%s1661 + $0xb0] sm:$0xf]
        %v1707 = vld [vmem:[%s1661 + $0xb4] sm:$0xf]
        %v1708 = vld [vmem:[%s1661 + $0xb8] sm:$0xf]
        %v1709 = vld [vmem:[%s1661 + $0xbc] sm:$0xf]
        %s1710 = scalar_lea.vmem %s6, 1
        %v1711 = vld [vmem:[%s1710] sm:$0x1]
        %v1714 = vrot.slane %v1659, 6
        %v1715 = vrot.slane %v1660, 6
        %v1716 = vsel %vm1358, %v1714, %v1715
        %v1719 = vsel %vm1358, 0.0, %v1714
        %v1720 = vrot.slane %v1659, 2
        %v1721 = vrot.slane %v1660, 2
        %v1722 = vsel %vm1365, %v1720, %v1721
        %v1725 = vsel %vm1365, %v1721, 0.0
        %v1726 = vpack.c.bf16 %v1716, %v1719
        %v1727 = vpack.c.bf16 %v1660, %v1659
        %v1728 = vpack.c.bf16 %v1725, %v1722
        %v1730 = vlaneseq
        %v1731 = vshrl.u32 %v1730, 7
        %v1732 = vsub.s32 0, %v1731
        %v1733 = vrot.slane %v1711, %v1732
        %v1783 = vunpack.c.l.b16 %v1662
        %v1784 = vunpack.c.l.b16 %v1663
        %v1785 = vunpack.c.l.b16 %v1664
        %v1786 = vunpack.c.l.b16 %v1665
        %v1787 = vunpack.c.l.b16 %v1666
        %v1788 = vunpack.c.l.b16 %v1667
        %v1789 = vunpack.c.l.b16 %v1668
        %v1790 = vunpack.c.l.b16 %v1669
        %v1791 = vunpack.c.l.b16 %v1670
        %v1792 = vunpack.c.l.b16 %v1671
        %v1793 = vunpack.c.l.b16 %v1672
        %v1794 = vunpack.c.l.b16 %v1673
        %v1795 = vunpack.c.l.b16 %v1674
        %v1796 = vunpack.c.l.b16 %v1675
        %v1797 = vunpack.c.l.b16 %v1676
        %v1798 = vunpack.c.l.b16 %v1677
        %v1799 = vunpack.c.l.b16 %v1678
        %v1800 = vunpack.c.l.b16 %v1679
        %v1801 = vunpack.c.l.b16 %v1680
        %v1802 = vunpack.c.l.b16 %v1681
        %v1803 = vunpack.c.l.b16 %v1682
        %v1804 = vunpack.c.l.b16 %v1683
        %v1805 = vunpack.c.l.b16 %v1684
        %v1806 = vunpack.c.l.b16 %v1685
        %v1807 = vunpack.c.l.b16 %v1686
        %v1808 = vunpack.c.l.b16 %v1687
        %v1809 = vunpack.c.l.b16 %v1688
        %v1810 = vunpack.c.l.b16 %v1689
        %v1811 = vunpack.c.l.b16 %v1690
        %v1812 = vunpack.c.l.b16 %v1691
        %v1813 = vunpack.c.l.b16 %v1692
        %v1814 = vunpack.c.l.b16 %v1693
        %v1815 = vunpack.c.l.b16 %v1694
        %v1816 = vunpack.c.l.b16 %v1695
        %v1817 = vunpack.c.l.b16 %v1696
        %v1818 = vunpack.c.l.b16 %v1697
        %v1819 = vunpack.c.l.b16 %v1698
        %v1820 = vunpack.c.l.b16 %v1699
        %v1821 = vunpack.c.l.b16 %v1700
        %v1822 = vunpack.c.l.b16 %v1701
        %v1823 = vunpack.c.l.b16 %v1702
        %v1824 = vunpack.c.l.b16 %v1703
        %v1825 = vunpack.c.l.b16 %v1704
        %v1826 = vunpack.c.l.b16 %v1705
        %v1827 = vunpack.c.l.b16 %v1706
        %v1828 = vunpack.c.l.b16 %v1707
        %v1829 = vunpack.c.l.b16 %v1708
        %v1830 = vunpack.c.l.b16 %v1709
        %v1831 = vpack.c.b16 %v1784, %v1783
        %v1832 = vpack.c.b16 %v1786, %v1785
        %v1833 = vpack.c.b16 %v1788, %v1787
        %v1834 = vpack.c.b16 %v1790, %v1789
        %v1835 = vpack.c.b16 %v1792, %v1791
        %v1836 = vpack.c.b16 %v1794, %v1793
        %v1837 = vpack.c.b16 %v1796, %v1795
        %v1838 = vpack.c.b16 %v1798, %v1797
        %v1839 = vpack.c.b16 %v1800, %v1799
        %v1840 = vpack.c.b16 %v1802, %v1801
        %v1841 = vpack.c.b16 %v1804, %v1803
        %v1842 = vpack.c.b16 %v1806, %v1805
        %v1843 = vpack.c.b16 %v1808, %v1807
        %v1844 = vpack.c.b16 %v1810, %v1809
        %v1845 = vpack.c.b16 %v1812, %v1811
        %v1846 = vpack.c.b16 %v1814, %v1813
        %v1847 = vpack.c.b16 %v1816, %v1815
        %v1848 = vpack.c.b16 %v1818, %v1817
        %v1849 = vpack.c.b16 %v1820, %v1819
        %v1850 = vpack.c.b16 %v1822, %v1821
        %v1851 = vpack.c.b16 %v1824, %v1823
        %v1852 = vpack.c.b16 %v1826, %v1825
        %v1853 = vpack.c.b16 %v1828, %v1827
        %v1854 = vpack.c.b16 %v1830, %v1829
        %1879 = vmatprep.subr.bf16.mxu0 0
        %1880 = vmatpush1.bf16.msra.mxu0 %v1831
        %1881 = vmatprep.subr.bf16.mxu0 0
        %1882 = vmatpush1.bf16.msra.mxu0 %v1832
        %1883 = vmatprep.subr.bf16.mxu0 0
        %1884 = vmatpush1.bf16.msra.mxu0 %v1833
        %1885 = vmatprep.subr.bf16.mxu0 0
        %1886 = vmatpush1.bf16.msra.mxu0 %v1834
        %1887 = vmatprep.subr.bf16.mxu0 0
        %1888 = vmatpush1.bf16.msra.mxu0 %v1835
        %1889 = vmatprep.subr.bf16.mxu0 0
        %1890 = vmatpush1.bf16.msra.mxu0 %v1836
        %1891 = vmatprep.subr.bf16.mxu0 0
        %1892 = vmatpush1.bf16.msra.mxu0 %v1837
        %1893 = vmatprep.subr.bf16.mxu0 0
        %1894 = vmatpush1.bf16.msra.mxu0 %v1838
        %1895 = vmatprep.subr.bf16.mxu0 0
        %1896 = vmatpush1.bf16.msra.mxu0 %v1839
        %1897 = vmatprep.subr.bf16.mxu0 0
        %1898 = vmatpush1.bf16.msra.mxu0 %v1840
        %1899 = vmatprep.subr.bf16.mxu0 0
        %1900 = vmatpush1.bf16.msra.mxu0 %v1841
        %1901 = vmatprep.subr.bf16.mxu0 0
        %1902 = vmatpush1.bf16.msra.mxu0 %v1842
        %1903 = vmatprep.subr.bf16.mxu0 0
        %1904 = vmatpush1.bf16.msra.mxu0 %v1843
        %1905 = vmatprep.subr.bf16.mxu0 0
        %1906 = vmatpush1.bf16.msra.mxu0 %v1844
        %1907 = vmatprep.subr.bf16.mxu0 0
        %1908 = vmatpush1.bf16.msra.mxu0 %v1845
        %1909 = vmatprep.subr.bf16.mxu0 0
        %1910 = vmatpush1.bf16.msra.mxu0 %v1846
        %1911 = vmatprep.mubr.bf16.mxu0 %v1727
        %1912 = vmatmul.mubr.bf16.gmra.mrb[0].mxu0 %v1726
        %v1913 = vpop.f32.mrb[0].mxu0
        %v1914 = vadd.f32 %v1733, %v1913
        %v1915 = vpop.f32.mrb[0].mxu0
        %v1916 = vpop.f32.mrb[0].mxu0
        %v1917 = vadd.f32 %v1733, %v1916
        %v1918 = vpop.f32.mrb[0].mxu0
        %1919 = vdwg.mxu0
        %1920 = vmatprep.subr.bf16.mxu0 0
        %1921 = vmatpush1.bf16.msra.mxu0 %v1847
        %1922 = vmatprep.subr.bf16.mxu0 0
        %1923 = vmatpush1.bf16.msra.mxu0 %v1848
        %1924 = vmatprep.subr.bf16.mxu0 0
        %1925 = vmatpush1.bf16.msra.mxu0 %v1849
        %1926 = vmatprep.subr.bf16.mxu0 0
        %1927 = vmatpush1.bf16.msra.mxu0 %v1850
        %1928 = vmatprep.subr.bf16.mxu0 0
        %1929 = vmatpush1.bf16.msra.mxu0 %v1851
        %1930 = vmatprep.subr.bf16.mxu0 0
        %1931 = vmatpush1.bf16.msra.mxu0 %v1852
        %1932 = vmatprep.subr.bf16.mxu0 0
        %1933 = vmatpush1.bf16.msra.mxu0 %v1853
        %1934 = vmatprep.subr.bf16.mxu0 0
        %1935 = vmatpush1.bf16.msra.mxu0 %v1854
        %1936 = vmatprep.subr.bf16.mxu0 0
        %1937 = vmatpush1.bf16.msra.mxu0 0
        %1938 = vmatprep.subr.bf16.mxu0 0
        %1939 = vmatpush1.bf16.msra.mxu0 0
        %1940 = vmatprep.subr.bf16.mxu0 0
        %1941 = vmatpush1.bf16.msra.mxu0 0
        %1942 = vmatprep.subr.bf16.mxu0 0
        %1943 = vmatpush1.bf16.msra.mxu0 0
        %1944 = vmatprep.subr.bf16.mxu0 0
        %1945 = vmatpush1.bf16.msra.mxu0 0
        %1946 = vmatprep.subr.bf16.mxu0 0
        %1947 = vmatpush1.bf16.msra.mxu0 0
        %1948 = vmatprep.subr.bf16.mxu0 0
        %1949 = vmatpush1.bf16.msra.mxu0 0
        %1950 = vmatprep.subr.bf16.mxu0 0
        %1951 = vmatpush1.bf16.msra.mxu0 0
        %1952 = vmatprep.mubr.bf16.mxu0 0
        %1953 = vmatmul.mubr.bf16.gmra.mrb[0].mxu0 %v1728
        %v1954 = vpop.f32.mrb[0].mxu0
        %v1955 = vadd.f32 %v1914, %v1954
        %v1956 = vpop.f32.mrb[0].mxu0
        %v1957 = vpop.f32.mrb[0].mxu0
        %v1958 = vadd.f32 %v1917, %v1957
        %v1959 = vpop.f32.mrb[0].mxu0
        %1960 = vdwg.mxu0
        %v1961 = vadd.f32 %v1955, %v1249
        %v1962 = vadd.f32 %v1958, %v1250
        %v1963 = vmul.f32 %v1961, 0.5
        %v1964 = vmul.f32 %v1962, 0.5
        %v1965 = vmul.f32 %v1961, 0.70710677
        %v1966 = vmul.f32 %v1962, 0.70710677
        %vm1967 = vcmp.ge.f32.partialorder %v1965, 0.0
        %vm1968 = vcmp.ge.f32.partialorder %v1966, 0.0
        %v1969 = vsel %vm1967, 1.0, -1.0
        %v1970 = vsel %vm1968, 1.0, -1.0
        %v1971 = vand.u32 2147483647, %v1965
        %v1972 = vand.u32 2147483647, %v1966
        %v1973 = vmul.f32 %v1971, 0.3275911
        %v1974 = vmul.f32 %v1972, 0.3275911
        %v1975 = vadd.f32 %v1973, 1.0
        %v1976 = vadd.f32 %v1974, 1.0
        %v1977 = vrcp.pop %v1975
        %v1978 = vmul.f32 1.0, %v1977
        %v1979 = vrcp.pop %v1976
        %v1980 = vmul.f32 1.0, %v1979
        %v1981 = vmul.f32 %v1978, 1.0614054
        %v1982 = vmul.f32 %v1980, 1.0614054
        %v1983 = vadd.f32 %v1981, -1.4531521
        %v1984 = vadd.f32 %v1982, -1.4531521
        %v1985 = vmul.f32 %v1983, %v1978
        %v1986 = vmul.f32 %v1984, %v1980
        %v1987 = vadd.f32 %v1985, 1.4214138
        %v1988 = vadd.f32 %v1986, 1.4214138
        %v1989 = vmul.f32 %v1987, %v1978
        %v1990 = vmul.f32 %v1988, %v1980
        %v1991 = vadd.f32 %v1989, -0.28449672
        %v1992 = vadd.f32 %v1990, -0.28449672
        %v1993 = vmul.f32 %v1991, %v1978
        %v1994 = vmul.f32 %v1992, %v1980
        %v1995 = vadd.f32 %v1993, 0.2548296
        %v1996 = vadd.f32 %v1994, 0.2548296
        %v1997 = vmul.f32 %v1995, %v1978
        %v1998 = vmul.f32 %v1996, %v1980
        %v1999 = vsub.f32 0.0, %v1971
        %v2000 = vsub.f32 0.0, %v1972
        %v2001 = vmul.f32 %v1999, %v1971
        %v2002 = vmul.f32 %v2000, %v1972
        %v2003 = vmul.f32 %v2001, 1.442695
        %v2004 = vpow.pop %v2003
        %v2005 = vmul.f32 %v2002, 1.442695
        %v2006 = vpow.pop %v2005
        %v2007 = vmul.f32 %v1997, %v2004
        %v2008 = vmul.f32 %v1998, %v2006
        %v2009 = vsub.f32 1.0, %v2007
        %v2010 = vsub.f32 1.0, %v2008
        %v2011 = vmul.f32 %v1969, %v2009
        %v2012 = vmul.f32 %v1970, %v2010
        %v2013 = vadd.f32 %v2011, 1.0
        %v2014 = vadd.f32 %v2012, 1.0
        %v2015 = vmul.f32 %v1963, %v2013
        %v2016 = vmul.f32 %v1964, %v2014
        %s2017 = scalar_lea.vmem [#allocation7], 384
        %v2018 = vld [vmem:[%s2017] sm:$0xf]
        %v2019 = vld [vmem:[%s2017 + $0x4] sm:$0xf]
        %v2020 = vld [vmem:[%s2017 + $0x8] sm:$0xf]
        %v2021 = vld [vmem:[%s2017 + $0xc] sm:$0xf]
        %v2022 = vld [vmem:[%s2017 + $0x10] sm:$0xf]
        %v2023 = vld [vmem:[%s2017 + $0x14] sm:$0xf]
        %v2024 = vld [vmem:[%s2017 + $0x18] sm:$0xf]
        %v2025 = vld [vmem:[%s2017 + $0x1c] sm:$0xf]
        %v2026 = vld [vmem:[%s2017 + $0x20] sm:$0xf]
        %v2027 = vld [vmem:[%s2017 + $0x24] sm:$0xf]
        %v2028 = vld [vmem:[%s2017 + $0x28] sm:$0xf]
        %v2029 = vld [vmem:[%s2017 + $0x2c] sm:$0xf]
        %v2030 = vld [vmem:[%s2017 + $0x30] sm:$0xf]
        %v2031 = vld [vmem:[%s2017 + $0x34] sm:$0xf]
        %v2032 = vld [vmem:[%s2017 + $0x38] sm:$0xf]
        %v2033 = vld [vmem:[%s2017 + $0x3c] sm:$0xf]
        %v2034 = vld [vmem:[%s2017 + $0x40] sm:$0xf]
        %v2035 = vld [vmem:[%s2017 + $0x44] sm:$0xf]
        %v2036 = vld [vmem:[%s2017 + $0x48] sm:$0xf]
        %v2037 = vld [vmem:[%s2017 + $0x4c] sm:$0xf]
        %v2038 = vld [vmem:[%s2017 + $0x50] sm:$0xf]
        %v2039 = vld [vmem:[%s2017 + $0x54] sm:$0xf]
        %v2040 = vld [vmem:[%s2017 + $0x58] sm:$0xf]
        %v2041 = vld [vmem:[%s2017 + $0x5c] sm:$0xf]
        %v2042 = vld [vmem:[%s2017 + $0x60] sm:$0xf]
        %v2043 = vld [vmem:[%s2017 + $0x64] sm:$0xf]
        %v2044 = vld [vmem:[%s2017 + $0x68] sm:$0xf]
        %v2045 = vld [vmem:[%s2017 + $0x6c] sm:$0xf]
        %v2046 = vld [vmem:[%s2017 + $0x70] sm:$0xf]
        %v2047 = vld [vmem:[%s2017 + $0x74] sm:$0xf]
        %v2048 = vld [vmem:[%s2017 + $0x78] sm:$0xf]
        %v2049 = vld [vmem:[%s2017 + $0x7c] sm:$0xf]
        %v2050 = vld [vmem:[%s2017 + $0x80] sm:$0xf]
        %v2051 = vld [vmem:[%s2017 + $0x84] sm:$0xf]
        %v2052 = vld [vmem:[%s2017 + $0x88] sm:$0xf]
        %v2053 = vld [vmem:[%s2017 + $0x8c] sm:$0xf]
        %v2054 = vld [vmem:[%s2017 + $0x90] sm:$0xf]
        %v2055 = vld [vmem:[%s2017 + $0x94] sm:$0xf]
        %v2056 = vld [vmem:[%s2017 + $0x98] sm:$0xf]
        %v2057 = vld [vmem:[%s2017 + $0x9c] sm:$0xf]
        %v2058 = vld [vmem:[%s2017 + $0xa0] sm:$0xf]
        %v2059 = vld [vmem:[%s2017 + $0xa4] sm:$0xf]
        %v2060 = vld [vmem:[%s2017 + $0xa8] sm:$0xf]
        %v2061 = vld [vmem:[%s2017 + $0xac] sm:$0xf]
        %v2062 = vld [vmem:[%s2017 + $0xb0] sm:$0xf]
        %v2063 = vld [vmem:[%s2017 + $0xb4] sm:$0xf]
        %v2064 = vld [vmem:[%s2017 + $0xb8] sm:$0xf]
        %v2065 = vld [vmem:[%s2017 + $0xbc] sm:$0xf]
        %s2066 = scalar_lea.vmem %s4, 2
        %v2067 = vld [vmem:[%s2066] sm:$0x1]
        %vm2070 = vcmask 1043456
        %v2071 = vrot.slane %v2015, 4
        %v2072 = vrot.slane %v2016, 4
        %v2073 = vsel %vm2070, %v2071, %v2072
        %v2076 = vsel %vm2070, 0.0, %v2071
        %v2078 = vsel %vm2070, %v2072, 0.0
        %v2079 = vpack.c.bf16 %v2073, %v2076
        %v2080 = vpack.c.bf16 %v2016, %v2015
        %v2081 = vpack.c.bf16 %v2078, %v2073
        %v2083 = vlaneseq
        %v2084 = vshrl.u32 %v2083, 7
        %v2085 = vsub.s32 0, %v2084
        %v2086 = vrot.slane %v2067, %v2085
        %v2136 = vunpack.c.l.b16 %v2018
        %v2137 = vunpack.c.l.b16 %v2019
        %v2138 = vunpack.c.l.b16 %v2020
        %v2139 = vunpack.c.l.b16 %v2021
        %v2140 = vunpack.c.l.b16 %v2022
        %v2141 = vunpack.c.l.b16 %v2023
        %v2142 = vunpack.c.l.b16 %v2024
        %v2143 = vunpack.c.l.b16 %v2025
        %v2144 = vunpack.c.l.b16 %v2026
        %v2145 = vunpack.c.l.b16 %v2027
        %v2146 = vunpack.c.l.b16 %v2028
        %v2147 = vunpack.c.l.b16 %v2029
        %v2148 = vunpack.c.l.b16 %v2030
        %v2149 = vunpack.c.l.b16 %v2031
        %v2150 = vunpack.c.l.b16 %v2032
        %v2151 = vunpack.c.l.b16 %v2033
        %v2152 = vunpack.c.l.b16 %v2034
        %v2153 = vunpack.c.l.b16 %v2035
        %v2154 = vunpack.c.l.b16 %v2036
        %v2155 = vunpack.c.l.b16 %v2037
        %v2156 = vunpack.c.l.b16 %v2038
        %v2157 = vunpack.c.l.b16 %v2039
        %v2158 = vunpack.c.l.b16 %v2040
        %v2159 = vunpack.c.l.b16 %v2041
        %v2160 = vunpack.c.l.b16 %v2042
        %v2161 = vunpack.c.l.b16 %v2043
        %v2162 = vunpack.c.l.b16 %v2044
        %v2163 = vunpack.c.l.b16 %v2045
        %v2164 = vunpack.c.l.b16 %v2046
        %v2165 = vunpack.c.l.b16 %v2047
        %v2166 = vunpack.c.l.b16 %v2048
        %v2167 = vunpack.c.l.b16 %v2049
        %v2168 = vunpack.c.l.b16 %v2050
        %v2169 = vunpack.c.l.b16 %v2051
        %v2170 = vunpack.c.l.b16 %v2052
        %v2171 = vunpack.c.l.b16 %v2053
        %v2172 = vunpack.c.l.b16 %v2054
        %v2173 = vunpack.c.l.b16 %v2055
        %v2174 = vunpack.c.l.b16 %v2056
        %v2175 = vunpack.c.l.b16 %v2057
        %v2176 = vunpack.c.l.b16 %v2058
        %v2177 = vunpack.c.l.b16 %v2059
        %v2178 = vunpack.c.l.b16 %v2060
        %v2179 = vunpack.c.l.b16 %v2061
        %v2180 = vunpack.c.l.b16 %v2062
        %v2181 = vunpack.c.l.b16 %v2063
        %v2182 = vunpack.c.l.b16 %v2064
        %v2183 = vunpack.c.l.b16 %v2065
        %v2184 = vpack.c.b16 %v2137, %v2136
        %v2185 = vpack.c.b16 %v2139, %v2138
        %v2186 = vpack.c.b16 %v2141, %v2140
        %v2187 = vpack.c.b16 %v2143, %v2142
        %v2188 = vpack.c.b16 %v2145, %v2144
        %v2189 = vpack.c.b16 %v2147, %v2146
        %v2190 = vpack.c.b16 %v2149, %v2148
        %v2191 = vpack.c.b16 %v2151, %v2150
        %v2192 = vpack.c.b16 %v2153, %v2152
        %v2193 = vpack.c.b16 %v2155, %v2154
        %v2194 = vpack.c.b16 %v2157, %v2156
        %v2195 = vpack.c.b16 %v2159, %v2158
        %v2196 = vpack.c.b16 %v2161, %v2160
        %v2197 = vpack.c.b16 %v2163, %v2162
        %v2198 = vpack.c.b16 %v2165, %v2164
        %v2199 = vpack.c.b16 %v2167, %v2166
        %v2200 = vpack.c.b16 %v2169, %v2168
        %v2201 = vpack.c.b16 %v2171, %v2170
        %v2202 = vpack.c.b16 %v2173, %v2172
        %v2203 = vpack.c.b16 %v2175, %v2174
        %v2204 = vpack.c.b16 %v2177, %v2176
        %v2205 = vpack.c.b16 %v2179, %v2178
        %v2206 = vpack.c.b16 %v2181, %v2180
        %v2207 = vpack.c.b16 %v2183, %v2182
        %2232 = vmatprep.subr.bf16.mxu0 0
        %2233 = vmatpush1.bf16.msra.mxu0 %v2184
        %2234 = vmatprep.subr.bf16.mxu0 0
        %2235 = vmatpush1.bf16.msra.mxu0 %v2185
        %2236 = vmatprep.subr.bf16.mxu0 0
        %2237 = vmatpush1.bf16.msra.mxu0 %v2186
        %2238 = vmatprep.subr.bf16.mxu0 0
        %2239 = vmatpush1.bf16.msra.mxu0 %v2187
        %2240 = vmatprep.subr.bf16.mxu0 0
        %2241 = vmatpush1.bf16.msra.mxu0 %v2188
        %2242 = vmatprep.subr.bf16.mxu0 0
        %2243 = vmatpush1.bf16.msra.mxu0 %v2189
        %2244 = vmatprep.subr.bf16.mxu0 0
        %2245 = vmatpush1.bf16.msra.mxu0 %v2190
        %2246 = vmatprep.subr.bf16.mxu0 0
        %2247 = vmatpush1.bf16.msra.mxu0 %v2191
        %2248 = vmatprep.subr.bf16.mxu0 0
        %2249 = vmatpush1.bf16.msra.mxu0 %v2192
        %2250 = vmatprep.subr.bf16.mxu0 0
        %2251 = vmatpush1.bf16.msra.mxu0 %v2193
        %2252 = vmatprep.subr.bf16.mxu0 0
        %2253 = vmatpush1.bf16.msra.mxu0 %v2194
        %2254 = vmatprep.subr.bf16.mxu0 0
        %2255 = vmatpush1.bf16.msra.mxu0 %v2195
        %2256 = vmatprep.subr.bf16.mxu0 0
        %2257 = vmatpush1.bf16.msra.mxu0 %v2196
        %2258 = vmatprep.subr.bf16.mxu0 0
        %2259 = vmatpush1.bf16.msra.mxu0 %v2197
        %2260 = vmatprep.subr.bf16.mxu0 0
        %2261 = vmatpush1.bf16.msra.mxu0 %v2198
        %2262 = vmatprep.subr.bf16.mxu0 0
        %2263 = vmatpush1.bf16.msra.mxu0 %v2199
        %2264 = vmatprep.mubr.bf16.mxu0 %v2080
        %2265 = vmatmul.mubr.bf16.gmra.mrb[0].mxu0 %v2079
        %v2266 = vpop.f32.mrb[0].mxu0
        %v2267 = vadd.f32 %v2086, %v2266
        %v2268 = vpop.f32.mrb[0].mxu0
        %v2269 = vpop.f32.mrb[0].mxu0
        %v2270 = vadd.f32 %v2086, %v2269
        %v2271 = vpop.f32.mrb[0].mxu0
        %2272 = vdwg.mxu0
        %2273 = vmatprep.subr.bf16.mxu0 0
        %2274 = vmatpush1.bf16.msra.mxu0 %v2200
        %2275 = vmatprep.subr.bf16.mxu0 0
        %2276 = vmatpush1.bf16.msra.mxu0 %v2201
        %2277 = vmatprep.subr.bf16.mxu0 0
        %2278 = vmatpush1.bf16.msra.mxu0 %v2202
        %2279 = vmatprep.subr.bf16.mxu0 0
        %2280 = vmatpush1.bf16.msra.mxu0 %v2203
        %2281 = vmatprep.subr.bf16.mxu0 0
        %2282 = vmatpush1.bf16.msra.mxu0 %v2204
        %2283 = vmatprep.subr.bf16.mxu0 0
        %2284 = vmatpush1.bf16.msra.mxu0 %v2205
        %2285 = vmatprep.subr.bf16.mxu0 0
        %2286 = vmatpush1.bf16.msra.mxu0 %v2206
        %2287 = vmatprep.subr.bf16.mxu0 0
        %2288 = vmatpush1.bf16.msra.mxu0 %v2207
        %2289 = vmatprep.subr.bf16.mxu0 0
        %2290 = vmatpush1.bf16.msra.mxu0 0
        %2291 = vmatprep.subr.bf16.mxu0 0
        %2292 = vmatpush1.bf16.msra.mxu0 0
        %2293 = vmatprep.subr.bf16.mxu0 0
        %2294 = vmatpush1.bf16.msra.mxu0 0
        %2295 = vmatprep.subr.bf16.mxu0 0
        %2296 = vmatpush1.bf16.msra.mxu0 0
        %2297 = vmatprep.subr.bf16.mxu0 0
        %2298 = vmatpush1.bf16.msra.mxu0 0
        %2299 = vmatprep.subr.bf16.mxu0 0
        %2300 = vmatpush1.bf16.msra.mxu0 0
        %2301 = vmatprep.subr.bf16.mxu0 0
        %2302 = vmatpush1.bf16.msra.mxu0 0
        %2303 = vmatprep.subr.bf16.mxu0 0
        %2304 = vmatpush1.bf16.msra.mxu0 0
        %2305 = vmatprep.mubr.bf16.mxu0 0
        %2306 = vmatmul.mubr.bf16.gmra.mrb[0].mxu0 %v2081
        %v2307 = vpop.f32.mrb[0].mxu0
        %v2308 = vadd.f32 %v2267, %v2307
        %v2309 = vpop.f32.mrb[0].mxu0
        %v2310 = vpop.f32.mrb[0].mxu0
        %v2311 = vadd.f32 %v2270, %v2310
        %v2312 = vpop.f32.mrb[0].mxu0
        %2313 = vdwg.mxu0
        %v2314 = vmul.f32 %v2308, 0.5
        %v2315 = vmul.f32 %v2311, 0.5
        %v2316 = vmul.f32 %v2308, 0.70710677
        %v2317 = vmul.f32 %v2311, 0.70710677
        %vm2318 = vcmp.ge.f32.partialorder %v2316, 0.0
        %vm2319 = vcmp.ge.f32.partialorder %v2317, 0.0
        %v2320 = vsel %vm2318, 1.0, -1.0
        %v2321 = vsel %vm2319, 1.0, -1.0
        %v2322 = vand.u32 2147483647, %v2316
        %v2323 = vand.u32 2147483647, %v2317
        %v2324 = vmul.f32 %v2322, 0.3275911
        %v2325 = vmul.f32 %v2323, 0.3275911
        %v2326 = vadd.f32 %v2324, 1.0
        %v2327 = vadd.f32 %v2325, 1.0
        %v2328 = vrcp.pop %v2326
        %v2329 = vmul.f32 1.0, %v2328
        %v2330 = vrcp.pop %v2327
        %v2331 = vmul.f32 1.0, %v2330
        %v2332 = vmul.f32 %v2329, 1.0614054
        %v2333 = vmul.f32 %v2331, 1.0614054
        %v2334 = vadd.f32 %v2332, -1.4531521
        %v2335 = vadd.f32 %v2333, -1.4531521
        %v2336 = vmul.f32 %v2334, %v2329
        %v2337 = vmul.f32 %v2335, %v2331
        %v2338 = vadd.f32 %v2336, 1.4214138
        %v2339 = vadd.f32 %v2337, 1.4214138
        %v2340 = vmul.f32 %v2338, %v2329
        %v2341 = vmul.f32 %v2339, %v2331
        %v2342 = vadd.f32 %v2340, -0.28449672
        %v2343 = vadd.f32 %v2341, -0.28449672
        %v2344 = vmul.f32 %v2342, %v2329
        %v2345 = vmul.f32 %v2343, %v2331
        %v2346 = vadd.f32 %v2344, 0.2548296
        %v2347 = vadd.f32 %v2345, 0.2548296
        %v2348 = vmul.f32 %v2346, %v2329
        %v2349 = vmul.f32 %v2347, %v2331
        %v2350 = vsub.f32 0.0, %v2322
        %v2351 = vsub.f32 0.0, %v2323
        %v2352 = vmul.f32 %v2350, %v2322
        %v2353 = vmul.f32 %v2351, %v2323
        %v2354 = vmul.f32 %v2352, 1.442695
        %v2355 = vpow.pop %v2354
        %v2356 = vmul.f32 %v2353, 1.442695
        %v2357 = vpow.pop %v2356
        %v2358 = vmul.f32 %v2348, %v2355
        %v2359 = vmul.f32 %v2349, %v2357
        %v2360 = vsub.f32 1.0, %v2358
        %v2361 = vsub.f32 1.0, %v2359
        %v2362 = vmul.f32 %v2320, %v2360
        %v2363 = vmul.f32 %v2321, %v2361
        %v2364 = vadd.f32 %v2362, 1.0
        %v2365 = vadd.f32 %v2363, 1.0
        %v2366 = vmul.f32 %v2314, %v2364
        %v2367 = vmul.f32 %v2315, %v2365
        %s2368 = scalar_lea.vmem [#allocation8], 384
        %v2369 = vld [vmem:[%s2368] sm:$0xf]
        %v2370 = vld [vmem:[%s2368 + $0x4] sm:$0xf]
        %v2371 = vld [vmem:[%s2368 + $0x8] sm:$0xf]
        %v2372 = vld [vmem:[%s2368 + $0xc] sm:$0xf]
        %v2373 = vld [vmem:[%s2368 + $0x10] sm:$0xf]
        %v2374 = vld [vmem:[%s2368 + $0x14] sm:$0xf]
        %v2375 = vld [vmem:[%s2368 + $0x18] sm:$0xf]
        %v2376 = vld [vmem:[%s2368 + $0x1c] sm:$0xf]
        %v2377 = vld [vmem:[%s2368 + $0x20] sm:$0xf]
        %v2378 = vld [vmem:[%s2368 + $0x24] sm:$0xf]
        %v2379 = vld [vmem:[%s2368 + $0x28] sm:$0xf]
        %v2380 = vld [vmem:[%s2368 + $0x2c] sm:$0xf]
        %v2381 = vld [vmem:[%s2368 + $0x30] sm:$0xf]
        %v2382 = vld [vmem:[%s2368 + $0x34] sm:$0xf]
        %v2383 = vld [vmem:[%s2368 + $0x38] sm:$0xf]
        %v2384 = vld [vmem:[%s2368 + $0x3c] sm:$0xf]
        %v2385 = vld [vmem:[%s2368 + $0x40] sm:$0xf]
        %v2386 = vld [vmem:[%s2368 + $0x44] sm:$0xf]
        %v2387 = vld [vmem:[%s2368 + $0x48] sm:$0xf]
        %v2388 = vld [vmem:[%s2368 + $0x4c] sm:$0xf]
        %v2389 = vld [vmem:[%s2368 + $0x50] sm:$0xf]
        %v2390 = vld [vmem:[%s2368 + $0x54] sm:$0xf]
        %v2391 = vld [vmem:[%s2368 + $0x58] sm:$0xf]
        %v2392 = vld [vmem:[%s2368 + $0x5c] sm:$0xf]
        %v2393 = vld [vmem:[%s2368 + $0x60] sm:$0xf]
        %v2394 = vld [vmem:[%s2368 + $0x64] sm:$0xf]
        %v2395 = vld [vmem:[%s2368 + $0x68] sm:$0xf]
        %v2396 = vld [vmem:[%s2368 + $0x6c] sm:$0xf]
        %v2397 = vld [vmem:[%s2368 + $0x70] sm:$0xf]
        %v2398 = vld [vmem:[%s2368 + $0x74] sm:$0xf]
        %v2399 = vld [vmem:[%s2368 + $0x78] sm:$0xf]
        %v2400 = vld [vmem:[%s2368 + $0x7c] sm:$0xf]
        %v2401 = vld [vmem:[%s2368 + $0x80] sm:$0xf]
        %v2402 = vld [vmem:[%s2368 + $0x84] sm:$0xf]
        %v2403 = vld [vmem:[%s2368 + $0x88] sm:$0xf]
        %v2404 = vld [vmem:[%s2368 + $0x8c] sm:$0xf]
        %v2405 = vld [vmem:[%s2368 + $0x90] sm:$0xf]
        %v2406 = vld [vmem:[%s2368 + $0x94] sm:$0xf]
        %v2407 = vld [vmem:[%s2368 + $0x98] sm:$0xf]
        %v2408 = vld [vmem:[%s2368 + $0x9c] sm:$0xf]
        %v2409 = vld [vmem:[%s2368 + $0xa0] sm:$0xf]
        %v2410 = vld [vmem:[%s2368 + $0xa4] sm:$0xf]
        %v2411 = vld [vmem:[%s2368 + $0xa8] sm:$0xf]
        %v2412 = vld [vmem:[%s2368 + $0xac] sm:$0xf]
        %v2413 = vld [vmem:[%s2368 + $0xb0] sm:$0xf]
        %v2414 = vld [vmem:[%s2368 + $0xb4] sm:$0xf]
        %v2415 = vld [vmem:[%s2368 + $0xb8] sm:$0xf]
        %v2416 = vld [vmem:[%s2368 + $0xbc] sm:$0xf]
        %s2417 = scalar_lea.vmem %s6, 2
        %v2418 = vld [vmem:[%s2417] sm:$0x1]
        %v2421 = vrot.slane %v2366, 4
        %v2422 = vrot.slane %v2367, 4
        %v2423 = vsel %vm2070, %v2421, %v2422
        %v2426 = vsel %vm2070, 0.0, %v2421
        %v2428 = vsel %vm2070, %v2422, 0.0
        %v2429 = vpack.c.bf16 %v2423, %v2426
        %v2430 = vpack.c.bf16 %v2367, %v2366
        %v2431 = vpack.c.bf16 %v2428, %v2423
        %v2433 = vlaneseq
        %v2434 = vshrl.u32 %v2433, 7
        %v2435 = vsub.s32 0, %v2434
        %v2436 = vrot.slane %v2418, %v2435
        %v2486 = vunpack.c.l.b16 %v2369
        %v2487 = vunpack.c.l.b16 %v2370
        %v2488 = vunpack.c.l.b16 %v2371
        %v2489 = vunpack.c.l.b16 %v2372
        %v2490 = vunpack.c.l.b16 %v2373
        %v2491 = vunpack.c.l.b16 %v2374
        %v2492 = vunpack.c.l.b16 %v2375
        %v2493 = vunpack.c.l.b16 %v2376
        %v2494 = vunpack.c.l.b16 %v2377
        %v2495 = vunpack.c.l.b16 %v2378
        %v2496 = vunpack.c.l.b16 %v2379
        %v2497 = vunpack.c.l.b16 %v2380
        %v2498 = vunpack.c.l.b16 %v2381
        %v2499 = vunpack.c.l.b16 %v2382
        %v2500 = vunpack.c.l.b16 %v2383
        %v2501 = vunpack.c.l.b16 %v2384
        %v2502 = vunpack.c.l.b16 %v2385
        %v2503 = vunpack.c.l.b16 %v2386
        %v2504 = vunpack.c.l.b16 %v2387
        %v2505 = vunpack.c.l.b16 %v2388
        %v2506 = vunpack.c.l.b16 %v2389
        %v2507 = vunpack.c.l.b16 %v2390
        %v2508 = vunpack.c.l.b16 %v2391
        %v2509 = vunpack.c.l.b16 %v2392
        %v2510 = vunpack.c.l.b16 %v2393
        %v2511 = vunpack.c.l.b16 %v2394
        %v2512 = vunpack.c.l.b16 %v2395
        %v2513 = vunpack.c.l.b16 %v2396
        %v2514 = vunpack.c.l.b16 %v2397
        %v2515 = vunpack.c.l.b16 %v2398
        %v2516 = vunpack.c.l.b16 %v2399
        %v2517 = vunpack.c.l.b16 %v2400
        %v2518 = vunpack.c.l.b16 %v2401
        %v2519 = vunpack.c.l.b16 %v2402
        %v2520 = vunpack.c.l.b16 %v2403
        %v2521 = vunpack.c.l.b16 %v2404
        %v2522 = vunpack.c.l.b16 %v2405
        %v2523 = vunpack.c.l.b16 %v2406
        %v2524 = vunpack.c.l.b16 %v2407
        %v2525 = vunpack.c.l.b16 %v2408
        %v2526 = vunpack.c.l.b16 %v2409
        %v2527 = vunpack.c.l.b16 %v2410
        %v2528 = vunpack.c.l.b16 %v2411
        %v2529 = vunpack.c.l.b16 %v2412
        %v2530 = vunpack.c.l.b16 %v2413
        %v2531 = vunpack.c.l.b16 %v2414
        %v2532 = vunpack.c.l.b16 %v2415
        %v2533 = vunpack.c.l.b16 %v2416
        %v2534 = vpack.c.b16 %v2487, %v2486
        %v2535 = vpack.c.b16 %v2489, %v2488
        %v2536 = vpack.c.b16 %v2491, %v2490
        %v2537 = vpack.c.b16 %v2493, %v2492
        %v2538 = vpack.c.b16 %v2495, %v2494
        %v2539 = vpack.c.b16 %v2497, %v2496
        %v2540 = vpack.c.b16 %v2499, %v2498
        %v2541 = vpack.c.b16 %v2501, %v2500
        %v2542 = vpack.c.b16 %v2503, %v2502
        %v2543 = vpack.c.b16 %v2505, %v2504
        %v2544 = vpack.c.b16 %v2507, %v2506
        %v2545 = vpack.c.b16 %v2509, %v2508
        %v2546 = vpack.c.b16 %v2511, %v2510
        %v2547 = vpack.c.b16 %v2513, %v2512
        %v2548 = vpack.c.b16 %v2515, %v2514
        %v2549 = vpack.c.b16 %v2517, %v2516
        %v2550 = vpack.c.b16 %v2519, %v2518
        %v2551 = vpack.c.b16 %v2521, %v2520
        %v2552 = vpack.c.b16 %v2523, %v2522
        %v2553 = vpack.c.b16 %v2525, %v2524
        %v2554 = vpack.c.b16 %v2527, %v2526
        %v2555 = vpack.c.b16 %v2529, %v2528
        %v2556 = vpack.c.b16 %v2531, %v2530
        %v2557 = vpack.c.b16 %v2533, %v2532
        %2582 = vmatprep.subr.bf16.mxu0 0
        %2583 = vmatpush1.bf16.msra.mxu0 %v2534
        %2584 = vmatprep.subr.bf16.mxu0 0
        %2585 = vmatpush1.bf16.msra.mxu0 %v2535
        %2586 = vmatprep.subr.bf16.mxu0 0
        %2587 = vmatpush1.bf16.msra.mxu0 %v2536
        %2588 = vmatprep.subr.bf16.mxu0 0
        %2589 = vmatpush1.bf16.msra.mxu0 %v2537
        %2590 = vmatprep.subr.bf16.mxu0 0
        %2591 = vmatpush1.bf16.msra.mxu0 %v2538
        %2592 = vmatprep.subr.bf16.mxu0 0
        %2593 = vmatpush1.bf16.msra.mxu0 %v2539
        %2594 = vmatprep.subr.bf16.mxu0 0
        %2595 = vmatpush1.bf16.msra.mxu0 %v2540
        %2596 = vmatprep.subr.bf16.mxu0 0
        %2597 = vmatpush1.bf16.msra.mxu0 %v2541
        %2598 = vmatprep.subr.bf16.mxu0 0
        %2599 = vmatpush1.bf16.msra.mxu0 %v2542
        %2600 = vmatprep.subr.bf16.mxu0 0
        %2601 = vmatpush1.bf16.msra.mxu0 %v2543
        %2602 = vmatprep.subr.bf16.mxu0 0
        %2603 = vmatpush1.bf16.msra.mxu0 %v2544
        %2604 = vmatprep.subr.bf16.mxu0 0
        %2605 = vmatpush1.bf16.msra.mxu0 %v2545
        %2606 = vmatprep.subr.bf16.mxu0 0
        %2607 = vmatpush1.bf16.msra.mxu0 %v2546
        %2608 = vmatprep.subr.bf16.mxu0 0
        %2609 = vmatpush1.bf16.msra.mxu0 %v2547
        %2610 = vmatprep.subr.bf16.mxu0 0
        %2611 = vmatpush1.bf16.msra.mxu0 %v2548
        %2612 = vmatprep.subr.bf16.mxu0 0
        %2613 = vmatpush1.bf16.msra.mxu0 %v2549
        %2614 = vmatprep.mubr.bf16.mxu0 %v2430
        %2615 = vmatmul.mubr.bf16.gmra.mrb[0].mxu0 %v2429
        %v2616 = vpop.f32.mrb[0].mxu0
        %v2617 = vadd.f32 %v2436, %v2616
        %v2618 = vpop.f32.mrb[0].mxu0
        %v2619 = vpop.f32.mrb[0].mxu0
        %v2620 = vadd.f32 %v2436, %v2619
        %v2621 = vpop.f32.mrb[0].mxu0
        %2622 = vdwg.mxu0
        %2623 = vmatprep.subr.bf16.mxu0 0
        %2624 = vmatpush1.bf16.msra.mxu0 %v2550
        %2625 = vmatprep.subr.bf16.mxu0 0
        %2626 = vmatpush1.bf16.msra.mxu0 %v2551
        %2627 = vmatprep.subr.bf16.mxu0 0
        %2628 = vmatpush1.bf16.msra.mxu0 %v2552
        %2629 = vmatprep.subr.bf16.mxu0 0
        %2630 = vmatpush1.bf16.msra.mxu0 %v2553
        %2631 = vmatprep.subr.bf16.mxu0 0
        %2632 = vmatpush1.bf16.msra.mxu0 %v2554
        %2633 = vmatprep.subr.bf16.mxu0 0
        %2634 = vmatpush1.bf16.msra.mxu0 %v2555
        %2635 = vmatprep.subr.bf16.mxu0 0
        %2636 = vmatpush1.bf16.msra.mxu0 %v2556
        %2637 = vmatprep.subr.bf16.mxu0 0
        %2638 = vmatpush1.bf16.msra.mxu0 %v2557
        %2639 = vmatprep.subr.bf16.mxu0 0
        %2640 = vmatpush1.bf16.msra.mxu0 0
        %2641 = vmatprep.subr.bf16.mxu0 0
        %2642 = vmatpush1.bf16.msra.mxu0 0
        %2643 = vmatprep.subr.bf16.mxu0 0
        %2644 = vmatpush1.bf16.msra.mxu0 0
        %2645 = vmatprep.subr.bf16.mxu0 0
        %2646 = vmatpush1.bf16.msra.mxu0 0
        %2647 = vmatprep.subr.bf16.mxu0 0
        %2648 = vmatpush1.bf16.msra.mxu0 0
        %2649 = vmatprep.subr.bf16.mxu0 0
        %2650 = vmatpush1.bf16.msra.mxu0 0
        %2651 = vmatprep.subr.bf16.mxu0 0
        %2652 = vmatpush1.bf16.msra.mxu0 0
        %2653 = vmatprep.subr.bf16.mxu0 0
        %2654 = vmatpush1.bf16.msra.mxu0 0
        %2655 = vmatprep.mubr.bf16.mxu0 0
        %2656 = vmatmul.mubr.bf16.gmra.mrb[0].mxu0 %v2431
        %v2657 = vpop.f32.mrb[0].mxu0
        %v2658 = vadd.f32 %v2617, %v2657
        %v2659 = vpop.f32.mrb[0].mxu0
        %v2660 = vpop.f32.mrb[0].mxu0
        %v2661 = vadd.f32 %v2620, %v2660
        %v2662 = vpop.f32.mrb[0].mxu0
        %2663 = vdwg.mxu0
        %v2664 = vadd.f32 %v2658, %v1961
        %v2665 = vadd.f32 %v2661, %v1962
        %v2666 = vpack.c.bf16 %v2665, %v2664
        %v2667 = vld [vmem:[#allocation10] sm:$0xf]
        %v2668 = vld [vmem:[#allocation10 + $0x4] sm:$0xf]
        %v2669 = vld [vmem:[#allocation10 + $0x8] sm:$0xf]
        %v2670 = vld [vmem:[#allocation10 + $0xc] sm:$0xf]
        %v2671 = vld [vmem:[#allocation10 + $0x10] sm:$0xf]
        %v2672 = vld [vmem:[#allocation10 + $0x14] sm:$0xf]
        %v2673 = vld [vmem:[#allocation10 + $0x18] sm:$0xf]
        %v2674 = vld [vmem:[#allocation10 + $0x1c] sm:$0xf]
        %v2675 = vld [vmem:[#allocation10 + $0x20] sm:$0xf]
        %v2676 = vld [vmem:[#allocation10 + $0x24] sm:$0xf]
        %v2677 = vld [vmem:[#allocation10 + $0x28] sm:$0xf]
        %v2678 = vld [vmem:[#allocation10 + $0x2c] sm:$0xf]
        %v2679 = vld [vmem:[#allocation10 + $0x30] sm:$0xf]
        %v2680 = vld [vmem:[#allocation10 + $0x34] sm:$0xf]
        %v2681 = vld [vmem:[#allocation10 + $0x38] sm:$0xf]
        %v2682 = vld [vmem:[#allocation10 + $0x3c] sm:$0xf]
        %v2683 = vld [vmem:[%s8] sm:$0x1]
        %v2685 = vlaneseq
        %v2686 = vshrl.u32 %v2685, 7
        %v2687 = vsub.s32 0, %v2686
        %v2688 = vrot.slane %v2683, %v2687
        %v2706 = vunpack.c.l.b16 %v2667
        %v2707 = vunpack.c.l.b16 %v2668
        %v2708 = vunpack.c.l.b16 %v2669
        %v2709 = vunpack.c.l.b16 %v2670
        %v2710 = vunpack.c.l.b16 %v2671
        %v2711 = vunpack.c.l.b16 %v2672
        %v2712 = vunpack.c.l.b16 %v2673
        %v2713 = vunpack.c.l.b16 %v2674
        %v2714 = vunpack.c.l.b16 %v2675
        %v2715 = vunpack.c.l.b16 %v2676
        %v2716 = vunpack.c.l.b16 %v2677
        %v2717 = vunpack.c.l.b16 %v2678
        %v2718 = vunpack.c.l.b16 %v2679
        %v2719 = vunpack.c.l.b16 %v2680
        %v2720 = vunpack.c.l.b16 %v2681
        %v2721 = vunpack.c.l.b16 %v2682
        %v2722 = vpack.c.b16 %v2707, %v2706
        %v2723 = vpack.c.b16 %v2709, %v2708
        %v2724 = vpack.c.b16 %v2711, %v2710
        %v2725 = vpack.c.b16 %v2713, %v2712
        %v2726 = vpack.c.b16 %v2715, %v2714
        %v2727 = vpack.c.b16 %v2717, %v2716
        %v2728 = vpack.c.b16 %v2719, %v2718
        %v2729 = vpack.c.b16 %v2721, %v2720
        %2738 = vmatprep.subr.bf16.mxu0 0
        %2739 = vmatpush1.bf16.msra.mxu0 %v2722
        %2740 = vmatprep.subr.bf16.mxu0 0
        %2741 = vmatpush1.bf16.msra.mxu0 %v2723
        %2742 = vmatprep.subr.bf16.mxu0 0
        %2743 = vmatpush1.bf16.msra.mxu0 %v2724
        %2744 = vmatprep.subr.bf16.mxu0 0
        %2745 = vmatpush1.bf16.msra.mxu0 %v2725
        %2746 = vmatprep.subr.bf16.mxu0 0
        %2747 = vmatpush1.bf16.msra.mxu0 %v2726
        %2748 = vmatprep.subr.bf16.mxu0 0
        %2749 = vmatpush1.bf16.msra.mxu0 %v2727
        %2750 = vmatprep.subr.bf16.mxu0 0
        %2751 = vmatpush1.bf16.msra.mxu0 %v2728
        %2752 = vmatprep.subr.bf16.mxu0 0
        %2753 = vmatpush1.bf16.msra.mxu0 %v2729
        %2754 = vmatprep.subr.bf16.mxu0 0
        %2755 = vmatpush1.bf16.msra.mxu0 0
        %2756 = vmatprep.subr.bf16.mxu0 0
        %2757 = vmatpush1.bf16.msra.mxu0 0
        %2758 = vmatprep.subr.bf16.mxu0 0
        %2759 = vmatpush1.bf16.msra.mxu0 0
        %2760 = vmatprep.subr.bf16.mxu0 0
        %2761 = vmatpush1.bf16.msra.mxu0 0
        %2762 = vmatprep.subr.bf16.mxu0 0
        %2763 = vmatpush1.bf16.msra.mxu0 0
        %2764 = vmatprep.subr.bf16.mxu0 0
        %2765 = vmatpush1.bf16.msra.mxu0 0
        %2766 = vmatprep.subr.bf16.mxu0 0
        %2767 = vmatpush1.bf16.msra.mxu0 0
        %2768 = vmatprep.subr.bf16.mxu0 0
        %2769 = vmatpush1.bf16.msra.mxu0 0
        %2770 = vmatprep.mubr.bf16.mxu0 0
        %2771 = vmatmul.mubr.bf16.gmra.mrb[0].mxu0 %v2666
        %v2772 = vpop.f32.mrb[0].mxu0
        %v2773 = vadd.f32 %v2688, %v2772
        %v2774 = vpop.f32.mrb[0].mxu0
        %v2775 = vpop.f32.mrb[0].mxu0
        %v2776 = vadd.f32 %v2688, %v2775
        %v2777 = vpop.f32.mrb[0].mxu0
        %2778 = vdwg.mxu0
        %v2779 = vmul.f32 %v2664, 0.5
        %v2780 = vmul.f32 %v2665, 0.5
        %v2781 = vmul.f32 %v2664, 0.70710677
        %v2782 = vmul.f32 %v2665, 0.70710677
        %vm2783 = vcmp.ge.f32.partialorder %v2781, 0.0
        %vm2784 = vcmp.ge.f32.partialorder %v2782, 0.0
        %v2785 = vsel %vm2783, 1.0, -1.0
        %v2786 = vsel %vm2784, 1.0, -1.0
        %v2787 = vand.u32 2147483647, %v2781
        %v2788 = vand.u32 2147483647, %v2782
        %v2789 = vmul.f32 %v2787, 0.3275911
        %v2790 = vmul.f32 %v2788, 0.3275911
        %v2791 = vadd.f32 %v2789, 1.0
        %v2792 = vadd.f32 %v2790, 1.0
        %v2793 = vrcp.pop %v2791
        %v2794 = vmul.f32 1.0, %v2793
        %v2795 = vrcp.pop %v2792
        %v2796 = vmul.f32 1.0, %v2795
        %v2797 = vmul.f32 %v2794, 1.0614054
        %v2798 = vmul.f32 %v2796, 1.0614054
        %v2799 = vadd.f32 %v2797, -1.4531521
        %v2800 = vadd.f32 %v2798, -1.4531521
        %v2801 = vmul.f32 %v2799, %v2794
        %v2802 = vmul.f32 %v2800, %v2796
        %v2803 = vadd.f32 %v2801, 1.4214138
        %v2804 = vadd.f32 %v2802, 1.4214138
        %v2805 = vmul.f32 %v2803, %v2794
        %v2806 = vmul.f32 %v2804, %v2796
        %v2807 = vadd.f32 %v2805, -0.28449672
        %v2808 = vadd.f32 %v2806, -0.28449672
        %v2809 = vmul.f32 %v2807, %v2794
        %v2810 = vmul.f32 %v2808, %v2796
        %v2811 = vadd.f32 %v2809, 0.2548296
        %v2812 = vadd.f32 %v2810, 0.2548296
        %v2813 = vmul.f32 %v2811, %v2794
        %v2814 = vmul.f32 %v2812, %v2796
        %v2815 = vsub.f32 0.0, %v2787
        %v2816 = vsub.f32 0.0, %v2788
        %v2817 = vmul.f32 %v2815, %v2787
        %v2818 = vmul.f32 %v2816, %v2788
        %v2819 = vmul.f32 %v2817, 1.442695
        %v2820 = vpow.pop %v2819
        %v2821 = vmul.f32 %v2818, 1.442695
        %v2822 = vpow.pop %v2821
        %v2823 = vmul.f32 %v2813, %v2820
        %v2824 = vmul.f32 %v2814, %v2822
        %v2825 = vsub.f32 1.0, %v2823
        %v2826 = vsub.f32 1.0, %v2824
        %v2827 = vmul.f32 %v2785, %v2825
        %v2828 = vmul.f32 %v2786, %v2826
        %v2829 = vadd.f32 %v2827, 1.0
        %v2830 = vadd.f32 %v2828, 1.0
        %v2831 = vmul.f32 %v2779, %v2829
        %v2832 = vmul.f32 %v2780, %v2830
        %s2833 = scalar_lea.vmem [#allocation7], 576
        %v2834 = vld [vmem:[%s2833] sm:$0xf]
        %v2835 = vld [vmem:[%s2833 + $0x4] sm:$0xf]
        %v2836 = vld [vmem:[%s2833 + $0x8] sm:$0xf]
        %v2837 = vld [vmem:[%s2833 + $0xc] sm:$0xf]
        %v2838 = vld [vmem:[%s2833 + $0x10] sm:$0xf]
        %v2839 = vld [vmem:[%s2833 + $0x14] sm:$0xf]
        %v2840 = vld [vmem:[%s2833 + $0x18] sm:$0xf]
        %v2841 = vld [vmem:[%s2833 + $0x1c] sm:$0xf]
        %v2842 = vld [vmem:[%s2833 + $0x20] sm:$0xf]
        %v2843 = vld [vmem:[%s2833 + $0x24] sm:$0xf]
        %v2844 = vld [vmem:[%s2833 + $0x28] sm:$0xf]
        %v2845 = vld [vmem:[%s2833 + $0x2c] sm:$0xf]
        %v2846 = vld [vmem:[%s2833 + $0x30] sm:$0xf]
        %v2847 = vld [vmem:[%s2833 + $0x34] sm:$0xf]
        %v2848 = vld [vmem:[%s2833 + $0x38] sm:$0xf]
        %v2849 = vld [vmem:[%s2833 + $0x3c] sm:$0xf]
        %v2850 = vld [vmem:[%s2833 + $0x40] sm:$0xf]
        %v2851 = vld [vmem:[%s2833 + $0x44] sm:$0xf]
        %v2852 = vld [vmem:[%s2833 + $0x48] sm:$0xf]
        %v2853 = vld [vmem:[%s2833 + $0x4c] sm:$0xf]
        %v2854 = vld [vmem:[%s2833 + $0x50] sm:$0xf]
        %v2855 = vld [vmem:[%s2833 + $0x54] sm:$0xf]
        %v2856 = vld [vmem:[%s2833 + $0x58] sm:$0xf]
        %v2857 = vld [vmem:[%s2833 + $0x5c] sm:$0xf]
        %v2858 = vld [vmem:[%s2833 + $0x60] sm:$0xf]
        %v2859 = vld [vmem:[%s2833 + $0x64] sm:$0xf]
        %v2860 = vld [vmem:[%s2833 + $0x68] sm:$0xf]
        %v2861 = vld [vmem:[%s2833 + $0x6c] sm:$0xf]
        %v2862 = vld [vmem:[%s2833 + $0x70] sm:$0xf]
        %v2863 = vld [vmem:[%s2833 + $0x74] sm:$0xf]
        %v2864 = vld [vmem:[%s2833 + $0x78] sm:$0xf]
        %v2865 = vld [vmem:[%s2833 + $0x7c] sm:$0xf]
        %v2866 = vld [vmem:[%s2833 + $0x80] sm:$0xf]
        %v2867 = vld [vmem:[%s2833 + $0x84] sm:$0xf]
        %v2868 = vld [vmem:[%s2833 + $0x88] sm:$0xf]
        %v2869 = vld [vmem:[%s2833 + $0x8c] sm:$0xf]
        %v2870 = vld [vmem:[%s2833 + $0x90] sm:$0xf]
        %v2871 = vld [vmem:[%s2833 + $0x94] sm:$0xf]
        %v2872 = vld [vmem:[%s2833 + $0x98] sm:$0xf]
        %v2873 = vld [vmem:[%s2833 + $0x9c] sm:$0xf]
        %v2874 = vld [vmem:[%s2833 + $0xa0] sm:$0xf]
        %v2875 = vld [vmem:[%s2833 + $0xa4] sm:$0xf]
        %v2876 = vld [vmem:[%s2833 + $0xa8] sm:$0xf]
        %v2877 = vld [vmem:[%s2833 + $0xac] sm:$0xf]
        %v2878 = vld [vmem:[%s2833 + $0xb0] sm:$0xf]
        %v2879 = vld [vmem:[%s2833 + $0xb4] sm:$0xf]
        %v2880 = vld [vmem:[%s2833 + $0xb8] sm:$0xf]
        %v2881 = vld [vmem:[%s2833 + $0xbc] sm:$0xf]
        %s2882 = scalar_lea.vmem %s4, 3
        %v2883 = vld [vmem:[%s2882] sm:$0x1]
        %v2884 = vpack.c.bf16 %v2831, 0.0
        %v2885 = vpack.c.bf16 %v2832, %v2831
        %v2886 = vpack.c.bf16 0.0, %v2832
        %v2888 = vlaneseq
        %v2889 = vshrl.u32 %v2888, 7
        %v2890 = vsub.s32 0, %v2889
        %v2891 = vrot.slane %v2883, %v2890
        %v2941 = vunpack.c.l.b16 %v2834
        %v2942 = vunpack.c.l.b16 %v2835
        %v2943 = vunpack.c.l.b16 %v2836
        %v2944 = vunpack.c.l.b16 %v2837
        %v2945 = vunpack.c.l.b16 %v2838
        %v2946 = vunpack.c.l.b16 %v2839
        %v2947 = vunpack.c.l.b16 %v2840
        %v2948 = vunpack.c.l.b16 %v2841
        %v2949 = vunpack.c.l.b16 %v2842
        %v2950 = vunpack.c.l.b16 %v2843
        %v2951 = vunpack.c.l.b16 %v2844
        %v2952 = vunpack.c.l.b16 %v2845
        %v2953 = vunpack.c.l.b16 %v2846
        %v2954 = vunpack.c.l.b16 %v2847
        %v2955 = vunpack.c.l.b16 %v2848
        %v2956 = vunpack.c.l.b16 %v2849
        %v2957 = vunpack.c.l.b16 %v2850
        %v2958 = vunpack.c.l.b16 %v2851
        %v2959 = vunpack.c.l.b16 %v2852
        %v2960 = vunpack.c.l.b16 %v2853
        %v2961 = vunpack.c.l.b16 %v2854
        %v2962 = vunpack.c.l.b16 %v2855
        %v2963 = vunpack.c.l.b16 %v2856
        %v2964 = vunpack.c.l.b16 %v2857
        %v2965 = vunpack.c.l.b16 %v2858
        %v2966 = vunpack.c.l.b16 %v2859
        %v2967 = vunpack.c.l.b16 %v2860
        %v2968 = vunpack.c.l.b16 %v2861
        %v2969 = vunpack.c.l.b16 %v2862
        %v2970 = vunpack.c.l.b16 %v2863
        %v2971 = vunpack.c.l.b16 %v2864
        %v2972 = vunpack.c.l.b16 %v2865
        %v2973 = vunpack.c.l.b16 %v2866
        %v2974 = vunpack.c.l.b16 %v2867
        %v2975 = vunpack.c.l.b16 %v2868
        %v2976 = vunpack.c.l.b16 %v2869
        %v2977 = vunpack.c.l.b16 %v2870
        %v2978 = vunpack.c.l.b16 %v2871
        %v2979 = vunpack.c.l.b16 %v2872
        %v2980 = vunpack.c.l.b16 %v2873
        %v2981 = vunpack.c.l.b16 %v2874
        %v2982 = vunpack.c.l.b16 %v2875
        %v2983 = vunpack.c.l.b16 %v2876
        %v2984 = vunpack.c.l.b16 %v2877
        %v2985 = vunpack.c.l.b16 %v2878
        %v2986 = vunpack.c.l.b16 %v2879
        %v2987 = vunpack.c.l.b16 %v2880
        %v2988 = vunpack.c.l.b16 %v2881
        %v2989 = vpack.c.b16 %v2942, %v2941
        %v2990 = vpack.c.b16 %v2944, %v2943
        %v2991 = vpack.c.b16 %v2946, %v2945
        %v2992 = vpack.c.b16 %v2948, %v2947
        %v2993 = vpack.c.b16 %v2950, %v2949
        %v2994 = vpack.c.b16 %v2952, %v2951
        %v2995 = vpack.c.b16 %v2954, %v2953
        %v2996 = vpack.c.b16 %v2956, %v2955
        %v2997 = vpack.c.b16 %v2958, %v2957
        %v2998 = vpack.c.b16 %v2960, %v2959
        %v2999 = vpack.c.b16 %v2962, %v2961
        %v3000 = vpack.c.b16 %v2964, %v2963
        %v3001 = vpack.c.b16 %v2966, %v2965
        %v3002 = vpack.c.b16 %v2968, %v2967
        %v3003 = vpack.c.b16 %v2970, %v2969
        %v3004 = vpack.c.b16 %v2972, %v2971
        %v3005 = vpack.c.b16 %v2974, %v2973
        %v3006 = vpack.c.b16 %v2976, %v2975
        %v3007 = vpack.c.b16 %v2978, %v2977
        %v3008 = vpack.c.b16 %v2980, %v2979
        %v3009 = vpack.c.b16 %v2982, %v2981
        %v3010 = vpack.c.b16 %v2984, %v2983
        %v3011 = vpack.c.b16 %v2986, %v2985
        %v3012 = vpack.c.b16 %v2988, %v2987
        %3037 = vmatprep.subr.bf16.mxu0 0
        %3038 = vmatpush1.bf16.msra.mxu0 %v2989
        %3039 = vmatprep.subr.bf16.mxu0 0
        %3040 = vmatpush1.bf16.msra.mxu0 %v2990
        %3041 = vmatprep.subr.bf16.mxu0 0
        %3042 = vmatpush1.bf16.msra.mxu0 %v2991
        %3043 = vmatprep.subr.bf16.mxu0 0
        %3044 = vmatpush1.bf16.msra.mxu0 %v2992
        %3045 = vmatprep.subr.bf16.mxu0 0
        %3046 = vmatpush1.bf16.msra.mxu0 %v2993
        %3047 = vmatprep.subr.bf16.mxu0 0
        %3048 = vmatpush1.bf16.msra.mxu0 %v2994
        %3049 = vmatprep.subr.bf16.mxu0 0
        %3050 = vmatpush1.bf16.msra.mxu0 %v2995
        %3051 = vmatprep.subr.bf16.mxu0 0
        %3052 = vmatpush1.bf16.msra.mxu0 %v2996
        %3053 = vmatprep.subr.bf16.mxu0 0
        %3054 = vmatpush1.bf16.msra.mxu0 %v2997
        %3055 = vmatprep.subr.bf16.mxu0 0
        %3056 = vmatpush1.bf16.msra.mxu0 %v2998
        %3057 = vmatprep.subr.bf16.mxu0 0
        %3058 = vmatpush1.bf16.msra.mxu0 %v2999
        %3059 = vmatprep.subr.bf16.mxu0 0
        %3060 = vmatpush1.bf16.msra.mxu0 %v3000
        %3061 = vmatprep.subr.bf16.mxu0 0
        %3062 = vmatpush1.bf16.msra.mxu0 %v3001
        %3063 = vmatprep.subr.bf16.mxu0 0
        %3064 = vmatpush1.bf16.msra.mxu0 %v3002
        %3065 = vmatprep.subr.bf16.mxu0 0
        %3066 = vmatpush1.bf16.msra.mxu0 %v3003
        %3067 = vmatprep.subr.bf16.mxu0 0
        %3068 = vmatpush1.bf16.msra.mxu0 %v3004
        %3069 = vmatprep.mubr.bf16.mxu0 %v2885
        %3070 = vmatmul.mubr.bf16.gmra.mrb[0].mxu0 %v2884
        %v3071 = vpop.f32.mrb[0].mxu0
        %v3072 = vadd.f32 %v2891, %v3071
        %v3073 = vpop.f32.mrb[0].mxu0
        %v3074 = vpop.f32.mrb[0].mxu0
        %v3075 = vadd.f32 %v2891, %v3074
        %v3076 = vpop.f32.mrb[0].mxu0
        %3077 = vdwg.mxu0
        %3078 = vmatprep.subr.bf16.mxu0 0
        %3079 = vmatpush1.bf16.msra.mxu0 %v3005
        %3080 = vmatprep.subr.bf16.mxu0 0
        %3081 = vmatpush1.bf16.msra.mxu0 %v3006
        %3082 = vmatprep.subr.bf16.mxu0 0
        %3083 = vmatpush1.bf16.msra.mxu0 %v3007
        %3084 = vmatprep.subr.bf16.mxu0 0
        %3085 = vmatpush1.bf16.msra.mxu0 %v3008
        %3086 = vmatprep.subr.bf16.mxu0 0
        %3087 = vmatpush1.bf16.msra.mxu0 %v3009
        %3088 = vmatprep.subr.bf16.mxu0 0
        %3089 = vmatpush1.bf16.msra.mxu0 %v3010
        %3090 = vmatprep.subr.bf16.mxu0 0
        %3091 = vmatpush1.bf16.msra.mxu0 %v3011
        %3092 = vmatprep.subr.bf16.mxu0 0
        %3093 = vmatpush1.bf16.msra.mxu0 %v3012
        %3094 = vmatprep.subr.bf16.mxu0 0
        %3095 = vmatpush1.bf16.msra.mxu0 0
        %3096 = vmatprep.subr.bf16.mxu0 0
        %3097 = vmatpush1.bf16.msra.mxu0 0
        %3098 = vmatprep.subr.bf16.mxu0 0
        %3099 = vmatpush1.bf16.msra.mxu0 0
        %3100 = vmatprep.subr.bf16.mxu0 0
        %3101 = vmatpush1.bf16.msra.mxu0 0
        %3102 = vmatprep.subr.bf16.mxu0 0
        %3103 = vmatpush1.bf16.msra.mxu0 0
        %3104 = vmatprep.subr.bf16.mxu0 0
        %3105 = vmatpush1.bf16.msra.mxu0 0
        %3106 = vmatprep.subr.bf16.mxu0 0
        %3107 = vmatpush1.bf16.msra.mxu0 0
        %3108 = vmatprep.subr.bf16.mxu0 0
        %3109 = vmatpush1.bf16.msra.mxu0 0
        %3110 = vmatprep.mubr.bf16.mxu0 0
        %3111 = vmatmul.mubr.bf16.gmra.mrb[0].mxu0 %v2886
        %v3112 = vpop.f32.mrb[0].mxu0
        %v3113 = vadd.f32 %v3072, %v3112
        %v3114 = vpop.f32.mrb[0].mxu0
        %v3115 = vpop.f32.mrb[0].mxu0
        %v3116 = vadd.f32 %v3075, %v3115
        %v3117 = vpop.f32.mrb[0].mxu0
        %3118 = vdwg.mxu0
        %v3119 = vmul.f32 %v3113, 0.5
        %v3120 = vmul.f32 %v3116, 0.5
        %v3121 = vmul.f32 %v3113, 0.70710677
        %v3122 = vmul.f32 %v3116, 0.70710677
        %vm3123 = vcmp.ge.f32.partialorder %v3121, 0.0
        %vm3124 = vcmp.ge.f32.partialorder %v3122, 0.0
        %v3125 = vsel %vm3123, 1.0, -1.0
        %v3126 = vsel %vm3124, 1.0, -1.0
        %v3127 = vand.u32 2147483647, %v3121
        %v3128 = vand.u32 2147483647, %v3122
        %v3129 = vmul.f32 %v3127, 0.3275911
        %v3130 = vmul.f32 %v3128, 0.3275911
        %v3131 = vadd.f32 %v3129, 1.0
        %v3132 = vadd.f32 %v3130, 1.0
        %v3133 = vrcp.pop %v3131
        %v3134 = vmul.f32 1.0, %v3133
        %v3135 = vrcp.pop %v3132
        %v3136 = vmul.f32 1.0, %v3135
        %v3137 = vmul.f32 %v3134, 1.0614054
        %v3138 = vmul.f32 %v3136, 1.0614054
        %v3139 = vadd.f32 %v3137, -1.4531521
        %v3140 = vadd.f32 %v3138, -1.4531521
        %v3141 = vmul.f32 %v3139, %v3134
        %v3142 = vmul.f32 %v3140, %v3136
        %v3143 = vadd.f32 %v3141, 1.4214138
        %v3144 = vadd.f32 %v3142, 1.4214138
        %v3145 = vmul.f32 %v3143, %v3134
        %v3146 = vmul.f32 %v3144, %v3136
        %v3147 = vadd.f32 %v3145, -0.28449672
        %v3148 = vadd.f32 %v3146, -0.28449672
        %v3149 = vmul.f32 %v3147, %v3134
        %v3150 = vmul.f32 %v3148, %v3136
        %v3151 = vadd.f32 %v3149, 0.2548296
        %v3152 = vadd.f32 %v3150, 0.2548296
        %v3153 = vmul.f32 %v3151, %v3134
        %v3154 = vmul.f32 %v3152, %v3136
        %v3155 = vsub.f32 0.0, %v3127
        %v3156 = vsub.f32 0.0, %v3128
        %v3157 = vmul.f32 %v3155, %v3127
        %v3158 = vmul.f32 %v3156, %v3128
        %v3159 = vmul.f32 %v3157, 1.442695
        %v3160 = vpow.pop %v3159
        %v3161 = vmul.f32 %v3158, 1.442695
        %v3162 = vpow.pop %v3161
        %v3163 = vmul.f32 %v3153, %v3160
        %v3164 = vmul.f32 %v3154, %v3162
        %v3165 = vsub.f32 1.0, %v3163
        %v3166 = vsub.f32 1.0, %v3164
        %v3167 = vmul.f32 %v3125, %v3165
        %v3168 = vmul.f32 %v3126, %v3166
        %v3169 = vadd.f32 %v3167, 1.0
        %v3170 = vadd.f32 %v3168, 1.0
        %v3171 = vmul.f32 %v3119, %v3169
        %v3172 = vmul.f32 %v3120, %v3170
        %s3173 = scalar_lea.vmem [#allocation8], 576
        %v3174 = vld [vmem:[%s3173] sm:$0xf]
        %v3175 = vld [vmem:[%s3173 + $0x4] sm:$0xf]
        %v3176 = vld [vmem:[%s3173 + $0x8] sm:$0xf]
        %v3177 = vld [vmem:[%s3173 + $0xc] sm:$0xf]
        %v3178 = vld [vmem:[%s3173 + $0x10] sm:$0xf]
        %v3179 = vld [vmem:[%s3173 + $0x14] sm:$0xf]
        %v3180 = vld [vmem:[%s3173 + $0x18] sm:$0xf]
        %v3181 = vld [vmem:[%s3173 + $0x1c] sm:$0xf]
        %v3182 = vld [vmem:[%s3173 + $0x20] sm:$0xf]
        %v3183 = vld [vmem:[%s3173 + $0x24] sm:$0xf]
        %v3184 = vld [vmem:[%s3173 + $0x28] sm:$0xf]
        %v3185 = vld [vmem:[%s3173 + $0x2c] sm:$0xf]
        %v3186 = vld [vmem:[%s3173 + $0x30] sm:$0xf]
        %v3187 = vld [vmem:[%s3173 + $0x34] sm:$0xf]
        %v3188 = vld [vmem:[%s3173 + $0x38] sm:$0xf]
        %v3189 = vld [vmem:[%s3173 + $0x3c] sm:$0xf]
        %v3190 = vld [vmem:[%s3173 + $0x40] sm:$0xf]
        %v3191 = vld [vmem:[%s3173 + $0x44] sm:$0xf]
        %v3192 = vld [vmem:[%s3173 + $0x48] sm:$0xf]
        %v3193 = vld [vmem:[%s3173 + $0x4c] sm:$0xf]
        %v3194 = vld [vmem:[%s3173 + $0x50] sm:$0xf]
        %v3195 = vld [vmem:[%s3173 + $0x54] sm:$0xf]
        %v3196 = vld [vmem:[%s3173 + $0x58] sm:$0xf]
        %v3197 = vld [vmem:[%s3173 + $0x5c] sm:$0xf]
        %v3198 = vld [vmem:[%s3173 + $0x60] sm:$0xf]
        %v3199 = vld [vmem:[%s3173 + $0x64] sm:$0xf]
        %v3200 = vld [vmem:[%s3173 + $0x68] sm:$0xf]
        %v3201 = vld [vmem:[%s3173 + $0x6c] sm:$0xf]
        %v3202 = vld [vmem:[%s3173 + $0x70] sm:$0xf]
        %v3203 = vld [vmem:[%s3173 + $0x74] sm:$0xf]
        %v3204 = vld [vmem:[%s3173 + $0x78] sm:$0xf]
        %v3205 = vld [vmem:[%s3173 + $0x7c] sm:$0xf]
        %v3206 = vld [vmem:[%s3173 + $0x80] sm:$0xf]
        %v3207 = vld [vmem:[%s3173 + $0x84] sm:$0xf]
        %v3208 = vld [vmem:[%s3173 + $0x88] sm:$0xf]
        %v3209 = vld [vmem:[%s3173 + $0x8c] sm:$0xf]
        %v3210 = vld [vmem:[%s3173 + $0x90] sm:$0xf]
        %v3211 = vld [vmem:[%s3173 + $0x94] sm:$0xf]
        %v3212 = vld [vmem:[%s3173 + $0x98] sm:$0xf]
        %v3213 = vld [vmem:[%s3173 + $0x9c] sm:$0xf]
        %v3214 = vld [vmem:[%s3173 + $0xa0] sm:$0xf]
        %v3215 = vld [vmem:[%s3173 + $0xa4] sm:$0xf]
        %v3216 = vld [vmem:[%s3173 + $0xa8] sm:$0xf]
        %v3217 = vld [vmem:[%s3173 + $0xac] sm:$0xf]
        %v3218 = vld [vmem:[%s3173 + $0xb0] sm:$0xf]
        %v3219 = vld [vmem:[%s3173 + $0xb4] sm:$0xf]
        %v3220 = vld [vmem:[%s3173 + $0xb8] sm:$0xf]
        %v3221 = vld [vmem:[%s3173 + $0xbc] sm:$0xf]
        %s3222 = scalar_lea.vmem %s6, 3
        %v3223 = vld [vmem:[%s3222] sm:$0x1]
        %v3224 = vpack.c.bf16 %v3171, 0.0
        %v3225 = vpack.c.bf16 %v3172, %v3171
        %v3226 = vpack.c.bf16 0.0, %v3172
        %v3228 = vlaneseq
        %v3229 = vshrl.u32 %v3228, 7
        %v3230 = vsub.s32 0, %v3229
        %v3231 = vrot.slane %v3223, %v3230
        %v3281 = vunpack.c.l.b16 %v3174
        %v3282 = vunpack.c.l.b16 %v3175
        %v3283 = vunpack.c.l.b16 %v3176
        %v3284 = vunpack.c.l.b16 %v3177
        %v3285 = vunpack.c.l.b16 %v3178
        %v3286 = vunpack.c.l.b16 %v3179
        %v3287 = vunpack.c.l.b16 %v3180
        %v3288 = vunpack.c.l.b16 %v3181
        %v3289 = vunpack.c.l.b16 %v3182
        %v3290 = vunpack.c.l.b16 %v3183
        %v3291 = vunpack.c.l.b16 %v3184
        %v3292 = vunpack.c.l.b16 %v3185
        %v3293 = vunpack.c.l.b16 %v3186
        %v3294 = vunpack.c.l.b16 %v3187
        %v3295 = vunpack.c.l.b16 %v3188
        %v3296 = vunpack.c.l.b16 %v3189
        %v3297 = vunpack.c.l.b16 %v3190
        %v3298 = vunpack.c.l.b16 %v3191
        %v3299 = vunpack.c.l.b16 %v3192
        %v3300 = vunpack.c.l.b16 %v3193
        %v3301 = vunpack.c.l.b16 %v3194
        %v3302 = vunpack.c.l.b16 %v3195
        %v3303 = vunpack.c.l.b16 %v3196
        %v3304 = vunpack.c.l.b16 %v3197
        %v3305 = vunpack.c.l.b16 %v3198
        %v3306 = vunpack.c.l.b16 %v3199
        %v3307 = vunpack.c.l.b16 %v3200
        %v3308 = vunpack.c.l.b16 %v3201
        %v3309 = vunpack.c.l.b16 %v3202
        %v3310 = vunpack.c.l.b16 %v3203
        %v3311 = vunpack.c.l.b16 %v3204
        %v3312 = vunpack.c.l.b16 %v3205
        %v3313 = vunpack.c.l.b16 %v3206
        %v3314 = vunpack.c.l.b16 %v3207
        %v3315 = vunpack.c.l.b16 %v3208
        %v3316 = vunpack.c.l.b16 %v3209
        %v3317 = vunpack.c.l.b16 %v3210
        %v3318 = vunpack.c.l.b16 %v3211
        %v3319 = vunpack.c.l.b16 %v3212
        %v3320 = vunpack.c.l.b16 %v3213
        %v3321 = vunpack.c.l.b16 %v3214
        %v3322 = vunpack.c.l.b16 %v3215
        %v3323 = vunpack.c.l.b16 %v3216
        %v3324 = vunpack.c.l.b16 %v3217
        %v3325 = vunpack.c.l.b16 %v3218
        %v3326 = vunpack.c.l.b16 %v3219
        %v3327 = vunpack.c.l.b16 %v3220
        %v3328 = vunpack.c.l.b16 %v3221
        %v3329 = vpack.c.b16 %v3282, %v3281
        %v3330 = vpack.c.b16 %v3284, %v3283
        %v3331 = vpack.c.b16 %v3286, %v3285
        %v3332 = vpack.c.b16 %v3288, %v3287
        %v3333 = vpack.c.b16 %v3290, %v3289
        %v3334 = vpack.c.b16 %v3292, %v3291
        %v3335 = vpack.c.b16 %v3294, %v3293
        %v3336 = vpack.c.b16 %v3296, %v3295
        %v3337 = vpack.c.b16 %v3298, %v3297
        %v3338 = vpack.c.b16 %v3300, %v3299
        %v3339 = vpack.c.b16 %v3302, %v3301
        %v3340 = vpack.c.b16 %v3304, %v3303
        %v3341 = vpack.c.b16 %v3306, %v3305
        %v3342 = vpack.c.b16 %v3308, %v3307
        %v3343 = vpack.c.b16 %v3310, %v3309
        %v3344 = vpack.c.b16 %v3312, %v3311
        %v3345 = vpack.c.b16 %v3314, %v3313
        %v3346 = vpack.c.b16 %v3316, %v3315
        %v3347 = vpack.c.b16 %v3318, %v3317
        %v3348 = vpack.c.b16 %v3320, %v3319
        %v3349 = vpack.c.b16 %v3322, %v3321
        %v3350 = vpack.c.b16 %v3324, %v3323
        %v3351 = vpack.c.b16 %v3326, %v3325
        %v3352 = vpack.c.b16 %v3328, %v3327
        %3377 = vmatprep.subr.bf16.mxu0 0
        %3378 = vmatpush1.bf16.msra.mxu0 %v3329
        %3379 = vmatprep.subr.bf16.mxu0 0
        %3380 = vmatpush1.bf16.msra.mxu0 %v3330
        %3381 = vmatprep.subr.bf16.mxu0 0
        %3382 = vmatpush1.bf16.msra.mxu0 %v3331
        %3383 = vmatprep.subr.bf16.mxu0 0
        %3384 = vmatpush1.bf16.msra.mxu0 %v3332
        %3385 = vmatprep.subr.bf16.mxu0 0
        %3386 = vmatpush1.bf16.msra.mxu0 %v3333
        %3387 = vmatprep.subr.bf16.mxu0 0
        %3388 = vmatpush1.bf16.msra.mxu0 %v3334
        %3389 = vmatprep.subr.bf16.mxu0 0
        %3390 = vmatpush1.bf16.msra.mxu0 %v3335
        %3391 = vmatprep.subr.bf16.mxu0 0
        %3392 = vmatpush1.bf16.msra.mxu0 %v3336
        %3393 = vmatprep.subr.bf16.mxu0 0
        %3394 = vmatpush1.bf16.msra.mxu0 %v3337
        %3395 = vmatprep.subr.bf16.mxu0 0
        %3396 = vmatpush1.bf16.msra.mxu0 %v3338
        %3397 = vmatprep.subr.bf16.mxu0 0
        %3398 = vmatpush1.bf16.msra.mxu0 %v3339
        %3399 = vmatprep.subr.bf16.mxu0 0
        %3400 = vmatpush1.bf16.msra.mxu0 %v3340
        %3401 = vmatprep.subr.bf16.mxu0 0
        %3402 = vmatpush1.bf16.msra.mxu0 %v3341
        %3403 = vmatprep.subr.bf16.mxu0 0
        %3404 = vmatpush1.bf16.msra.mxu0 %v3342
        %3405 = vmatprep.subr.bf16.mxu0 0
        %3406 = vmatpush1.bf16.msra.mxu0 %v3343
        %3407 = vmatprep.subr.bf16.mxu0 0
        %3408 = vmatpush1.bf16.msra.mxu0 %v3344
        %3409 = vmatprep.mubr.bf16.mxu0 %v3225
        %3410 = vmatmul.mubr.bf16.gmra.mrb[0].mxu0 %v3224
        %v3411 = vpop.f32.mrb[0].mxu0
        %v3412 = vadd.f32 %v3231, %v3411
        %v3413 = vpop.f32.mrb[0].mxu0
        %v3414 = vpop.f32.mrb[0].mxu0
        %v3415 = vadd.f32 %v3231, %v3414
        %v3416 = vpop.f32.mrb[0].mxu0
        %3417 = vdwg.mxu0
        %3418 = vmatprep.subr.bf16.mxu0 0
        %3419 = vmatpush1.bf16.msra.mxu0 %v3345
        %3420 = vmatprep.subr.bf16.mxu0 0
        %3421 = vmatpush1.bf16.msra.mxu0 %v3346
        %3422 = vmatprep.subr.bf16.mxu0 0
        %3423 = vmatpush1.bf16.msra.mxu0 %v3347
        %3424 = vmatprep.subr.bf16.mxu0 0
        %3425 = vmatpush1.bf16.msra.mxu0 %v3348
        %3426 = vmatprep.subr.bf16.mxu0 0
        %3427 = vmatpush1.bf16.msra.mxu0 %v3349
        %3428 = vmatprep.subr.bf16.mxu0 0
        %3429 = vmatpush1.bf16.msra.mxu0 %v3350
        %3430 = vmatprep.subr.bf16.mxu0 0
        %3431 = vmatpush1.bf16.msra.mxu0 %v3351
        %3432 = vmatprep.subr.bf16.mxu0 0
        %3433 = vmatpush1.bf16.msra.mxu0 %v3352
        %3434 = vmatprep.subr.bf16.mxu0 0
        %3435 = vmatpush1.bf16.msra.mxu0 0
        %3436 = vmatprep.subr.bf16.mxu0 0
        %3437 = vmatpush1.bf16.msra.mxu0 0
        %3438 = vmatprep.subr.bf16.mxu0 0
        %3439 = vmatpush1.bf16.msra.mxu0 0
        %3440 = vmatprep.subr.bf16.mxu0 0
        %3441 = vmatpush1.bf16.msra.mxu0 0
        %3442 = vmatprep.subr.bf16.mxu0 0
        %3443 = vmatpush1.bf16.msra.mxu0 0
        %3444 = vmatprep.subr.bf16.mxu0 0
        %3445 = vmatpush1.bf16.msra.mxu0 0
        %3446 = vmatprep.subr.bf16.mxu0 0
        %3447 = vmatpush1.bf16.msra.mxu0 0
        %3448 = vmatprep.subr.bf16.mxu0 0
        %3449 = vmatpush1.bf16.msra.mxu0 0
        %3450 = vmatprep.mubr.bf16.mxu0 0
        %3451 = vmatmul.mubr.bf16.gmra.mrb[0].mxu0 %v3226
        %v3452 = vpop.f32.mrb[0].mxu0
        %v3453 = vadd.f32 %v3412, %v3452
        %v3454 = vpop.f32.mrb[0].mxu0
        %v3455 = vpop.f32.mrb[0].mxu0
        %v3456 = vadd.f32 %v3415, %v3455
        %v3457 = vpop.f32.mrb[0].mxu0
        %3458 = vdwg.mxu0
        %v3459 = vadd.f32 %v3453, %v2773
        %v3460 = vadd.f32 %v3456, %v2776
        %3461 = vst [vmem:[%s408] sm:$0xff] %v3459
        %3462 = vst [vmem:[%s408 + $0x8] sm:$0xff] %v3460
        %s3463 = sand.u32 %s230, 1
        %s3464 = scalar_lea.sflag [#allocation4], %s3463
        %s3465 = sand.u32 %s230, 1
        %s3466 = smul.addr %s3465, 16
        %s3467 = scalar_lea.vmem [#allocation11], %s3466
        // Predicated region
        $region77: #{tpu_custom_call.1} parent=55 // pred_check
          %p3468 = pneg %p240
        $region78: #{tpu_custom_call.1} parent=55 // pred_check_branch
          %3470 = sbr.rel (%p3468) target = $region80
        $region79: #{tpu_custom_call.1} parent=55 // pred_region
          %s3472 = ssub.s32 256, 256
          %3473 = vsyncadd %s3464, %s3472
          %s3474 = smul.addr %s28, 2
          %s3475 = smul.addr %s3474, 128
          %s3476 = scalar_lea.hbm %s9, %s3475
          %s3477 = sshll.u32 %s3467, 4
          %s3478 = int_to_ptr.vmem [resolvable:$true] %s3477
          %3483 = dma.vmem_to_hbm [thread:$0]  %s3478, 256, %s3476, %s3464, 128, 128, 8
        $region80: #{tpu_custom_call.1} parent=55 // pred_fallthru
          _
      $region56: #{tpu_custom_call.1} parent=5 // pred_fallthru
        _
      %p3484 = scmp.le.s32.totalorder 2, %s23
      // Predicated region
      $region81: #{tpu_custom_call.1} parent=5 // pred_check
        %p3485 = pneg %p3484
      $region82: #{tpu_custom_call.1} parent=5 // pred_check_branch
        %3487 = sbr.rel (%p3485) target = $region84
      $region83: #{tpu_custom_call.1} parent=5 // pred_region
        %s3488 = ssub.s32 %s23, 2
        // Predicated region
        $region85: #{tpu_custom_call.1} parent=83 // pred_check
          %p3489 = pneg %p246
        $region86: #{tpu_custom_call.1} parent=83 // pred_check_branch
          %3491 = sbr.rel (%p3489) target = $region88
        $region87: #{tpu_custom_call.1} parent=83 // pred_region
          %s3492 = sand.u32 %s231, 1
          %s3493 = scalar_lea.sflag [#allocation4], %s3492
          %s3494 = sand.u32 %s231, 1
          %s3495 = smul.addr %s3494, 16
          %s3496 = scalar_lea.vmem [#allocation11], %s3495
          %3497 = dma.done %s3493, 256
        $region88: #{tpu_custom_call.1} parent=83 // pred_fallthru
          _
      $region84: #{tpu_custom_call.1} parent=5 // pred_fallthru
        _
    $region6: #{tpu_custom_call.1} parent=1 // loop_footer
      %s27 = sadd.s32 1, %s23
    $region7: #{tpu_custom_call.1} parent=1 // loop_footer_branch
      %22 = sbr.rel target = $region3
    $region8: #{tpu_custom_call.1} parent=1 // loop_exit
      _
    %3498 = vsyncpa [#allocation3], 1
    %s3499 = scalar_lea.sflag [#allocation3], 1
    %3500 = vsyncpa %s3499, 1
    %3501 = vsyncpa [#allocation6], 1
    %3502 = vsyncpa [#allocation9], 1
    %3503 = vsyncpa [#allocation4], 1
    %s3504 = scalar_lea.sflag [#allocation4], 1
    %3505 = vsyncpa %s3504, 1

</llo_original>
